<compile_context>
chip_gen: v5e
topology: v5e:2x2
jax: 0.10.0
libtpu: 0.0.40
codegen_flags: <defaults>
</compile_context>

<pallas_src>
import functools
import math

import jax
import jax.numpy as jnp
from jax.experimental import pallas as pl
from jax.experimental.pallas import tpu as pltpu

VMEM = pltpu.MemorySpace.VMEM


# ---------------------------------------------------------------------------
# Exact (erf-based) GELU from Pallas-lowerable elementwise ops.
# Abramowitz & Stegun 7.1.26 erf approximation, max abs error ~1.5e-7 (fp32).
# ---------------------------------------------------------------------------
def _erf(x):
    a1, a2, a3, a4, a5 = 0.254829592, -0.284496736, 1.421413741, -1.453152027, 1.061405429
    p = 0.3275911
    ax = jnp.abs(x)
    t = 1.0 / (1.0 + p * ax)
    poly = ((((a5 * t + a4) * t + a3) * t + a2) * t + a1) * t
    y = 1.0 - poly * jnp.exp(-ax * ax)
    return jnp.where(x >= 0.0, y, -y)


def _gelu_exact(x):
    return 0.5 * x * (1.0 + _erf(x * (1.0 / math.sqrt(2.0))))


# ---------------------------------------------------------------------------
# LightweightGATConv block (pure function of values + refs, used inside the
# fused kernel).
#   w_sd_ref : (2H, Cin, C)  rows [0:H] = per-head src weights, [H:2H] = dst
#   att_sd_ref: (2H, C)      rows [0:H] = att_src heads,        [H:2H] = att_dst
# Edge softmax over ALL edges per head (== torch.softmax(alpha, dim=0)),
# factorized: exp(a_dst + a_src) = exp(a_dst)*exp(a_src); adjacency (0/1) acts
# multiplicatively as the mask so no (N,N) exp / select / -inf is ever formed.
# ---------------------------------------------------------------------------
def _gat_block(x, adj, w_sd_ref, att_sd_ref, apply_relu):
    two_h = w_sd_ref.shape[0]
    H = two_h // 2
    att = att_sd_ref[...]                                                  # (2H, C)
    acc = None
    for h in range(H):                                                     # static unroll
        xs = jnp.dot(x, w_sd_ref[h], preferred_element_type=jnp.float32)       # (N, C)
        xd = jnp.dot(x, w_sd_ref[H + h], preferred_element_type=jnp.float32)   # (N, C)
        # attention logits on the VPU (broadcast-multiply-reduce, no MXU)
        a_s = jnp.sum(xs * att[h:h + 1, :], axis=-1, keepdims=True)        # (N, 1) per src
        a_d = jnp.sum(xd * att[H + h:H + h + 1, :], axis=-1, keepdims=True)  # (N, 1) per dst
        es = jnp.exp(a_s - jnp.max(a_s))                                   # (N, 1)
        ed = jnp.exp(a_d - jnp.max(a_d))                                   # (N, 1)
        # numerator[dst,:] = ed[dst] * sum_src adj[dst,src]*es[src]*xs[src,:]
        msg = jnp.dot(adj, es * xs, preferred_element_type=jnp.float32)    # (N, C)
        zrow = jnp.dot(adj, es, preferred_element_type=jnp.float32)        # (N, 1)
        z = jnp.sum(ed * zrow)                                             # global edge-softmax denom
        head_out = ed * msg / z                                            # (N, C)
        acc = head_out if acc is None else acc + head_out
    out = acc * (1.0 / H)                                                  # mean over heads
    if apply_relu:
        out = jnp.maximum(out, 0.0)
    return out


# ---------------------------------------------------------------------------
# EfficientTransformerBlock (B=1 -> operate on (T, C)).
#   w_qkv_ref : (3H, C, hd)  rows [0:H]=q, [H:2H]=k, [2H:3H]=v per head
#   b_qkv_ref : (3H, hd)
#   proj_w_ref: (H, hd, C)   head concat folded into projection
#   vecs_ref  : (6, C)       rows = [proj_b, ff2_b, n1_w, n1_b, n2_w, n2_b]
# Pre-norm MHA + pre-norm FFN (exact GELU), residuals; dropout = identity.
# ---------------------------------------------------------------------------
def _transformer_block(x, w_qkv_ref, b_qkv_ref, proj_w_ref, ff1_w_ref, ff1_b_ref,
                       ff2_w_ref, vecs_ref, nhead):
    T, C = x.shape
    hd = C // nhead
    scale = 1.0 / math.sqrt(hd)

    vecs = vecs_ref[...]                                                   # (6, C)
    proj_b, ff2_b = vecs[0:1, :], vecs[1:2, :]
    n1_w, n1_b = vecs[2:3, :], vecs[3:4, :]
    n2_w, n2_b = vecs[4:5, :], vecs[5:6, :]
    b_qkv = b_qkv_ref[...]                                                 # (3H, hd)

    def layer_norm(v, w, b):                                               # eps = 1e-5 (torch default)
        mu = jnp.mean(v, axis=-1, keepdims=True)
        var = jnp.mean((v - mu) ** 2, axis=-1, keepdims=True)
        return (v - mu) * jax.lax.rsqrt(var + 1e-5) * w + b

    residual = x
    xn = layer_norm(x, n1_w, n1_b)
    proj_acc = None
    for h in range(nhead):                                                 # static unroll
        q = jnp.dot(xn, w_qkv_ref[h], preferred_element_type=jnp.float32) + b_qkv[h:h + 1, :]
        k = jnp.dot(xn, w_qkv_ref[nhead + h], preferred_element_type=jnp.float32) \
            + b_qkv[nhead + h:nhead + h + 1, :]
        v = jnp.dot(xn, w_qkv_ref[2 * nhead + h], preferred_element_type=jnp.float32) \
            + b_qkv[2 * nhead + h:2 * nhead + h + 1, :]
        scores = jax.lax.dot_general(q, k, (((1,), (1,)), ((), ())),
                                     preferred_element_type=jnp.float32) * scale   # (T, T)
        smax = jnp.max(scores, axis=-1, keepdims=True)
        p = jnp.exp(scores - smax)
        attn = p / jnp.sum(p, axis=-1, keepdims=True)
        head_out = jnp.dot(attn, v, preferred_element_type=jnp.float32)    # (T, hd)
        # fold the head concat into the output projection (leading-dim slice)
        contrib = jnp.dot(head_out, proj_w_ref[h], preferred_element_type=jnp.float32)  # (T, C)
        proj_acc = contrib if proj_acc is None else proj_acc + contrib
    x1 = residual + proj_acc + proj_b

    residual = x1
    xn = layer_norm(x1, n2_w, n2_b)
    h1 = jnp.dot(xn, ff1_w_ref[...], preferred_element_type=jnp.float32) + ff1_b_ref[...]
    h1 = _gelu_exact(h1)
    h2 = jnp.dot(h1, ff2_w_ref[...], preferred_element_type=jnp.float32) + ff2_b
    return residual + h2


# ---------------------------------------------------------------------------
# Fused forward kernel: the whole network in one pallas_call.
# Ref order:
#   x, adj,
#   [w_sd, att_sd]            * n_enc,
#   [w_qkv, b_qkv, proj_w, ff1_w, ff1_b, ff2_w, vecs] * n_trans,
#   cls_w, cls_b,
#   [w_sd, att_sd]            * n_dec,
#   out_ref, logits_ref
# ---------------------------------------------------------------------------
def fused_forward_kernel(*refs, n_enc, n_trans, n_dec, nhead):
    it = iter(refs)
    x_ref, adj_ref = next(it), next(it)
    enc = [(next(it), next(it)) for _ in range(n_enc)]
    trans = [[next(it) for _ in range(7)] for _ in range(n_trans)]
    cls_w_ref, cls_b_ref = next(it), next(it)
    dec = [(next(it), next(it)) for _ in range(n_dec)]
    out_ref, logits_ref = next(it), next(it)

    x = x_ref[...]                                                         # (N, Cin)
    adj = adj_ref[...]                                                     # (N, N), 0/1 fp32

    # Encoder: GAT -> ReLU
    for w_sd_ref, att_sd_ref in enc:
        x = _gat_block(x, adj, w_sd_ref, att_sd_ref, apply_relu=True)

    # Transformer stack (batch of 1)
    h = x
    for t_refs in trans:
        h = _transformer_block(h, *t_refs, nhead=nhead)

    # Classification head on the node-mean embedding
    # (AdaptiveAvgPool1d(1) on a length-1 axis is the identity.)
    h_cls = jnp.mean(h, axis=0, keepdims=True)                             # (1, C)
    logits_ref[...] = jnp.dot(h_cls, cls_w_ref[...],
                              preferred_element_type=jnp.float32) + cls_b_ref[...]

    # Decoder: GAT -> ReLU except after the last layer
    for i, (w_sd_ref, att_sd_ref) in enumerate(dec):
        h = _gat_block(h, adj, w_sd_ref, att_sd_ref, apply_relu=(i != n_dec - 1))

    out_ref[...] = h                                                       # (N, out_ch)


# ---------------------------------------------------------------------------
# Full forward wrapper (eval-mode: dropouts are identity; no checkpointing).
# TODO(synk): for batch > 1, stack windows along a grid axis marked "parallel"
# so v7x's two TensorCores split the work; single-window path needs no grid.
# ---------------------------------------------------------------------------
def tgat_unet_forward(window, params, *, heads, time_k):
    n = window.shape[0]
    x = window.astype(jnp.float32)
    idx = jnp.arange(n)
    adj = (jnp.abs(idx[:, None] - idx[None, :]) <= time_k).astype(jnp.float32)  # adj[dst, src]

    n_enc, n_trans, n_dec = len(params["enc"]), len(params["trans"]), len(params["dec"])
    out_ch = params["dec"][-1]["w_sd"].shape[-1]
    num_classes = params["cls_w"].shape[-1]

    inputs = [x, adj]
    for p in params["enc"]:
        inputs += [p["w_sd"], p["att_sd"]]
    for p in params["trans"]:
        inputs += [p["w_qkv"], p["b_qkv"], p["proj_w"], p["ff1_w"], p["ff1_b"],
                   p["ff2_w"], p["vecs"]]
    inputs += [params["cls_w"], params["cls_b"]]
    for p in params["dec"]:
        inputs += [p["w_sd"], p["att_sd"]]

    kern = functools.partial(fused_forward_kernel, n_enc=n_enc, n_trans=n_trans,
                             n_dec=n_dec, nhead=heads)

    h_nodes, logits_row = pl.pallas_call(
        kern,
        out_shape=(jax.ShapeDtypeStruct((n, out_ch), jnp.float32),
                   jax.ShapeDtypeStruct((1, num_classes), jnp.float32)),
        in_specs=[pl.BlockSpec(memory_space=VMEM) for _ in inputs],
        out_specs=(pl.BlockSpec(memory_space=VMEM),
                   pl.BlockSpec(memory_space=VMEM)),
    )(*inputs)

    out = h_nodes.T                                                        # (out_ch, N) == h.t()
    logits = logits_row[0]                                                 # (num_classes,)
    return out, logits


# ---------------------------------------------------------------------------
# Deterministic parameter initialization (synthetic, no checkpoint load).
# Weights are stored in head-leading, (in, out)-transposed layouts so kernels
# compute x @ W with leading-dim head slicing only.
# ---------------------------------------------------------------------------
def init_linear(key, in_dim, out_dim):
    kw, kb = jax.random.split(key)
    bound = 1.0 / math.sqrt(in_dim)
    w = jax.random.uniform(kw, (in_dim, out_dim), jnp.float32, -bound, bound)
    b = jax.random.uniform(kb, (1, out_dim), jnp.float32, -bound, bound)
    return w, b


def init_gat(key, in_ch, out_ch, heads):
    k1, k2, k3, k4 = jax.random.split(key, 4)
    gain = math.sqrt(2.0)  # calculate_gain('relu')

    def xavier(k, shape, fan_in, fan_out):
        a = gain * math.sqrt(6.0 / (fan_in + fan_out))
        return jax.random.uniform(k, shape, jnp.float32, -a, a)

    w_src = xavier(k1, (heads, in_ch, out_ch), in_ch, out_ch * heads)
    w_dst = xavier(k2, (heads, in_ch, out_ch), in_ch, out_ch * heads)
    att_src = xavier(k3, (heads, out_ch), heads * out_ch, out_ch)
    att_dst = xavier(k4, (heads, out_ch), heads * out_ch, out_ch)
    return dict(
        w_sd=jnp.concatenate([w_src, w_dst], axis=0),       # (2H, Cin, C)
        att_sd=jnp.concatenate([att_src, att_dst], axis=0),  # (2H, C)
    )


def init_transformer(key, d_model, nhead):
    hd = d_model // nhead
    dim_ff = d_model * 2
    ks = jax.random.split(key, 8)
    b1, b2 = 1.0 / math.sqrt(d_model), 1.0 / math.sqrt(dim_ff)

    def u(k, shape, b):
        return jax.random.uniform(k, shape, jnp.float32, -b, b)

    proj_b = u(ks[3], (1, d_model), b1)
    ff2_b = u(ks[7], (1, d_model), b2)
    ones, zeros = jnp.ones((1, d_model), jnp.float32), jnp.zeros((1, d_model), jnp.float32)
    return dict(
        w_qkv=u(ks[0], (3 * nhead, d_model, hd), b1),        # q heads | k heads | v heads
        b_qkv=u(ks[1], (3 * nhead, hd), b1),
        proj_w=u(ks[2], (nhead, hd, d_model), b1),
        ff1_w=u(ks[4], (d_model, dim_ff), b1),
        ff1_b=u(ks[5], (1, dim_ff), b1),
        ff2_w=u(ks[6], (dim_ff, d_model), b2),
        vecs=jnp.concatenate([proj_b, ff2_b, ones, zeros, ones, zeros], axis=0),  # (6, C)
    )


def init_params(key, in_channels, hidden, out_channels, encoder_layers=2,
                decoder_layers=2, heads=2, trans_layers=1, num_classes=2):
    total = encoder_layers + trans_layers + decoder_layers + 1
    keys = jax.random.split(key, total)
    ki = 0
    enc, cur = [], in_channels
    for _ in range(encoder_layers):
        enc.append(init_gat(keys[ki], cur, hidden, heads)); ki += 1
        cur = hidden
    trans = []
    for _ in range(trans_layers):
        trans.append(init_transformer(keys[ki], hidden, heads)); ki += 1
    dec = []
    for _ in range(decoder_layers - 1):
        dec.append(init_gat(keys[ki], hidden, hidden, heads)); ki += 1
    dec.append(init_gat(keys[ki], hidden, out_channels, 1)); ki += 1
    cls_w, cls_b = init_linear(keys[ki], hidden, num_classes); ki += 1
    return dict(enc=enc, trans=trans, dec=dec, cls_w=cls_w, cls_b=cls_b)


if __name__ == "__main__":
    # Small shapes consistent with the module.
    N_NODES = 16          # graph nodes (time steps of the window)
    IN_CH = 4
    HIDDEN = 32
    OUT_CH = 8
    HEADS = 2
    TIME_K = 1
    NUM_CLASSES = 2

    key = jax.random.PRNGKey(0)
    k_win, k_model = jax.random.split(key)
    window = jax.random.normal(k_win, (N_NODES, IN_CH), jnp.float32)

    params = init_params(k_model, IN_CH, HIDDEN, OUT_CH,
                         encoder_layers=2, decoder_layers=2, heads=HEADS,
                         trans_layers=1, num_classes=NUM_CLASSES)

    fwd = jax.jit(functools.partial(tgat_unet_forward, heads=HEADS, time_k=TIME_K))
    out, logits = fwd(window, params)
    jax.block_until_ready((out, logits))

    assert out.shape == (OUT_CH, N_NODES), out.shape
    assert logits.shape == (NUM_CLASSES,), logits.shape
    assert bool(jnp.all(jnp.isfinite(out))) and bool(jnp.all(jnp.isfinite(logits)))
    print("KERNEL_OK")
</pallas_src>

<mosaic_0001>
module attributes {stable_mosaic.version = 11 : i64} {
  func.func @fused_forward_kernel(%arg0: memref<16x4xf32, #tpu.memory_space<vmem>>, %arg1: memref<16x16xf32, #tpu.memory_space<vmem>>, %arg2: memref<4x4x32xf32, #tpu.memory_space<vmem>>, %arg3: memref<4x32xf32, #tpu.memory_space<vmem>>, %arg4: memref<4x32x32xf32, #tpu.memory_space<vmem>>, %arg5: memref<4x32xf32, #tpu.memory_space<vmem>>, %arg6: memref<6x32x16xf32, #tpu.memory_space<vmem>>, %arg7: memref<6x16xf32, #tpu.memory_space<vmem>>, %arg8: memref<2x16x32xf32, #tpu.memory_space<vmem>>, %arg9: memref<32x64xf32, #tpu.memory_space<vmem>>, %arg10: memref<1x64xf32, #tpu.memory_space<vmem>>, %arg11: memref<64x32xf32, #tpu.memory_space<vmem>>, %arg12: memref<6x32xf32, #tpu.memory_space<vmem>>, %arg13: memref<32x2xf32, #tpu.memory_space<vmem>>, %arg14: memref<1x2xf32, #tpu.memory_space<vmem>>, %arg15: memref<4x32x32xf32, #tpu.memory_space<vmem>>, %arg16: memref<4x32xf32, #tpu.memory_space<vmem>>, %arg17: memref<2x32x8xf32, #tpu.memory_space<vmem>>, %arg18: memref<2x8xf32, #tpu.memory_space<vmem>>, %arg19: memref<16x8xf32, #tpu.memory_space<vmem>>, %arg20: memref<1x2xf32, #tpu.memory_space<vmem>>) attributes {dimension_semantics = [], scalar_prefetch = 0 : i64, scratch_operands = 0 : i64, tpu.core_type = #tpu.core_type<tc>} {
    %c0 = arith.constant 0 : index
    %c0_0 = arith.constant 0 : index
    %0 = vector.load %arg0[%c0, %c0_0] : memref<16x4xf32, #tpu.memory_space<vmem>>, vector<16x4xf32>
    %c0_1 = arith.constant 0 : index
    %c0_2 = arith.constant 0 : index
    %1 = vector.load %arg1[%c0_1, %c0_2] : memref<16x16xf32, #tpu.memory_space<vmem>>, vector<16x16xf32>
    %c0_3 = arith.constant 0 : index
    %c0_4 = arith.constant 0 : index
    %2 = vector.load %arg3[%c0_3, %c0_4] : memref<4x32xf32, #tpu.memory_space<vmem>>, vector<4x32xf32>
    %c0_5 = arith.constant 0 : index
    %c0_6 = arith.constant 0 : index
    %c0_7 = arith.constant 0 : index
    %3 = vector.load %arg2[%c0_5, %c0_6, %c0_7] : memref<4x4x32xf32, #tpu.memory_space<vmem>>, vector<1x4x32xf32>
    %4 = vector.shape_cast %3 : vector<1x4x32xf32> to vector<4x32xf32>
    %cst = arith.constant dense<0.000000e+00> : vector<16x32xf32>
    %5 = tpu.matmul %0, %4, %cst {dimension_numbers = #tpu.dot_dimension_numbers<[1], [0], [0], [1], [0, 0, 1, 1], [], []>} : vector<16x4xf32>, vector<4x32xf32>, vector<16x32xf32> -> vector<16x32xf32>
    %c2 = arith.constant 2 : index
    %c0_8 = arith.constant 0 : index
    %c0_9 = arith.constant 0 : index
    %6 = vector.load %arg2[%c2, %c0_8, %c0_9] : memref<4x4x32xf32, #tpu.memory_space<vmem>>, vector<1x4x32xf32>
    %7 = vector.shape_cast %6 : vector<1x4x32xf32> to vector<4x32xf32>
    %cst_10 = arith.constant dense<0.000000e+00> : vector<16x32xf32>
    %8 = tpu.matmul %0, %7, %cst_10 {dimension_numbers = #tpu.dot_dimension_numbers<[1], [0], [0], [1], [0, 0, 1, 1], [], []>} : vector<16x4xf32>, vector<4x32xf32>, vector<16x32xf32> -> vector<16x32xf32>
    %9 = vector.extract_strided_slice %2 {offsets = [0, 0], sizes = [1, 32], strides = [1, 1]} : vector<4x32xf32> to vector<1x32xf32>
    %10 = vector.broadcast %9 : vector<1x32xf32> to vector<16x32xf32>
    %11 = arith.mulf %5, %10 : vector<16x32xf32>
    %cst_11 = arith.constant dense<0.000000e+00> : vector<16xf32>
    %12 = vector.multi_reduction <add>, %11, %cst_11 [1] : vector<16x32xf32> to vector<16xf32>
    %13 = vector.shape_cast %12 : vector<16xf32> to vector<16x1xf32>
    %14 = vector.extract_strided_slice %2 {offsets = [2, 0], sizes = [1, 32], strides = [1, 1]} : vector<4x32xf32> to vector<1x32xf32>
    %15 = vector.broadcast %14 : vector<1x32xf32> to vector<16x32xf32>
    %16 = arith.mulf %8, %15 : vector<16x32xf32>
    %cst_12 = arith.constant dense<0.000000e+00> : vector<16xf32>
    %17 = vector.multi_reduction <add>, %16, %cst_12 [1] : vector<16x32xf32> to vector<16xf32>
    %18 = vector.shape_cast %17 : vector<16xf32> to vector<16x1xf32>
    %19 = vector.shape_cast %13 : vector<16x1xf32> to vector<1x16x1xf32>
    %cst_13 = arith.constant dense<0xFF800000> : vector<1xf32>
    %20 = vector.multi_reduction <maximumf>, %19, %cst_13 [1, 2] : vector<1x16x1xf32> to vector<1xf32>
    %21 = vector.shape_cast %20 : vector<1xf32> to vector<1x1x1xf32>
    %22 = vector.extract %21[0, 0, 0] : f32 from vector<1x1x1xf32>
    %23 = vector.broadcast %22 : f32 to vector<16x1xf32>
    %24 = arith.subf %13, %23 : vector<16x1xf32>
    %25 = math.exp %24 : vector<16x1xf32>
    %26 = vector.shape_cast %18 : vector<16x1xf32> to vector<1x16x1xf32>
    %cst_14 = arith.constant dense<0xFF800000> : vector<1xf32>
    %27 = vector.multi_reduction <maximumf>, %26, %cst_14 [1, 2] : vector<1x16x1xf32> to vector<1xf32>
    %28 = vector.shape_cast %27 : vector<1xf32> to vector<1x1x1xf32>
    %29 = vector.extract %28[0, 0, 0] : f32 from vector<1x1x1xf32>
    %30 = vector.broadcast %29 : f32 to vector<16x1xf32>
    %31 = arith.subf %18, %30 : vector<16x1xf32>
    %32 = math.exp %31 : vector<16x1xf32>
    %33 = vector.broadcast %25 : vector<16x1xf32> to vector<16x32xf32>
    %34 = arith.mulf %33, %5 : vector<16x32xf32>
    %cst_15 = arith.constant dense<0.000000e+00> : vector<16x32xf32>
    %35 = tpu.matmul %1, %34, %cst_15 {dimension_numbers = #tpu.dot_dimension_numbers<[1], [0], [0], [1], [0, 0, 1, 1], [], []>} : vector<16x16xf32>, vector<16x32xf32>, vector<16x32xf32> -> vector<16x32xf32>
    %cst_16 = arith.constant dense<0.000000e+00> : vector<16x1xf32>
    %36 = tpu.matmul %1, %25, %cst_16 {dimension_numbers = #tpu.dot_dimension_numbers<[1], [0], [0], [1], [0, 0, 1, 1], [], []>} : vector<16x16xf32>, vector<16x1xf32>, vector<16x1xf32> -> vector<16x1xf32>
    %37 = arith.mulf %32, %36 : vector<16x1xf32>
    %38 = vector.shape_cast %37 : vector<16x1xf32> to vector<1x16x1xf32>
    %cst_17 = arith.constant dense<0.000000e+00> : vector<1xf32>
    %39 = vector.multi_reduction <add>, %38, %cst_17 [1, 2] : vector<1x16x1xf32> to vector<1xf32>
    %40 = vector.shape_cast %39 : vector<1xf32> to vector<1x1x1xf32>
    %41 = vector.extract %40[0, 0, 0] : f32 from vector<1x1x1xf32>
    %42 = vector.broadcast %32 : vector<16x1xf32> to vector<16x32xf32>
    %43 = arith.mulf %42, %35 : vector<16x32xf32>
    %44 = vector.broadcast %41 : f32 to vector<16x32xf32>
    %45 = arith.divf %43, %44 : vector<16x32xf32>
    %c1 = arith.constant 1 : index
    %c0_18 = arith.constant 0 : index
    %c0_19 = arith.constant 0 : index
    %46 = vector.load %arg2[%c1, %c0_18, %c0_19] : memref<4x4x32xf32, #tpu.memory_space<vmem>>, vector<1x4x32xf32>
    %47 = vector.shape_cast %46 : vector<1x4x32xf32> to vector<4x32xf32>
    %cst_20 = arith.constant dense<0.000000e+00> : vector<16x32xf32>
    %48 = tpu.matmul %0, %47, %cst_20 {dimension_numbers = #tpu.dot_dimension_numbers<[1], [0], [0], [1], [0, 0, 1, 1], [], []>} : vector<16x4xf32>, vector<4x32xf32>, vector<16x32xf32> -> vector<16x32xf32>
    %c3 = arith.constant 3 : index
    %c0_21 = arith.constant 0 : index
    %c0_22 = arith.constant 0 : index
    %49 = vector.load %arg2[%c3, %c0_21, %c0_22] : memref<4x4x32xf32, #tpu.memory_space<vmem>>, vector<1x4x32xf32>
    %50 = vector.shape_cast %49 : vector<1x4x32xf32> to vector<4x32xf32>
    %cst_23 = arith.constant dense<0.000000e+00> : vector<16x32xf32>
    %51 = tpu.matmul %0, %50, %cst_23 {dimension_numbers = #tpu.dot_dimension_numbers<[1], [0], [0], [1], [0, 0, 1, 1], [], []>} : vector<16x4xf32>, vector<4x32xf32>, vector<16x32xf32> -> vector<16x32xf32>
    %52 = vector.extract_strided_slice %2 {offsets = [1, 0], sizes = [1, 32], strides = [1, 1]} : vector<4x32xf32> to vector<1x32xf32>
    %53 = vector.broadcast %52 : vector<1x32xf32> to vector<16x32xf32>
    %54 = arith.mulf %48, %53 : vector<16x32xf32>
    %cst_24 = arith.constant dense<0.000000e+00> : vector<16xf32>
    %55 = vector.multi_reduction <add>, %54, %cst_24 [1] : vector<16x32xf32> to vector<16xf32>
    %56 = vector.shape_cast %55 : vector<16xf32> to vector<16x1xf32>
    %57 = vector.extract_strided_slice %2 {offsets = [3, 0], sizes = [1, 32], strides = [1, 1]} : vector<4x32xf32> to vector<1x32xf32>
    %58 = vector.broadcast %57 : vector<1x32xf32> to vector<16x32xf32>
    %59 = arith.mulf %51, %58 : vector<16x32xf32>
    %cst_25 = arith.constant dense<0.000000e+00> : vector<16xf32>
    %60 = vector.multi_reduction <add>, %59, %cst_25 [1] : vector<16x32xf32> to vector<16xf32>
    %61 = vector.shape_cast %60 : vector<16xf32> to vector<16x1xf32>
    %62 = vector.shape_cast %56 : vector<16x1xf32> to vector<1x16x1xf32>
    %cst_26 = arith.constant dense<0xFF800000> : vector<1xf32>
    %63 = vector.multi_reduction <maximumf>, %62, %cst_26 [1, 2] : vector<1x16x1xf32> to vector<1xf32>
    %64 = vector.shape_cast %63 : vector<1xf32> to vector<1x1x1xf32>
    %65 = vector.extract %64[0, 0, 0] : f32 from vector<1x1x1xf32>
    %66 = vector.broadcast %65 : f32 to vector<16x1xf32>
    %67 = arith.subf %56, %66 : vector<16x1xf32>
    %68 = math.exp %67 : vector<16x1xf32>
    %69 = vector.shape_cast %61 : vector<16x1xf32> to vector<1x16x1xf32>
    %cst_27 = arith.constant dense<0xFF800000> : vector<1xf32>
    %70 = vector.multi_reduction <maximumf>, %69, %cst_27 [1, 2] : vector<1x16x1xf32> to vector<1xf32>
    %71 = vector.shape_cast %70 : vector<1xf32> to vector<1x1x1xf32>
    %72 = vector.extract %71[0, 0, 0] : f32 from vector<1x1x1xf32>
    %73 = vector.broadcast %72 : f32 to vector<16x1xf32>
    %74 = arith.subf %61, %73 : vector<16x1xf32>
    %75 = math.exp %74 : vector<16x1xf32>
    %76 = vector.broadcast %68 : vector<16x1xf32> to vector<16x32xf32>
    %77 = arith.mulf %76, %48 : vector<16x32xf32>
    %cst_28 = arith.constant dense<0.000000e+00> : vector<16x32xf32>
    %78 = tpu.matmul %1, %77, %cst_28 {dimension_numbers = #tpu.dot_dimension_numbers<[1], [0], [0], [1], [0, 0, 1, 1], [], []>} : vector<16x16xf32>, vector<16x32xf32>, vector<16x32xf32> -> vector<16x32xf32>
    %cst_29 = arith.constant dense<0.000000e+00> : vector<16x1xf32>
    %79 = tpu.matmul %1, %68, %cst_29 {dimension_numbers = #tpu.dot_dimension_numbers<[1], [0], [0], [1], [0, 0, 1, 1], [], []>} : vector<16x16xf32>, vector<16x1xf32>, vector<16x1xf32> -> vector<16x1xf32>
    %80 = arith.mulf %75, %79 : vector<16x1xf32>
    %81 = vector.shape_cast %80 : vector<16x1xf32> to vector<1x16x1xf32>
    %cst_30 = arith.constant dense<0.000000e+00> : vector<1xf32>
    %82 = vector.multi_reduction <add>, %81, %cst_30 [1, 2] : vector<1x16x1xf32> to vector<1xf32>
    %83 = vector.shape_cast %82 : vector<1xf32> to vector<1x1x1xf32>
    %84 = vector.extract %83[0, 0, 0] : f32 from vector<1x1x1xf32>
    %85 = vector.broadcast %75 : vector<16x1xf32> to vector<16x32xf32>
    %86 = arith.mulf %85, %78 : vector<16x32xf32>
    %87 = vector.broadcast %84 : f32 to vector<16x32xf32>
    %88 = arith.divf %86, %87 : vector<16x32xf32>
    %89 = arith.addf %45, %88 : vector<16x32xf32>
    %cst_31 = arith.constant 5.000000e-01 : f32
    %90 = vector.broadcast %cst_31 : f32 to vector<16x32xf32>
    %91 = arith.mulf %89, %90 : vector<16x32xf32>
    %cst_32 = arith.constant 0.000000e+00 : f32
    %92 = vector.broadcast %cst_32 : f32 to vector<16x32xf32>
    %93 = arith.maximumf %91, %92 : vector<16x32xf32>
    %c0_33 = arith.constant 0 : index
    %c0_34 = arith.constant 0 : index
    %94 = vector.load %arg5[%c0_33, %c0_34] : memref<4x32xf32, #tpu.memory_space<vmem>>, vector<4x32xf32>
    %c0_35 = arith.constant 0 : index
    %c0_36 = arith.constant 0 : index
    %c0_37 = arith.constant 0 : index
    %95 = vector.load %arg4[%c0_35, %c0_36, %c0_37] : memref<4x32x32xf32, #tpu.memory_space<vmem>>, vector<1x32x32xf32>
    %96 = vector.shape_cast %95 : vector<1x32x32xf32> to vector<32x32xf32>
    %cst_38 = arith.constant dense<0.000000e+00> : vector<16x32xf32>
    %97 = tpu.matmul %93, %96, %cst_38 {dimension_numbers = #tpu.dot_dimension_numbers<[1], [0], [0], [1], [0, 0, 1, 1], [], []>} : vector<16x32xf32>, vector<32x32xf32>, vector<16x32xf32> -> vector<16x32xf32>
    %c2_39 = arith.constant 2 : index
    %c0_40 = arith.constant 0 : index
    %c0_41 = arith.constant 0 : index
    %98 = vector.load %arg4[%c2_39, %c0_40, %c0_41] : memref<4x32x32xf32, #tpu.memory_space<vmem>>, vector<1x32x32xf32>
    %99 = vector.shape_cast %98 : vector<1x32x32xf32> to vector<32x32xf32>
    %cst_42 = arith.constant dense<0.000000e+00> : vector<16x32xf32>
    %100 = tpu.matmul %93, %99, %cst_42 {dimension_numbers = #tpu.dot_dimension_numbers<[1], [0], [0], [1], [0, 0, 1, 1], [], []>} : vector<16x32xf32>, vector<32x32xf32>, vector<16x32xf32> -> vector<16x32xf32>
    %101 = vector.extract_strided_slice %94 {offsets = [0, 0], sizes = [1, 32], strides = [1, 1]} : vector<4x32xf32> to vector<1x32xf32>
    %102 = vector.broadcast %101 : vector<1x32xf32> to vector<16x32xf32>
    %103 = arith.mulf %97, %102 : vector<16x32xf32>
    %cst_43 = arith.constant dense<0.000000e+00> : vector<16xf32>
    %104 = vector.multi_reduction <add>, %103, %cst_43 [1] : vector<16x32xf32> to vector<16xf32>
    %105 = vector.shape_cast %104 : vector<16xf32> to vector<16x1xf32>
    %106 = vector.extract_strided_slice %94 {offsets = [2, 0], sizes = [1, 32], strides = [1, 1]} : vector<4x32xf32> to vector<1x32xf32>
    %107 = vector.broadcast %106 : vector<1x32xf32> to vector<16x32xf32>
    %108 = arith.mulf %100, %107 : vector<16x32xf32>
    %cst_44 = arith.constant dense<0.000000e+00> : vector<16xf32>
    %109 = vector.multi_reduction <add>, %108, %cst_44 [1] : vector<16x32xf32> to vector<16xf32>
    %110 = vector.shape_cast %109 : vector<16xf32> to vector<16x1xf32>
    %111 = vector.shape_cast %105 : vector<16x1xf32> to vector<1x16x1xf32>
    %cst_45 = arith.constant dense<0xFF800000> : vector<1xf32>
    %112 = vector.multi_reduction <maximumf>, %111, %cst_45 [1, 2] : vector<1x16x1xf32> to vector<1xf32>
    %113 = vector.shape_cast %112 : vector<1xf32> to vector<1x1x1xf32>
    %114 = vector.extract %113[0, 0, 0] : f32 from vector<1x1x1xf32>
    %115 = vector.broadcast %114 : f32 to vector<16x1xf32>
    %116 = arith.subf %105, %115 : vector<16x1xf32>
    %117 = math.exp %116 : vector<16x1xf32>
    %118 = vector.shape_cast %110 : vector<16x1xf32> to vector<1x16x1xf32>
    %cst_46 = arith.constant dense<0xFF800000> : vector<1xf32>
    %119 = vector.multi_reduction <maximumf>, %118, %cst_46 [1, 2] : vector<1x16x1xf32> to vector<1xf32>
    %120 = vector.shape_cast %119 : vector<1xf32> to vector<1x1x1xf32>
    %121 = vector.extract %120[0, 0, 0] : f32 from vector<1x1x1xf32>
    %122 = vector.broadcast %121 : f32 to vector<16x1xf32>
    %123 = arith.subf %110, %122 : vector<16x1xf32>
    %124 = math.exp %123 : vector<16x1xf32>
    %125 = vector.broadcast %117 : vector<16x1xf32> to vector<16x32xf32>
    %126 = arith.mulf %125, %97 : vector<16x32xf32>
    %cst_47 = arith.constant dense<0.000000e+00> : vector<16x32xf32>
    %127 = tpu.matmul %1, %126, %cst_47 {dimension_numbers = #tpu.dot_dimension_numbers<[1], [0], [0], [1], [0, 0, 1, 1], [], []>} : vector<16x16xf32>, vector<16x32xf32>, vector<16x32xf32> -> vector<16x32xf32>
    %cst_48 = arith.constant dense<0.000000e+00> : vector<16x1xf32>
    %128 = tpu.matmul %1, %117, %cst_48 {dimension_numbers = #tpu.dot_dimension_numbers<[1], [0], [0], [1], [0, 0, 1, 1], [], []>} : vector<16x16xf32>, vector<16x1xf32>, vector<16x1xf32> -> vector<16x1xf32>
    %129 = arith.mulf %124, %128 : vector<16x1xf32>
    %130 = vector.shape_cast %129 : vector<16x1xf32> to vector<1x16x1xf32>
    %cst_49 = arith.constant dense<0.000000e+00> : vector<1xf32>
    %131 = vector.multi_reduction <add>, %130, %cst_49 [1, 2] : vector<1x16x1xf32> to vector<1xf32>
    %132 = vector.shape_cast %131 : vector<1xf32> to vector<1x1x1xf32>
    %133 = vector.extract %132[0, 0, 0] : f32 from vector<1x1x1xf32>
    %134 = vector.broadcast %124 : vector<16x1xf32> to vector<16x32xf32>
    %135 = arith.mulf %134, %127 : vector<16x32xf32>
    %136 = vector.broadcast %133 : f32 to vector<16x32xf32>
    %137 = arith.divf %135, %136 : vector<16x32xf32>
    %c1_50 = arith.constant 1 : index
    %c0_51 = arith.constant 0 : index
    %c0_52 = arith.constant 0 : index
    %138 = vector.load %arg4[%c1_50, %c0_51, %c0_52] : memref<4x32x32xf32, #tpu.memory_space<vmem>>, vector<1x32x32xf32>
    %139 = vector.shape_cast %138 : vector<1x32x32xf32> to vector<32x32xf32>
    %cst_53 = arith.constant dense<0.000000e+00> : vector<16x32xf32>
    %140 = tpu.matmul %93, %139, %cst_53 {dimension_numbers = #tpu.dot_dimension_numbers<[1], [0], [0], [1], [0, 0, 1, 1], [], []>} : vector<16x32xf32>, vector<32x32xf32>, vector<16x32xf32> -> vector<16x32xf32>
    %c3_54 = arith.constant 3 : index
    %c0_55 = arith.constant 0 : index
    %c0_56 = arith.constant 0 : index
    %141 = vector.load %arg4[%c3_54, %c0_55, %c0_56] : memref<4x32x32xf32, #tpu.memory_space<vmem>>, vector<1x32x32xf32>
    %142 = vector.shape_cast %141 : vector<1x32x32xf32> to vector<32x32xf32>
    %cst_57 = arith.constant dense<0.000000e+00> : vector<16x32xf32>
    %143 = tpu.matmul %93, %142, %cst_57 {dimension_numbers = #tpu.dot_dimension_numbers<[1], [0], [0], [1], [0, 0, 1, 1], [], []>} : vector<16x32xf32>, vector<32x32xf32>, vector<16x32xf32> -> vector<16x32xf32>
    %144 = vector.extract_strided_slice %94 {offsets = [1, 0], sizes = [1, 32], strides = [1, 1]} : vector<4x32xf32> to vector<1x32xf32>
    %145 = vector.broadcast %144 : vector<1x32xf32> to vector<16x32xf32>
    %146 = arith.mulf %140, %145 : vector<16x32xf32>
    %cst_58 = arith.constant dense<0.000000e+00> : vector<16xf32>
    %147 = vector.multi_reduction <add>, %146, %cst_58 [1] : vector<16x32xf32> to vector<16xf32>
    %148 = vector.shape_cast %147 : vector<16xf32> to vector<16x1xf32>
    %149 = vector.extract_strided_slice %94 {offsets = [3, 0], sizes = [1, 32], strides = [1, 1]} : vector<4x32xf32> to vector<1x32xf32>
    %150 = vector.broadcast %149 : vector<1x32xf32> to vector<16x32xf32>
    %151 = arith.mulf %143, %150 : vector<16x32xf32>
    %cst_59 = arith.constant dense<0.000000e+00> : vector<16xf32>
    %152 = vector.multi_reduction <add>, %151, %cst_59 [1] : vector<16x32xf32> to vector<16xf32>
    %153 = vector.shape_cast %152 : vector<16xf32> to vector<16x1xf32>
    %154 = vector.shape_cast %148 : vector<16x1xf32> to vector<1x16x1xf32>
    %cst_60 = arith.constant dense<0xFF800000> : vector<1xf32>
    %155 = vector.multi_reduction <maximumf>, %154, %cst_60 [1, 2] : vector<1x16x1xf32> to vector<1xf32>
    %156 = vector.shape_cast %155 : vector<1xf32> to vector<1x1x1xf32>
    %157 = vector.extract %156[0, 0, 0] : f32 from vector<1x1x1xf32>
    %158 = vector.broadcast %157 : f32 to vector<16x1xf32>
    %159 = arith.subf %148, %158 : vector<16x1xf32>
    %160 = math.exp %159 : vector<16x1xf32>
    %161 = vector.shape_cast %153 : vector<16x1xf32> to vector<1x16x1xf32>
    %cst_61 = arith.constant dense<0xFF800000> : vector<1xf32>
    %162 = vector.multi_reduction <maximumf>, %161, %cst_61 [1, 2] : vector<1x16x1xf32> to vector<1xf32>
    %163 = vector.shape_cast %162 : vector<1xf32> to vector<1x1x1xf32>
    %164 = vector.extract %163[0, 0, 0] : f32 from vector<1x1x1xf32>
    %165 = vector.broadcast %164 : f32 to vector<16x1xf32>
    %166 = arith.subf %153, %165 : vector<16x1xf32>
    %167 = math.exp %166 : vector<16x1xf32>
    %168 = vector.broadcast %160 : vector<16x1xf32> to vector<16x32xf32>
    %169 = arith.mulf %168, %140 : vector<16x32xf32>
    %cst_62 = arith.constant dense<0.000000e+00> : vector<16x32xf32>
    %170 = tpu.matmul %1, %169, %cst_62 {dimension_numbers = #tpu.dot_dimension_numbers<[1], [0], [0], [1], [0, 0, 1, 1], [], []>} : vector<16x16xf32>, vector<16x32xf32>, vector<16x32xf32> -> vector<16x32xf32>
    %cst_63 = arith.constant dense<0.000000e+00> : vector<16x1xf32>
    %171 = tpu.matmul %1, %160, %cst_63 {dimension_numbers = #tpu.dot_dimension_numbers<[1], [0], [0], [1], [0, 0, 1, 1], [], []>} : vector<16x16xf32>, vector<16x1xf32>, vector<16x1xf32> -> vector<16x1xf32>
    %172 = arith.mulf %167, %171 : vector<16x1xf32>
    %173 = vector.shape_cast %172 : vector<16x1xf32> to vector<1x16x1xf32>
    %cst_64 = arith.constant dense<0.000000e+00> : vector<1xf32>
    %174 = vector.multi_reduction <add>, %173, %cst_64 [1, 2] : vector<1x16x1xf32> to vector<1xf32>
    %175 = vector.shape_cast %174 : vector<1xf32> to vector<1x1x1xf32>
    %176 = vector.extract %175[0, 0, 0] : f32 from vector<1x1x1xf32>
    %177 = vector.broadcast %167 : vector<16x1xf32> to vector<16x32xf32>
    %178 = arith.mulf %177, %170 : vector<16x32xf32>
    %179 = vector.broadcast %176 : f32 to vector<16x32xf32>
    %180 = arith.divf %178, %179 : vector<16x32xf32>
    %181 = arith.addf %137, %180 : vector<16x32xf32>
    %cst_65 = arith.constant 5.000000e-01 : f32
    %182 = vector.broadcast %cst_65 : f32 to vector<16x32xf32>
    %183 = arith.mulf %181, %182 : vector<16x32xf32>
    %cst_66 = arith.constant 0.000000e+00 : f32
    %184 = vector.broadcast %cst_66 : f32 to vector<16x32xf32>
    %185 = arith.maximumf %183, %184 : vector<16x32xf32>
    %c0_67 = arith.constant 0 : index
    %c0_68 = arith.constant 0 : index
    %186 = vector.load %arg12[%c0_67, %c0_68] : memref<6x32xf32, #tpu.memory_space<vmem>>, vector<6x32xf32>
    %187 = vector.extract_strided_slice %186 {offsets = [0, 0], sizes = [1, 32], strides = [1, 1]} : vector<6x32xf32> to vector<1x32xf32>
    %188 = vector.extract_strided_slice %186 {offsets = [1, 0], sizes = [1, 32], strides = [1, 1]} : vector<6x32xf32> to vector<1x32xf32>
    %189 = vector.extract_strided_slice %186 {offsets = [2, 0], sizes = [1, 32], strides = [1, 1]} : vector<6x32xf32> to vector<1x32xf32>
    %190 = vector.extract_strided_slice %186 {offsets = [3, 0], sizes = [1, 32], strides = [1, 1]} : vector<6x32xf32> to vector<1x32xf32>
    %191 = vector.extract_strided_slice %186 {offsets = [4, 0], sizes = [1, 32], strides = [1, 1]} : vector<6x32xf32> to vector<1x32xf32>
    %192 = vector.extract_strided_slice %186 {offsets = [5, 0], sizes = [1, 32], strides = [1, 1]} : vector<6x32xf32> to vector<1x32xf32>
    %c0_69 = arith.constant 0 : index
    %c0_70 = arith.constant 0 : index
    %193 = vector.load %arg7[%c0_69, %c0_70] : memref<6x16xf32, #tpu.memory_space<vmem>>, vector<6x16xf32>
    %cst_71 = arith.constant dense<0.000000e+00> : vector<16xf32>
    %194 = vector.multi_reduction <add>, %185, %cst_71 [1] : vector<16x32xf32> to vector<16xf32>
    %195 = vector.shape_cast %194 : vector<16xf32> to vector<16x1xf32>
    %cst_72 = arith.constant 3.200000e+01 : f32
    %196 = vector.broadcast %cst_72 : f32 to vector<16x1xf32>
    %197 = arith.divf %195, %196 : vector<16x1xf32>
    %198 = vector.broadcast %197 : vector<16x1xf32> to vector<16x32xf32>
    %199 = arith.subf %185, %198 : vector<16x32xf32>
    %200 = arith.mulf %199, %199 : vector<16x32xf32>
    %cst_73 = arith.constant dense<0.000000e+00> : vector<16xf32>
    %201 = vector.multi_reduction <add>, %200, %cst_73 [1] : vector<16x32xf32> to vector<16xf32>
    %202 = vector.shape_cast %201 : vector<16xf32> to vector<16x1xf32>
    %cst_74 = arith.constant 3.200000e+01 : f32
    %203 = vector.broadcast %cst_74 : f32 to vector<16x1xf32>
    %204 = arith.divf %202, %203 : vector<16x1xf32>
    %205 = vector.broadcast %197 : vector<16x1xf32> to vector<16x32xf32>
    %206 = arith.subf %185, %205 : vector<16x32xf32>
    %cst_75 = arith.constant 9.99999974E-6 : f32
    %207 = vector.broadcast %cst_75 : f32 to vector<16x1xf32>
    %208 = arith.addf %204, %207 : vector<16x1xf32>
    %209 = math.rsqrt %208 : vector<16x1xf32>
    %210 = vector.broadcast %209 : vector<16x1xf32> to vector<16x32xf32>
    %211 = arith.mulf %206, %210 : vector<16x32xf32>
    %212 = vector.broadcast %189 : vector<1x32xf32> to vector<16x32xf32>
    %213 = arith.mulf %211, %212 : vector<16x32xf32>
    %214 = vector.broadcast %190 : vector<1x32xf32> to vector<16x32xf32>
    %215 = arith.addf %213, %214 : vector<16x32xf32>
    %c0_76 = arith.constant 0 : index
    %c0_77 = arith.constant 0 : index
    %c0_78 = arith.constant 0 : index
    %216 = vector.load %arg6[%c0_76, %c0_77, %c0_78] : memref<6x32x16xf32, #tpu.memory_space<vmem>>, vector<1x32x16xf32>
    %217 = vector.shape_cast %216 : vector<1x32x16xf32> to vector<32x16xf32>
    %cst_79 = arith.constant dense<0.000000e+00> : vector<16x16xf32>
    %218 = tpu.matmul %215, %217, %cst_79 {dimension_numbers = #tpu.dot_dimension_numbers<[1], [0], [0], [1], [0, 0, 1, 1], [], []>} : vector<16x32xf32>, vector<32x16xf32>, vector<16x16xf32> -> vector<16x16xf32>
    %219 = vector.extract_strided_slice %193 {offsets = [0, 0], sizes = [1, 16], strides = [1, 1]} : vector<6x16xf32> to vector<1x16xf32>
    %220 = vector.broadcast %219 : vector<1x16xf32> to vector<16x16xf32>
    %221 = arith.addf %218, %220 : vector<16x16xf32>
    %c2_80 = arith.constant 2 : index
    %c0_81 = arith.constant 0 : index
    %c0_82 = arith.constant 0 : index
    %222 = vector.load %arg6[%c2_80, %c0_81, %c0_82] : memref<6x32x16xf32, #tpu.memory_space<vmem>>, vector<1x32x16xf32>
    %223 = vector.shape_cast %222 : vector<1x32x16xf32> to vector<32x16xf32>
    %cst_83 = arith.constant dense<0.000000e+00> : vector<16x16xf32>
    %224 = tpu.matmul %215, %223, %cst_83 {dimension_numbers = #tpu.dot_dimension_numbers<[1], [0], [0], [1], [0, 0, 1, 1], [], []>} : vector<16x32xf32>, vector<32x16xf32>, vector<16x16xf32> -> vector<16x16xf32>
    %225 = vector.extract_strided_slice %193 {offsets = [2, 0], sizes = [1, 16], strides = [1, 1]} : vector<6x16xf32> to vector<1x16xf32>
    %226 = vector.broadcast %225 : vector<1x16xf32> to vector<16x16xf32>
    %227 = arith.addf %224, %226 : vector<16x16xf32>
    %c4 = arith.constant 4 : index
    %c0_84 = arith.constant 0 : index
    %c0_85 = arith.constant 0 : index
    %228 = vector.load %arg6[%c4, %c0_84, %c0_85] : memref<6x32x16xf32, #tpu.memory_space<vmem>>, vector<1x32x16xf32>
    %229 = vector.shape_cast %228 : vector<1x32x16xf32> to vector<32x16xf32>
    %cst_86 = arith.constant dense<0.000000e+00> : vector<16x16xf32>
    %230 = tpu.matmul %215, %229, %cst_86 {dimension_numbers = #tpu.dot_dimension_numbers<[1], [0], [0], [1], [0, 0, 1, 1], [], []>} : vector<16x32xf32>, vector<32x16xf32>, vector<16x16xf32> -> vector<16x16xf32>
    %231 = vector.extract_strided_slice %193 {offsets = [4, 0], sizes = [1, 16], strides = [1, 1]} : vector<6x16xf32> to vector<1x16xf32>
    %232 = vector.broadcast %231 : vector<1x16xf32> to vector<16x16xf32>
    %233 = arith.addf %230, %232 : vector<16x16xf32>
    %cst_87 = arith.constant dense<0.000000e+00> : vector<16x16xf32>
    %234 = tpu.matmul %221, %227, %cst_87 {dimension_numbers = #tpu.dot_dimension_numbers<[1], [1], [0], [0], [0, 0, 1, 0], [], []>} : vector<16x16xf32>, vector<16x16xf32>, vector<16x16xf32> -> vector<16x16xf32>
    %cst_88 = arith.constant 2.500000e-01 : f32
    %235 = vector.broadcast %cst_88 : f32 to vector<16x16xf32>
    %236 = arith.mulf %234, %235 : vector<16x16xf32>
    %cst_89 = arith.constant dense<0xFF800000> : vector<16xf32>
    %237 = vector.multi_reduction <maximumf>, %236, %cst_89 [1] : vector<16x16xf32> to vector<16xf32>
    %238 = vector.shape_cast %237 : vector<16xf32> to vector<16x1xf32>
    %239 = vector.broadcast %238 : vector<16x1xf32> to vector<16x16xf32>
    %240 = arith.subf %236, %239 : vector<16x16xf32>
    %241 = math.exp %240 : vector<16x16xf32>
    %cst_90 = arith.constant dense<0.000000e+00> : vector<16xf32>
    %242 = vector.multi_reduction <add>, %241, %cst_90 [1] : vector<16x16xf32> to vector<16xf32>
    %243 = vector.shape_cast %242 : vector<16xf32> to vector<16x1xf32>
    %244 = vector.broadcast %243 : vector<16x1xf32> to vector<16x16xf32>
    %245 = arith.divf %241, %244 : vector<16x16xf32>
    %cst_91 = arith.constant dense<0.000000e+00> : vector<16x16xf32>
    %246 = tpu.matmul %245, %233, %cst_91 {dimension_numbers = #tpu.dot_dimension_numbers<[1], [0], [0], [1], [0, 0, 1, 1], [], []>} : vector<16x16xf32>, vector<16x16xf32>, vector<16x16xf32> -> vector<16x16xf32>
    %c0_92 = arith.constant 0 : index
    %c0_93 = arith.constant 0 : index
    %c0_94 = arith.constant 0 : index
    %247 = vector.load %arg8[%c0_92, %c0_93, %c0_94] : memref<2x16x32xf32, #tpu.memory_space<vmem>>, vector<1x16x32xf32>
    %248 = vector.shape_cast %247 : vector<1x16x32xf32> to vector<16x32xf32>
    %cst_95 = arith.constant dense<0.000000e+00> : vector<16x32xf32>
    %249 = tpu.matmul %246, %248, %cst_95 {dimension_numbers = #tpu.dot_dimension_numbers<[1], [0], [0], [1], [0, 0, 1, 1], [], []>} : vector<16x16xf32>, vector<16x32xf32>, vector<16x32xf32> -> vector<16x32xf32>
    %c1_96 = arith.constant 1 : index
    %c0_97 = arith.constant 0 : index
    %c0_98 = arith.constant 0 : index
    %250 = vector.load %arg6[%c1_96, %c0_97, %c0_98] : memref<6x32x16xf32, #tpu.memory_space<vmem>>, vector<1x32x16xf32>
    %251 = vector.shape_cast %250 : vector<1x32x16xf32> to vector<32x16xf32>
    %cst_99 = arith.constant dense<0.000000e+00> : vector<16x16xf32>
    %252 = tpu.matmul %215, %251, %cst_99 {dimension_numbers = #tpu.dot_dimension_numbers<[1], [0], [0], [1], [0, 0, 1, 1], [], []>} : vector<16x32xf32>, vector<32x16xf32>, vector<16x16xf32> -> vector<16x16xf32>
    %253 = vector.extract_strided_slice %193 {offsets = [1, 0], sizes = [1, 16], strides = [1, 1]} : vector<6x16xf32> to vector<1x16xf32>
    %254 = vector.broadcast %253 : vector<1x16xf32> to vector<16x16xf32>
    %255 = arith.addf %252, %254 : vector<16x16xf32>
    %c3_100 = arith.constant 3 : index
    %c0_101 = arith.constant 0 : index
    %c0_102 = arith.constant 0 : index
    %256 = vector.load %arg6[%c3_100, %c0_101, %c0_102] : memref<6x32x16xf32, #tpu.memory_space<vmem>>, vector<1x32x16xf32>
    %257 = vector.shape_cast %256 : vector<1x32x16xf32> to vector<32x16xf32>
    %cst_103 = arith.constant dense<0.000000e+00> : vector<16x16xf32>
    %258 = tpu.matmul %215, %257, %cst_103 {dimension_numbers = #tpu.dot_dimension_numbers<[1], [0], [0], [1], [0, 0, 1, 1], [], []>} : vector<16x32xf32>, vector<32x16xf32>, vector<16x16xf32> -> vector<16x16xf32>
    %259 = vector.extract_strided_slice %193 {offsets = [3, 0], sizes = [1, 16], strides = [1, 1]} : vector<6x16xf32> to vector<1x16xf32>
    %260 = vector.broadcast %259 : vector<1x16xf32> to vector<16x16xf32>
    %261 = arith.addf %258, %260 : vector<16x16xf32>
    %c5 = arith.constant 5 : index
    %c0_104 = arith.constant 0 : index
    %c0_105 = arith.constant 0 : index
    %262 = vector.load %arg6[%c5, %c0_104, %c0_105] : memref<6x32x16xf32, #tpu.memory_space<vmem>>, vector<1x32x16xf32>
    %263 = vector.shape_cast %262 : vector<1x32x16xf32> to vector<32x16xf32>
    %cst_106 = arith.constant dense<0.000000e+00> : vector<16x16xf32>
    %264 = tpu.matmul %215, %263, %cst_106 {dimension_numbers = #tpu.dot_dimension_numbers<[1], [0], [0], [1], [0, 0, 1, 1], [], []>} : vector<16x32xf32>, vector<32x16xf32>, vector<16x16xf32> -> vector<16x16xf32>
    %265 = vector.extract_strided_slice %193 {offsets = [5, 0], sizes = [1, 16], strides = [1, 1]} : vector<6x16xf32> to vector<1x16xf32>
    %266 = vector.broadcast %265 : vector<1x16xf32> to vector<16x16xf32>
    %267 = arith.addf %264, %266 : vector<16x16xf32>
    %cst_107 = arith.constant dense<0.000000e+00> : vector<16x16xf32>
    %268 = tpu.matmul %255, %261, %cst_107 {dimension_numbers = #tpu.dot_dimension_numbers<[1], [1], [0], [0], [0, 0, 1, 0], [], []>} : vector<16x16xf32>, vector<16x16xf32>, vector<16x16xf32> -> vector<16x16xf32>
    %cst_108 = arith.constant 2.500000e-01 : f32
    %269 = vector.broadcast %cst_108 : f32 to vector<16x16xf32>
    %270 = arith.mulf %268, %269 : vector<16x16xf32>
    %cst_109 = arith.constant dense<0xFF800000> : vector<16xf32>
    %271 = vector.multi_reduction <maximumf>, %270, %cst_109 [1] : vector<16x16xf32> to vector<16xf32>
    %272 = vector.shape_cast %271 : vector<16xf32> to vector<16x1xf32>
    %273 = vector.broadcast %272 : vector<16x1xf32> to vector<16x16xf32>
    %274 = arith.subf %270, %273 : vector<16x16xf32>
    %275 = math.exp %274 : vector<16x16xf32>
    %cst_110 = arith.constant dense<0.000000e+00> : vector<16xf32>
    %276 = vector.multi_reduction <add>, %275, %cst_110 [1] : vector<16x16xf32> to vector<16xf32>
    %277 = vector.shape_cast %276 : vector<16xf32> to vector<16x1xf32>
    %278 = vector.broadcast %277 : vector<16x1xf32> to vector<16x16xf32>
    %279 = arith.divf %275, %278 : vector<16x16xf32>
    %cst_111 = arith.constant dense<0.000000e+00> : vector<16x16xf32>
    %280 = tpu.matmul %279, %267, %cst_111 {dimension_numbers = #tpu.dot_dimension_numbers<[1], [0], [0], [1], [0, 0, 1, 1], [], []>} : vector<16x16xf32>, vector<16x16xf32>, vector<16x16xf32> -> vector<16x16xf32>
    %c1_112 = arith.constant 1 : index
    %c0_113 = arith.constant 0 : index
    %c0_114 = arith.constant 0 : index
    %281 = vector.load %arg8[%c1_112, %c0_113, %c0_114] : memref<2x16x32xf32, #tpu.memory_space<vmem>>, vector<1x16x32xf32>
    %282 = vector.shape_cast %281 : vector<1x16x32xf32> to vector<16x32xf32>
    %cst_115 = arith.constant dense<0.000000e+00> : vector<16x32xf32>
    %283 = tpu.matmul %280, %282, %cst_115 {dimension_numbers = #tpu.dot_dimension_numbers<[1], [0], [0], [1], [0, 0, 1, 1], [], []>} : vector<16x16xf32>, vector<16x32xf32>, vector<16x32xf32> -> vector<16x32xf32>
    %284 = arith.addf %249, %283 : vector<16x32xf32>
    %285 = arith.addf %185, %284 : vector<16x32xf32>
    %286 = vector.broadcast %187 : vector<1x32xf32> to vector<16x32xf32>
    %287 = arith.addf %285, %286 : vector<16x32xf32>
    %cst_116 = arith.constant dense<0.000000e+00> : vector<16xf32>
    %288 = vector.multi_reduction <add>, %287, %cst_116 [1] : vector<16x32xf32> to vector<16xf32>
    %289 = vector.shape_cast %288 : vector<16xf32> to vector<16x1xf32>
    %cst_117 = arith.constant 3.200000e+01 : f32
    %290 = vector.broadcast %cst_117 : f32 to vector<16x1xf32>
    %291 = arith.divf %289, %290 : vector<16x1xf32>
    %292 = vector.broadcast %291 : vector<16x1xf32> to vector<16x32xf32>
    %293 = arith.subf %287, %292 : vector<16x32xf32>
    %294 = arith.mulf %293, %293 : vector<16x32xf32>
    %cst_118 = arith.constant dense<0.000000e+00> : vector<16xf32>
    %295 = vector.multi_reduction <add>, %294, %cst_118 [1] : vector<16x32xf32> to vector<16xf32>
    %296 = vector.shape_cast %295 : vector<16xf32> to vector<16x1xf32>
    %cst_119 = arith.constant 3.200000e+01 : f32
    %297 = vector.broadcast %cst_119 : f32 to vector<16x1xf32>
    %298 = arith.divf %296, %297 : vector<16x1xf32>
    %299 = vector.broadcast %291 : vector<16x1xf32> to vector<16x32xf32>
    %300 = arith.subf %287, %299 : vector<16x32xf32>
    %cst_120 = arith.constant 9.99999974E-6 : f32
    %301 = vector.broadcast %cst_120 : f32 to vector<16x1xf32>
    %302 = arith.addf %298, %301 : vector<16x1xf32>
    %303 = math.rsqrt %302 : vector<16x1xf32>
    %304 = vector.broadcast %303 : vector<16x1xf32> to vector<16x32xf32>
    %305 = arith.mulf %300, %304 : vector<16x32xf32>
    %306 = vector.broadcast %191 : vector<1x32xf32> to vector<16x32xf32>
    %307 = arith.mulf %305, %306 : vector<16x32xf32>
    %308 = vector.broadcast %192 : vector<1x32xf32> to vector<16x32xf32>
    %309 = arith.addf %307, %308 : vector<16x32xf32>
    %c0_121 = arith.constant 0 : index
    %c0_122 = arith.constant 0 : index
    %310 = vector.load %arg9[%c0_121, %c0_122] : memref<32x64xf32, #tpu.memory_space<vmem>>, vector<32x64xf32>
    %cst_123 = arith.constant dense<0.000000e+00> : vector<16x64xf32>
    %311 = tpu.matmul %309, %310, %cst_123 {dimension_numbers = #tpu.dot_dimension_numbers<[1], [0], [0], [1], [0, 0, 1, 1], [], []>} : vector<16x32xf32>, vector<32x64xf32>, vector<16x64xf32> -> vector<16x64xf32>
    %c0_124 = arith.constant 0 : index
    %c0_125 = arith.constant 0 : index
    %312 = vector.load %arg10[%c0_124, %c0_125] : memref<1x64xf32, #tpu.memory_space<vmem>>, vector<1x64xf32>
    %313 = vector.broadcast %312 : vector<1x64xf32> to vector<16x64xf32>
    %314 = arith.addf %311, %313 : vector<16x64xf32>
    %cst_126 = arith.constant 5.000000e-01 : f32
    %315 = vector.broadcast %cst_126 : f32 to vector<16x64xf32>
    %316 = arith.mulf %315, %314 : vector<16x64xf32>
    %cst_127 = arith.constant 0.707106769 : f32
    %317 = vector.broadcast %cst_127 : f32 to vector<16x64xf32>
    %318 = arith.mulf %314, %317 : vector<16x64xf32>
    %319 = math.absf %318 : vector<16x64xf32>
    %cst_128 = arith.constant 0.327591091 : f32
    %320 = vector.broadcast %cst_128 : f32 to vector<16x64xf32>
    %321 = arith.mulf %320, %319 : vector<16x64xf32>
    %cst_129 = arith.constant 1.000000e+00 : f32
    %322 = vector.broadcast %cst_129 : f32 to vector<16x64xf32>
    %323 = arith.addf %322, %321 : vector<16x64xf32>
    %cst_130 = arith.constant 1.000000e+00 : f32
    %324 = vector.broadcast %cst_130 : f32 to vector<16x64xf32>
    %325 = arith.divf %324, %323 : vector<16x64xf32>
    %cst_131 = arith.constant 1.06140542 : f32
    %326 = vector.broadcast %cst_131 : f32 to vector<16x64xf32>
    %327 = arith.mulf %326, %325 : vector<16x64xf32>
    %cst_132 = arith.constant -1.45315206 : f32
    %328 = vector.broadcast %cst_132 : f32 to vector<16x64xf32>
    %329 = arith.addf %327, %328 : vector<16x64xf32>
    %330 = arith.mulf %329, %325 : vector<16x64xf32>
    %cst_133 = arith.constant 1.42141378 : f32
    %331 = vector.broadcast %cst_133 : f32 to vector<16x64xf32>
    %332 = arith.addf %330, %331 : vector<16x64xf32>
    %333 = arith.mulf %332, %325 : vector<16x64xf32>
    %cst_134 = arith.constant -0.284496725 : f32
    %334 = vector.broadcast %cst_134 : f32 to vector<16x64xf32>
    %335 = arith.addf %333, %334 : vector<16x64xf32>
    %336 = arith.mulf %335, %325 : vector<16x64xf32>
    %cst_135 = arith.constant 0.254829586 : f32
    %337 = vector.broadcast %cst_135 : f32 to vector<16x64xf32>
    %338 = arith.addf %336, %337 : vector<16x64xf32>
    %339 = arith.mulf %338, %325 : vector<16x64xf32>
    %cst_136 = arith.constant 0.000000e+00 : f32
    %340 = vector.broadcast %cst_136 : f32 to vector<16x64xf32>
    %341 = arith.subf %340, %319 : vector<16x64xf32>
    %342 = arith.mulf %341, %319 : vector<16x64xf32>
    %343 = math.exp %342 : vector<16x64xf32>
    %344 = arith.mulf %339, %343 : vector<16x64xf32>
    %cst_137 = arith.constant 1.000000e+00 : f32
    %345 = vector.broadcast %cst_137 : f32 to vector<16x64xf32>
    %346 = arith.subf %345, %344 : vector<16x64xf32>
    %cst_138 = arith.constant 0.000000e+00 : f32
    %347 = vector.broadcast %cst_138 : f32 to vector<16x64xf32>
    %348 = arith.cmpf oge, %318, %347 : vector<16x64xf32>
    %cst_139 = arith.constant 0.000000e+00 : f32
    %349 = vector.broadcast %cst_139 : f32 to vector<16x64xf32>
    %350 = arith.subf %349, %346 : vector<16x64xf32>
    %351 = arith.select %348, %346, %350 : vector<16x64xi1>, vector<16x64xf32>
    %cst_140 = arith.constant 1.000000e+00 : f32
    %352 = vector.broadcast %cst_140 : f32 to vector<16x64xf32>
    %353 = arith.addf %352, %351 : vector<16x64xf32>
    %354 = arith.mulf %316, %353 : vector<16x64xf32>
    %c0_141 = arith.constant 0 : index
    %c0_142 = arith.constant 0 : index
    %355 = vector.load %arg11[%c0_141, %c0_142] : memref<64x32xf32, #tpu.memory_space<vmem>>, vector<64x32xf32>
    %cst_143 = arith.constant dense<0.000000e+00> : vector<16x32xf32>
    %356 = tpu.matmul %354, %355, %cst_143 {dimension_numbers = #tpu.dot_dimension_numbers<[1], [0], [0], [1], [0, 0, 1, 1], [], []>} : vector<16x64xf32>, vector<64x32xf32>, vector<16x32xf32> -> vector<16x32xf32>
    %357 = vector.broadcast %188 : vector<1x32xf32> to vector<16x32xf32>
    %358 = arith.addf %356, %357 : vector<16x32xf32>
    %359 = arith.addf %287, %358 : vector<16x32xf32>
    %cst_144 = arith.constant dense<0.000000e+00> : vector<32xf32>
    %360 = vector.multi_reduction <add>, %359, %cst_144 [0] : vector<16x32xf32> to vector<32xf32>
    %361 = vector.shape_cast %360 : vector<32xf32> to vector<1x32xf32>
    %cst_145 = arith.constant 1.600000e+01 : f32
    %362 = vector.broadcast %cst_145 : f32 to vector<1x32xf32>
    %363 = arith.divf %361, %362 : vector<1x32xf32>
    %c0_146 = arith.constant 0 : index
    %c0_147 = arith.constant 0 : index
    %364 = vector.load %arg13[%c0_146, %c0_147] : memref<32x2xf32, #tpu.memory_space<vmem>>, vector<32x2xf32>
    %cst_148 = arith.constant dense<0.000000e+00> : vector<1x2xf32>
    %365 = tpu.matmul %363, %364, %cst_148 {dimension_numbers = #tpu.dot_dimension_numbers<[1], [0], [0], [1], [0, 0, 1, 1], [], []>} : vector<1x32xf32>, vector<32x2xf32>, vector<1x2xf32> -> vector<1x2xf32>
    %c0_149 = arith.constant 0 : index
    %c0_150 = arith.constant 0 : index
    %366 = vector.load %arg14[%c0_149, %c0_150] : memref<1x2xf32, #tpu.memory_space<vmem>>, vector<1x2xf32>
    %367 = arith.addf %365, %366 : vector<1x2xf32>
    %c0_151 = arith.constant 0 : index
    %c0_152 = arith.constant 0 : index
    %368 = vector.load %arg20[%c0_151, %c0_152] : memref<1x2xf32, #tpu.memory_space<vmem>>, vector<1x2xf32>
    tpu.vector_store %arg20[%c0_151, %c0_152], %367 {strides = array<i32>} : memref<1x2xf32, #tpu.memory_space<vmem>>, vector<1x2xf32>,
    %c0_153 = arith.constant 0 : index
    %c0_154 = arith.constant 0 : index
    %369 = vector.load %arg16[%c0_153, %c0_154] : memref<4x32xf32, #tpu.memory_space<vmem>>, vector<4x32xf32>
    %c0_155 = arith.constant 0 : index
    %c0_156 = arith.constant 0 : index
    %c0_157 = arith.constant 0 : index
    %370 = vector.load %arg15[%c0_155, %c0_156, %c0_157] : memref<4x32x32xf32, #tpu.memory_space<vmem>>, vector<1x32x32xf32>
    %371 = vector.shape_cast %370 : vector<1x32x32xf32> to vector<32x32xf32>
    %cst_158 = arith.constant dense<0.000000e+00> : vector<16x32xf32>
    %372 = tpu.matmul %359, %371, %cst_158 {dimension_numbers = #tpu.dot_dimension_numbers<[1], [0], [0], [1], [0, 0, 1, 1], [], []>} : vector<16x32xf32>, vector<32x32xf32>, vector<16x32xf32> -> vector<16x32xf32>
    %c2_159 = arith.constant 2 : index
    %c0_160 = arith.constant 0 : index
    %c0_161 = arith.constant 0 : index
    %373 = vector.load %arg15[%c2_159, %c0_160, %c0_161] : memref<4x32x32xf32, #tpu.memory_space<vmem>>, vector<1x32x32xf32>
    %374 = vector.shape_cast %373 : vector<1x32x32xf32> to vector<32x32xf32>
    %cst_162 = arith.constant dense<0.000000e+00> : vector<16x32xf32>
    %375 = tpu.matmul %359, %374, %cst_162 {dimension_numbers = #tpu.dot_dimension_numbers<[1], [0], [0], [1], [0, 0, 1, 1], [], []>} : vector<16x32xf32>, vector<32x32xf32>, vector<16x32xf32> -> vector<16x32xf32>
    %376 = vector.extract_strided_slice %369 {offsets = [0, 0], sizes = [1, 32], strides = [1, 1]} : vector<4x32xf32> to vector<1x32xf32>
    %377 = vector.broadcast %376 : vector<1x32xf32> to vector<16x32xf32>
    %378 = arith.mulf %372, %377 : vector<16x32xf32>
    %cst_163 = arith.constant dense<0.000000e+00> : vector<16xf32>
    %379 = vector.multi_reduction <add>, %378, %cst_163 [1] : vector<16x32xf32> to vector<16xf32>
    %380 = vector.shape_cast %379 : vector<16xf32> to vector<16x1xf32>
    %381 = vector.extract_strided_slice %369 {offsets = [2, 0], sizes = [1, 32], strides = [1, 1]} : vector<4x32xf32> to vector<1x32xf32>
    %382 = vector.broadcast %381 : vector<1x32xf32> to vector<16x32xf32>
    %383 = arith.mulf %375, %382 : vector<16x32xf32>
    %cst_164 = arith.constant dense<0.000000e+00> : vector<16xf32>
    %384 = vector.multi_reduction <add>, %383, %cst_164 [1] : vector<16x32xf32> to vector<16xf32>
    %385 = vector.shape_cast %384 : vector<16xf32> to vector<16x1xf32>
    %386 = vector.shape_cast %380 : vector<16x1xf32> to vector<1x16x1xf32>
    %cst_165 = arith.constant dense<0xFF800000> : vector<1xf32>
    %387 = vector.multi_reduction <maximumf>, %386, %cst_165 [1, 2] : vector<1x16x1xf32> to vector<1xf32>
    %388 = vector.shape_cast %387 : vector<1xf32> to vector<1x1x1xf32>
    %389 = vector.extract %388[0, 0, 0] : f32 from vector<1x1x1xf32>
    %390 = vector.broadcast %389 : f32 to vector<16x1xf32>
    %391 = arith.subf %380, %390 : vector<16x1xf32>
    %392 = math.exp %391 : vector<16x1xf32>
    %393 = vector.shape_cast %385 : vector<16x1xf32> to vector<1x16x1xf32>
    %cst_166 = arith.constant dense<0xFF800000> : vector<1xf32>
    %394 = vector.multi_reduction <maximumf>, %393, %cst_166 [1, 2] : vector<1x16x1xf32> to vector<1xf32>
    %395 = vector.shape_cast %394 : vector<1xf32> to vector<1x1x1xf32>
    %396 = vector.extract %395[0, 0, 0] : f32 from vector<1x1x1xf32>
    %397 = vector.broadcast %396 : f32 to vector<16x1xf32>
    %398 = arith.subf %385, %397 : vector<16x1xf32>
    %399 = math.exp %398 : vector<16x1xf32>
    %400 = vector.broadcast %392 : vector<16x1xf32> to vector<16x32xf32>
    %401 = arith.mulf %400, %372 : vector<16x32xf32>
    %cst_167 = arith.constant dense<0.000000e+00> : vector<16x32xf32>
    %402 = tpu.matmul %1, %401, %cst_167 {dimension_numbers = #tpu.dot_dimension_numbers<[1], [0], [0], [1], [0, 0, 1, 1], [], []>} : vector<16x16xf32>, vector<16x32xf32>, vector<16x32xf32> -> vector<16x32xf32>
    %cst_168 = arith.constant dense<0.000000e+00> : vector<16x1xf32>
    %403 = tpu.matmul %1, %392, %cst_168 {dimension_numbers = #tpu.dot_dimension_numbers<[1], [0], [0], [1], [0, 0, 1, 1], [], []>} : vector<16x16xf32>, vector<16x1xf32>, vector<16x1xf32> -> vector<16x1xf32>
    %404 = arith.mulf %399, %403 : vector<16x1xf32>
    %405 = vector.shape_cast %404 : vector<16x1xf32> to vector<1x16x1xf32>
    %cst_169 = arith.constant dense<0.000000e+00> : vector<1xf32>
    %406 = vector.multi_reduction <add>, %405, %cst_169 [1, 2] : vector<1x16x1xf32> to vector<1xf32>
    %407 = vector.shape_cast %406 : vector<1xf32> to vector<1x1x1xf32>
    %408 = vector.extract %407[0, 0, 0] : f32 from vector<1x1x1xf32>
    %409 = vector.broadcast %399 : vector<16x1xf32> to vector<16x32xf32>
    %410 = arith.mulf %409, %402 : vector<16x32xf32>
    %411 = vector.broadcast %408 : f32 to vector<16x32xf32>
    %412 = arith.divf %410, %411 : vector<16x32xf32>
    %c1_170 = arith.constant 1 : index
    %c0_171 = arith.constant 0 : index
    %c0_172 = arith.constant 0 : index
    %413 = vector.load %arg15[%c1_170, %c0_171, %c0_172] : memref<4x32x32xf32, #tpu.memory_space<vmem>>, vector<1x32x32xf32>
    %414 = vector.shape_cast %413 : vector<1x32x32xf32> to vector<32x32xf32>
    %cst_173 = arith.constant dense<0.000000e+00> : vector<16x32xf32>
    %415 = tpu.matmul %359, %414, %cst_173 {dimension_numbers = #tpu.dot_dimension_numbers<[1], [0], [0], [1], [0, 0, 1, 1], [], []>} : vector<16x32xf32>, vector<32x32xf32>, vector<16x32xf32> -> vector<16x32xf32>
    %c3_174 = arith.constant 3 : index
    %c0_175 = arith.constant 0 : index
    %c0_176 = arith.constant 0 : index
    %416 = vector.load %arg15[%c3_174, %c0_175, %c0_176] : memref<4x32x32xf32, #tpu.memory_space<vmem>>, vector<1x32x32xf32>
    %417 = vector.shape_cast %416 : vector<1x32x32xf32> to vector<32x32xf32>
    %cst_177 = arith.constant dense<0.000000e+00> : vector<16x32xf32>
    %418 = tpu.matmul %359, %417, %cst_177 {dimension_numbers = #tpu.dot_dimension_numbers<[1], [0], [0], [1], [0, 0, 1, 1], [], []>} : vector<16x32xf32>, vector<32x32xf32>, vector<16x32xf32> -> vector<16x32xf32>
    %419 = vector.extract_strided_slice %369 {offsets = [1, 0], sizes = [1, 32], strides = [1, 1]} : vector<4x32xf32> to vector<1x32xf32>
    %420 = vector.broadcast %419 : vector<1x32xf32> to vector<16x32xf32>
    %421 = arith.mulf %415, %420 : vector<16x32xf32>
    %cst_178 = arith.constant dense<0.000000e+00> : vector<16xf32>
    %422 = vector.multi_reduction <add>, %421, %cst_178 [1] : vector<16x32xf32> to vector<16xf32>
    %423 = vector.shape_cast %422 : vector<16xf32> to vector<16x1xf32>
    %424 = vector.extract_strided_slice %369 {offsets = [3, 0], sizes = [1, 32], strides = [1, 1]} : vector<4x32xf32> to vector<1x32xf32>
    %425 = vector.broadcast %424 : vector<1x32xf32> to vector<16x32xf32>
    %426 = arith.mulf %418, %425 : vector<16x32xf32>
    %cst_179 = arith.constant dense<0.000000e+00> : vector<16xf32>
    %427 = vector.multi_reduction <add>, %426, %cst_179 [1] : vector<16x32xf32> to vector<16xf32>
    %428 = vector.shape_cast %427 : vector<16xf32> to vector<16x1xf32>
    %429 = vector.shape_cast %423 : vector<16x1xf32> to vector<1x16x1xf32>
    %cst_180 = arith.constant dense<0xFF800000> : vector<1xf32>
    %430 = vector.multi_reduction <maximumf>, %429, %cst_180 [1, 2] : vector<1x16x1xf32> to vector<1xf32>
    %431 = vector.shape_cast %430 : vector<1xf32> to vector<1x1x1xf32>
    %432 = vector.extract %431[0, 0, 0] : f32 from vector<1x1x1xf32>
    %433 = vector.broadcast %432 : f32 to vector<16x1xf32>
    %434 = arith.subf %423, %433 : vector<16x1xf32>
    %435 = math.exp %434 : vector<16x1xf32>
    %436 = vector.shape_cast %428 : vector<16x1xf32> to vector<1x16x1xf32>
    %cst_181 = arith.constant dense<0xFF800000> : vector<1xf32>
    %437 = vector.multi_reduction <maximumf>, %436, %cst_181 [1, 2] : vector<1x16x1xf32> to vector<1xf32>
    %438 = vector.shape_cast %437 : vector<1xf32> to vector<1x1x1xf32>
    %439 = vector.extract %438[0, 0, 0] : f32 from vector<1x1x1xf32>
    %440 = vector.broadcast %439 : f32 to vector<16x1xf32>
    %441 = arith.subf %428, %440 : vector<16x1xf32>
    %442 = math.exp %441 : vector<16x1xf32>
    %443 = vector.broadcast %435 : vector<16x1xf32> to vector<16x32xf32>
    %444 = arith.mulf %443, %415 : vector<16x32xf32>
    %cst_182 = arith.constant dense<0.000000e+00> : vector<16x32xf32>
    %445 = tpu.matmul %1, %444, %cst_182 {dimension_numbers = #tpu.dot_dimension_numbers<[1], [0], [0], [1], [0, 0, 1, 1], [], []>} : vector<16x16xf32>, vector<16x32xf32>, vector<16x32xf32> -> vector<16x32xf32>
    %cst_183 = arith.constant dense<0.000000e+00> : vector<16x1xf32>
    %446 = tpu.matmul %1, %435, %cst_183 {dimension_numbers = #tpu.dot_dimension_numbers<[1], [0], [0], [1], [0, 0, 1, 1], [], []>} : vector<16x16xf32>, vector<16x1xf32>, vector<16x1xf32> -> vector<16x1xf32>
    %447 = arith.mulf %442, %446 : vector<16x1xf32>
    %448 = vector.shape_cast %447 : vector<16x1xf32> to vector<1x16x1xf32>
    %cst_184 = arith.constant dense<0.000000e+00> : vector<1xf32>
    %449 = vector.multi_reduction <add>, %448, %cst_184 [1, 2] : vector<1x16x1xf32> to vector<1xf32>
    %450 = vector.shape_cast %449 : vector<1xf32> to vector<1x1x1xf32>
    %451 = vector.extract %450[0, 0, 0] : f32 from vector<1x1x1xf32>
    %452 = vector.broadcast %442 : vector<16x1xf32> to vector<16x32xf32>
    %453 = arith.mulf %452, %445 : vector<16x32xf32>
    %454 = vector.broadcast %451 : f32 to vector<16x32xf32>
    %455 = arith.divf %453, %454 : vector<16x32xf32>
    %456 = arith.addf %412, %455 : vector<16x32xf32>
    %cst_185 = arith.constant 5.000000e-01 : f32
    %457 = vector.broadcast %cst_185 : f32 to vector<16x32xf32>
    %458 = arith.mulf %456, %457 : vector<16x32xf32>
    %cst_186 = arith.constant 0.000000e+00 : f32
    %459 = vector.broadcast %cst_186 : f32 to vector<16x32xf32>
    %460 = arith.maximumf %458, %459 : vector<16x32xf32>
    %c0_187 = arith.constant 0 : index
    %c0_188 = arith.constant 0 : index
    %461 = vector.load %arg18[%c0_187, %c0_188] : memref<2x8xf32, #tpu.memory_space<vmem>>, vector<2x8xf32>
    %c0_189 = arith.constant 0 : index
    %c0_190 = arith.constant 0 : index
    %c0_191 = arith.constant 0 : index
    %462 = vector.load %arg17[%c0_189, %c0_190, %c0_191] : memref<2x32x8xf32, #tpu.memory_space<vmem>>, vector<1x32x8xf32>
    %463 = vector.shape_cast %462 : vector<1x32x8xf32> to vector<32x8xf32>
    %cst_192 = arith.constant dense<0.000000e+00> : vector<16x8xf32>
    %464 = tpu.matmul %460, %463, %cst_192 {dimension_numbers = #tpu.dot_dimension_numbers<[1], [0], [0], [1], [0, 0, 1, 1], [], []>} : vector<16x32xf32>, vector<32x8xf32>, vector<16x8xf32> -> vector<16x8xf32>
    %c1_193 = arith.constant 1 : index
    %c0_194 = arith.constant 0 : index
    %c0_195 = arith.constant 0 : index
    %465 = vector.load %arg17[%c1_193, %c0_194, %c0_195] : memref<2x32x8xf32, #tpu.memory_space<vmem>>, vector<1x32x8xf32>
    %466 = vector.shape_cast %465 : vector<1x32x8xf32> to vector<32x8xf32>
    %cst_196 = arith.constant dense<0.000000e+00> : vector<16x8xf32>
    %467 = tpu.matmul %460, %466, %cst_196 {dimension_numbers = #tpu.dot_dimension_numbers<[1], [0], [0], [1], [0, 0, 1, 1], [], []>} : vector<16x32xf32>, vector<32x8xf32>, vector<16x8xf32> -> vector<16x8xf32>
    %468 = vector.extract_strided_slice %461 {offsets = [0, 0], sizes = [1, 8], strides = [1, 1]} : vector<2x8xf32> to vector<1x8xf32>
    %469 = vector.broadcast %468 : vector<1x8xf32> to vector<16x8xf32>
    %470 = arith.mulf %464, %469 : vector<16x8xf32>
    %cst_197 = arith.constant dense<0.000000e+00> : vector<16xf32>
    %471 = vector.multi_reduction <add>, %470, %cst_197 [1] : vector<16x8xf32> to vector<16xf32>
    %472 = vector.shape_cast %471 : vector<16xf32> to vector<16x1xf32>
    %473 = vector.extract_strided_slice %461 {offsets = [1, 0], sizes = [1, 8], strides = [1, 1]} : vector<2x8xf32> to vector<1x8xf32>
    %474 = vector.broadcast %473 : vector<1x8xf32> to vector<16x8xf32>
    %475 = arith.mulf %467, %474 : vector<16x8xf32>
    %cst_198 = arith.constant dense<0.000000e+00> : vector<16xf32>
    %476 = vector.multi_reduction <add>, %475, %cst_198 [1] : vector<16x8xf32> to vector<16xf32>
    %477 = vector.shape_cast %476 : vector<16xf32> to vector<16x1xf32>
    %478 = vector.shape_cast %472 : vector<16x1xf32> to vector<1x16x1xf32>
    %cst_199 = arith.constant dense<0xFF800000> : vector<1xf32>
    %479 = vector.multi_reduction <maximumf>, %478, %cst_199 [1, 2] : vector<1x16x1xf32> to vector<1xf32>
    %480 = vector.shape_cast %479 : vector<1xf32> to vector<1x1x1xf32>
    %481 = vector.extract %480[0, 0, 0] : f32 from vector<1x1x1xf32>
    %482 = vector.broadcast %481 : f32 to vector<16x1xf32>
    %483 = arith.subf %472, %482 : vector<16x1xf32>
    %484 = math.exp %483 : vector<16x1xf32>
    %485 = vector.shape_cast %477 : vector<16x1xf32> to vector<1x16x1xf32>
    %cst_200 = arith.constant dense<0xFF800000> : vector<1xf32>
    %486 = vector.multi_reduction <maximumf>, %485, %cst_200 [1, 2] : vector<1x16x1xf32> to vector<1xf32>
    %487 = vector.shape_cast %486 : vector<1xf32> to vector<1x1x1xf32>
    %488 = vector.extract %487[0, 0, 0] : f32 from vector<1x1x1xf32>
    %489 = vector.broadcast %488 : f32 to vector<16x1xf32>
    %490 = arith.subf %477, %489 : vector<16x1xf32>
    %491 = math.exp %490 : vector<16x1xf32>
    %492 = vector.broadcast %484 : vector<16x1xf32> to vector<16x8xf32>
    %493 = arith.mulf %492, %464 : vector<16x8xf32>
    %cst_201 = arith.constant dense<0.000000e+00> : vector<16x8xf32>
    %494 = tpu.matmul %1, %493, %cst_201 {dimension_numbers = #tpu.dot_dimension_numbers<[1], [0], [0], [1], [0, 0, 1, 1], [], []>} : vector<16x16xf32>, vector<16x8xf32>, vector<16x8xf32> -> vector<16x8xf32>
    %cst_202 = arith.constant dense<0.000000e+00> : vector<16x1xf32>
    %495 = tpu.matmul %1, %484, %cst_202 {dimension_numbers = #tpu.dot_dimension_numbers<[1], [0], [0], [1], [0, 0, 1, 1], [], []>} : vector<16x16xf32>, vector<16x1xf32>, vector<16x1xf32> -> vector<16x1xf32>
    %496 = arith.mulf %491, %495 : vector<16x1xf32>
    %497 = vector.shape_cast %496 : vector<16x1xf32> to vector<1x16x1xf32>
    %cst_203 = arith.constant dense<0.000000e+00> : vector<1xf32>
    %498 = vector.multi_reduction <add>, %497, %cst_203 [1, 2] : vector<1x16x1xf32> to vector<1xf32>
    %499 = vector.shape_cast %498 : vector<1xf32> to vector<1x1x1xf32>
    %500 = vector.extract %499[0, 0, 0] : f32 from vector<1x1x1xf32>
    %501 = vector.broadcast %491 : vector<16x1xf32> to vector<16x8xf32>
    %502 = arith.mulf %501, %494 : vector<16x8xf32>
    %503 = vector.broadcast %500 : f32 to vector<16x8xf32>
    %504 = arith.divf %502, %503 : vector<16x8xf32>
    %cst_204 = arith.constant 1.000000e+00 : f32
    %505 = vector.broadcast %cst_204 : f32 to vector<16x8xf32>
    %506 = arith.mulf %504, %505 : vector<16x8xf32>
    %c0_205 = arith.constant 0 : index
    %c0_206 = arith.constant 0 : index
    %507 = vector.load %arg19[%c0_205, %c0_206] : memref<16x8xf32, #tpu.memory_space<vmem>>, vector<16x8xf32>
    tpu.vector_store %arg19[%c0_205, %c0_206], %506 {strides = array<i32>} : memref<16x8xf32, #tpu.memory_space<vmem>>, vector<16x8xf32>,
    return
  }
}

</mosaic_0001>

<llo_original>
// kernel: tgat_unet_forward.1
$region0: #{tgat_unet_forward.1}
  #allocation0 [shape = 'u32[]', space=smem, size = 0x4, offset = 0x4, fixed_abs, tag = 'smem constant byte address 0x4 - core index']
  #allocation1 [shape = 'u32[72,128]{1,0:T(1,128)}', space=vmem, size = 0x9000, scoped, tag = 'internal scratch']
  %s0 = inlined_call_operand.vmem [shape: f32[16,4], index: 0, kind: input, shape index: {}]
  %s1 = inlined_call_operand.vmem [shape: f32[16,16], index: 1, kind: input, shape index: {}]
  %s2 = inlined_call_operand.vmem [shape: f32[4,4,32], index: 2, kind: input, shape index: {}]
  %s3 = inlined_call_operand.vmem [shape: f32[4,32], index: 3, kind: input, shape index: {}]
  %s4 = inlined_call_operand.vmem [shape: f32[4,32,32], index: 4, kind: input, shape index: {}]
  %s5 = inlined_call_operand.vmem [shape: f32[4,32], index: 5, kind: input, shape index: {}]
  %s6 = inlined_call_operand.vmem [shape: f32[6,32,16], index: 6, kind: input, shape index: {}]
  %s7 = inlined_call_operand.vmem [shape: f32[6,16], index: 7, kind: input, shape index: {}]
  %s8 = inlined_call_operand.vmem [shape: f32[2,16,32], index: 8, kind: input, shape index: {}]
  %s9 = inlined_call_operand.vmem [shape: f32[32,64], index: 9, kind: input, shape index: {}]
  %s10 = inlined_call_operand.vmem [shape: f32[1,64], index: 10, kind: input, shape index: {}]
  %s11 = inlined_call_operand.vmem [shape: f32[64,32], index: 11, kind: input, shape index: {}]
  %s12 = inlined_call_operand.vmem [shape: f32[6,32], index: 12, kind: input, shape index: {}]
  %s13 = inlined_call_operand.vmem [shape: f32[32,2], index: 13, kind: input, shape index: {}]
  %s14 = inlined_call_operand.vmem [shape: f32[1,2], index: 14, kind: input, shape index: {}]
  %s15 = inlined_call_operand.vmem [shape: f32[4,32,32], index: 15, kind: input, shape index: {}]
  %s16 = inlined_call_operand.vmem [shape: f32[4,32], index: 16, kind: input, shape index: {}]
  %s17 = inlined_call_operand.vmem [shape: f32[2,32,8], index: 17, kind: input, shape index: {}]
  %s18 = inlined_call_operand.vmem [shape: f32[2,8], index: 18, kind: input, shape index: {}]
  %s19 = inlined_call_operand.vmem [shape: f32[16,8], index: 19, kind: output, shape index: {0}]
  %s20 = inlined_call_operand.hbm [shape: f32[1,2], index: 20, kind: output, shape index: {1}]
  %21 = xla_tuple %s19, %s20
  %s22 = sld [smem:[#allocation0]]
  $region94: #{tgat_unet_forward.1} parent=0
    _
  %s24 = ssub.s32 1, %s22
  %s25 = scalar_select 0, %s24, %s22
  $region1: #{tgat_unet_forward.1} parent=0
    #allocation2 [shape = 'u8[512]{0}', space=vmem, size = 0x400, scoped, tag = 'output window, operand 1, single buffered']
    #allocation3 [shape = 's32[1]{0}', space=sflag, size = 0x4, scoped, tag = 'scoped memory for tgat_unet_forward.1']
    %26 = vsyncpa [#allocation3], 0
    // Predicated region
    $region2: #{tgat_unet_forward.1} parent=1 // pred_check
      _
    $region3: #{tgat_unet_forward.1} parent=1 // pred_check_branch
      %28 = sbr.rel (0) target = $region5
    $region4: #{tgat_unet_forward.1} parent=1 // pred_region
      _
    $region5: #{tgat_unet_forward.1} parent=1 // pred_fallthru
      _
    // Predicated region
    $region6: #{tgat_unet_forward.1} parent=1 // pred_check
      _
    $region7: #{tgat_unet_forward.1} parent=1 // pred_check_branch
      %30 = sbr.rel (0) target = $region9
    $region8: #{tgat_unet_forward.1} parent=1 // pred_region
      _
    $region9: #{tgat_unet_forward.1} parent=1 // pred_fallthru
      _
    // Predicated region
    $region10: #{tgat_unet_forward.1} parent=1 // pred_check
      _
    $region11: #{tgat_unet_forward.1} parent=1 // pred_check_branch
      %32 = sbr.rel (0) target = $region13
    $region12: #{tgat_unet_forward.1} parent=1 // pred_region
      _
    $region13: #{tgat_unet_forward.1} parent=1 // pred_fallthru
      _
    // Predicated region
    $region14: #{tgat_unet_forward.1} parent=1 // pred_check
      _
    $region15: #{tgat_unet_forward.1} parent=1 // pred_check_branch
      %34 = sbr.rel (0) target = $region17
    $region16: #{tgat_unet_forward.1} parent=1 // pred_region
      _
    $region17: #{tgat_unet_forward.1} parent=1 // pred_fallthru
      _
    // Predicated region
    $region18: #{tgat_unet_forward.1} parent=1 // pred_check
      _
    $region19: #{tgat_unet_forward.1} parent=1 // pred_check_branch
      %36 = sbr.rel (0) target = $region21
    $region20: #{tgat_unet_forward.1} parent=1 // pred_region
      _
    $region21: #{tgat_unet_forward.1} parent=1 // pred_fallthru
      _
    // Predicated region
    $region22: #{tgat_unet_forward.1} parent=1 // pred_check
      _
    $region23: #{tgat_unet_forward.1} parent=1 // pred_check_branch
      %38 = sbr.rel (0) target = $region25
    $region24: #{tgat_unet_forward.1} parent=1 // pred_region
      _
    $region25: #{tgat_unet_forward.1} parent=1 // pred_fallthru
      _
    // Predicated region
    $region26: #{tgat_unet_forward.1} parent=1 // pred_check
      _
    $region27: #{tgat_unet_forward.1} parent=1 // pred_check_branch
      %40 = sbr.rel (0) target = $region29
    $region28: #{tgat_unet_forward.1} parent=1 // pred_region
      _
    $region29: #{tgat_unet_forward.1} parent=1 // pred_fallthru
      _
    // Predicated region
    $region30: #{tgat_unet_forward.1} parent=1 // pred_check
      _
    $region31: #{tgat_unet_forward.1} parent=1 // pred_check_branch
      %42 = sbr.rel (0) target = $region33
    $region32: #{tgat_unet_forward.1} parent=1 // pred_region
      _
    $region33: #{tgat_unet_forward.1} parent=1 // pred_fallthru
      _
    // Predicated region
    $region34: #{tgat_unet_forward.1} parent=1 // pred_check
      _
    $region35: #{tgat_unet_forward.1} parent=1 // pred_check_branch
      %44 = sbr.rel (0) target = $region37
    $region36: #{tgat_unet_forward.1} parent=1 // pred_region
      _
    $region37: #{tgat_unet_forward.1} parent=1 // pred_fallthru
      _
    // Predicated region
    $region38: #{tgat_unet_forward.1} parent=1 // pred_check
      _
    $region39: #{tgat_unet_forward.1} parent=1 // pred_check_branch
      %46 = sbr.rel (0) target = $region41
    $region40: #{tgat_unet_forward.1} parent=1 // pred_region
      _
    $region41: #{tgat_unet_forward.1} parent=1 // pred_fallthru
      _
    // Predicated region
    $region42: #{tgat_unet_forward.1} parent=1 // pred_check
      _
    $region43: #{tgat_unet_forward.1} parent=1 // pred_check_branch
      %48 = sbr.rel (0) target = $region45
    $region44: #{tgat_unet_forward.1} parent=1 // pred_region
      _
    $region45: #{tgat_unet_forward.1} parent=1 // pred_fallthru
      _
    // Predicated region
    $region46: #{tgat_unet_forward.1} parent=1 // pred_check
      _
    $region47: #{tgat_unet_forward.1} parent=1 // pred_check_branch
      %50 = sbr.rel (0) target = $region49
    $region48: #{tgat_unet_forward.1} parent=1 // pred_region
      _
    $region49: #{tgat_unet_forward.1} parent=1 // pred_fallthru
      _
    // Predicated region
    $region50: #{tgat_unet_forward.1} parent=1 // pred_check
      _
    $region51: #{tgat_unet_forward.1} parent=1 // pred_check_branch
      %52 = sbr.rel (0) target = $region53
    $region52: #{tgat_unet_forward.1} parent=1 // pred_region
      _
    $region53: #{tgat_unet_forward.1} parent=1 // pred_fallthru
      _
    // Predicated region
    $region54: #{tgat_unet_forward.1} parent=1 // pred_check
      _
    $region55: #{tgat_unet_forward.1} parent=1 // pred_check_branch
      %54 = sbr.rel (0) target = $region57
    $region56: #{tgat_unet_forward.1} parent=1 // pred_region
      _
    $region57: #{tgat_unet_forward.1} parent=1 // pred_fallthru
      _
    // Predicated region
    $region58: #{tgat_unet_forward.1} parent=1 // pred_check
      _
    $region59: #{tgat_unet_forward.1} parent=1 // pred_check_branch
      %56 = sbr.rel (0) target = $region61
    $region60: #{tgat_unet_forward.1} parent=1 // pred_region
      _
    $region61: #{tgat_unet_forward.1} parent=1 // pred_fallthru
      _
    // Predicated region
    $region62: #{tgat_unet_forward.1} parent=1 // pred_check
      _
    $region63: #{tgat_unet_forward.1} parent=1 // pred_check_branch
      %58 = sbr.rel (0) target = $region65
    $region64: #{tgat_unet_forward.1} parent=1 // pred_region
      _
    $region65: #{tgat_unet_forward.1} parent=1 // pred_fallthru
      _
    // Predicated region
    $region66: #{tgat_unet_forward.1} parent=1 // pred_check
      _
    $region67: #{tgat_unet_forward.1} parent=1 // pred_check_branch
      %60 = sbr.rel (0) target = $region69
    $region68: #{tgat_unet_forward.1} parent=1 // pred_region
      _
    $region69: #{tgat_unet_forward.1} parent=1 // pred_fallthru
      _
    // Predicated region
    $region70: #{tgat_unet_forward.1} parent=1 // pred_check
      _
    $region71: #{tgat_unet_forward.1} parent=1 // pred_check_branch
      %62 = sbr.rel (0) target = $region73
    $region72: #{tgat_unet_forward.1} parent=1 // pred_region
      _
    $region73: #{tgat_unet_forward.1} parent=1 // pred_fallthru
      _
    // Predicated region
    $region74: #{tgat_unet_forward.1} parent=1 // pred_check
      _
    $region75: #{tgat_unet_forward.1} parent=1 // pred_check_branch
      %64 = sbr.rel (0) target = $region77
    $region76: #{tgat_unet_forward.1} parent=1 // pred_region
      _
    $region77: #{tgat_unet_forward.1} parent=1 // pred_fallthru
      _
    %v65 = vld [vmem:[%s0] sm:$0xff]
    %v66 = vld [vmem:[%s0 + $0x8] sm:$0xff]
    %v67 = vld [vmem:[%s1] sm:$0xff]
    %v68 = vld [vmem:[%s1 + $0x8] sm:$0xff]
    %v69 = vld [vmem:[%s3] sm:$0xf]
    %v70 = vld [vmem:[%s2] sm:$0xf]
    %vm71 = vcmask 31744
    %v73 = vsel %vm71, %v65, 0
    %v76 = vsel %vm71, %v66, 0
    %vm78 = vcmask 1043456
    %v80 = vsel %vm78, %v70, 0
    %82 = vmatpush.msra.mxu0 0.0
    %83 = vmatpush.msra.mxu0 0.0
    %84 = vmatpush.msra.mxu0 0.0
    %85 = vmatpush.msra.mxu0 0.0
    %86 = vmatpush.msra.mxu0 0.0
    %87 = vmatpush.msra.mxu0 0.0
    %88 = vmatpush.msra.mxu0 0.0
    %89 = vmatpush.msra.mxu0 0.0
    %90 = vmatpush.msra.mxu0 0.0
    %91 = vmatpush.msra.mxu0 0.0
    %92 = vmatpush.msra.mxu0 0.0
    %93 = vmatpush.msra.mxu0 0.0
    %94 = vmatpush.msra.mxu0 0.0
    %95 = vmatpush.msra.mxu0 0.0
    %96 = vmatpush.msra.mxu0 0.0
    %97 = vmatpush.msra.mxu0 %v80
    %98 = vmatmul.f32.gmra.mxu0 %v73
    %v99 = vpop.f32.mrf.mxu0
    %v100 = vadd.f32 0.0, %v99
    %101 = vmatmul.f32.gmra.mxu0 %v76
    %v102 = vpop.f32.mrf.mxu0
    %v103 = vadd.f32 0.0, %v102
    %104 = vdwg.mxu0
    %s105 = scalar_lea.vmem %s2, 8
    %v106 = vld [vmem:[%s105] sm:$0xf]
    %v108 = vsel %vm78, %v106, 0
    %110 = vmatpush.msra.mxu0 0.0
    %111 = vmatpush.msra.mxu0 0.0
    %112 = vmatpush.msra.mxu0 0.0
    %113 = vmatpush.msra.mxu0 0.0
    %114 = vmatpush.msra.mxu0 0.0
    %115 = vmatpush.msra.mxu0 0.0
    %116 = vmatpush.msra.mxu0 0.0
    %117 = vmatpush.msra.mxu0 0.0
    %118 = vmatpush.msra.mxu0 0.0
    %119 = vmatpush.msra.mxu0 0.0
    %120 = vmatpush.msra.mxu0 0.0
    %121 = vmatpush.msra.mxu0 0.0
    %122 = vmatpush.msra.mxu0 0.0
    %123 = vmatpush.msra.mxu0 0.0
    %124 = vmatpush.msra.mxu0 0.0
    %125 = vmatpush.msra.mxu0 %v108
    %126 = vmatmul.f32.gmra.mxu0 %v73
    %v127 = vpop.f32.mrf.mxu0
    %v128 = vadd.f32 0.0, %v127
    %129 = vmatmul.f32.gmra.mxu0 %v76
    %v130 = vpop.f32.mrf.mxu0
    %v131 = vadd.f32 0.0, %v130
    %132 = vdwg.mxu0
    %v133 = vperm.slane %v69, 0
    %v134 = vmul.f32 %v100, %v133
    %v135 = vmul.f32 %v103, %v133
    %vm136 = vcmask 261120
    %v137 = vsel %vm136, %v134, 0.0
    %138 = vadd.xlane.f32.xlu0 %v137
    %v139 = vpop.xlane.xlu0 %138
    %v140 = vsel %vm136, %v135, 0.0
    %141 = vadd.xlane.f32.xlu0 %v140
    %v142 = vpop.xlane.xlu0 %141
    %v143 = vperm.slane %v69, 2
    %v144 = vmul.f32 %v128, %v143
    %v145 = vmul.f32 %v131, %v143
    %v146 = vsel %vm136, %v144, 0.0
    %147 = vadd.xlane.f32.xlu0 %v146
    %v148 = vpop.xlane.xlu0 %147
    %v149 = vsel %vm136, %v145, 0.0
    %150 = vadd.xlane.f32.xlu0 %v149
    %v151 = vpop.xlane.xlu0 %150
    %v152 = vmax.f32 %v139, %v142
    %v153 = vrot.slane %v152, 4
    %v154 = vmax.f32 %v152, %v153
    %v155 = vrot.slane %v154, 2
    %v156 = vmax.f32 %v154, %v155
    %v157 = vrot.slane %v156, 1
    %v158 = vmax.f32 %v156, %v157
    %s159 = vtos %v158
    %v160 = vstv %s159
    %v161 = vsub.f32 %v139, %v160
    %v162 = vsub.f32 %v142, %v160
    %v163 = vmul.f32 %v161, 1.442695
    %v164 = vpow.pop %v163
    %v165 = vmul.f32 %v162, 1.442695
    %v166 = vpow.pop %v165
    %v167 = vmax.f32 %v148, %v151
    %v168 = vrot.slane %v167, 4
    %v169 = vmax.f32 %v167, %v168
    %v170 = vrot.slane %v169, 2
    %v171 = vmax.f32 %v169, %v170
    %v172 = vrot.slane %v171, 1
    %v173 = vmax.f32 %v171, %v172
    %s174 = vtos %v173
    %v175 = vstv %s174
    %v176 = vsub.f32 %v148, %v175
    %v177 = vsub.f32 %v151, %v175
    %v178 = vmul.f32 %v176, 1.442695
    %v179 = vpow.pop %v178
    %v180 = vmul.f32 %v177, 1.442695
    %v181 = vpow.pop %v180
    %v182 = vmul.f32 %v164, %v100
    %v183 = vmul.f32 %v166, %v103
    %vm184 = vcmask 130048
    %v186 = vsel %vm184, %v67, 0
    %v189 = vsel %vm184, %v68, 0
    %191 = vmatpush.msra.mxu0 0.0
    %192 = vmatpush.msra.mxu0 0.0
    %193 = vmatpush.msra.mxu0 0.0
    %194 = vmatpush.msra.mxu0 0.0
    %195 = vmatpush.msra.mxu0 0.0
    %196 = vmatpush.msra.mxu0 0.0
    %197 = vmatpush.msra.mxu0 0.0
    %198 = vmatpush.msra.mxu0 0.0
    %199 = vmatpush.msra.mxu0 0.0
    %200 = vmatpush.msra.mxu0 0.0
    %201 = vmatpush.msra.mxu0 0.0
    %202 = vmatpush.msra.mxu0 0.0
    %203 = vmatpush.msra.mxu0 0.0
    %204 = vmatpush.msra.mxu0 0.0
    %205 = vmatpush.msra.mxu0 %v183
    %206 = vmatpush.msra.mxu0 %v182
    %207 = vmatmul.f32.gmra.mxu0 %v186
    %v208 = vpop.f32.mrf.mxu0
    %v209 = vadd.f32 0.0, %v208
    %210 = vmatmul.f32.gmra.mxu0 %v189
    %v211 = vpop.f32.mrf.mxu0
    %v212 = vadd.f32 0.0, %v211
    %213 = vdwg.mxu0
    %214 = vmatpush.msra.mxu0 0.0
    %215 = vmatpush.msra.mxu0 0.0
    %216 = vmatpush.msra.mxu0 0.0
    %217 = vmatpush.msra.mxu0 0.0
    %218 = vmatpush.msra.mxu0 0.0
    %219 = vmatpush.msra.mxu0 0.0
    %220 = vmatpush.msra.mxu0 0.0
    %221 = vmatpush.msra.mxu0 0.0
    %222 = vmatpush.msra.mxu0 0.0
    %223 = vmatpush.msra.mxu0 0.0
    %224 = vmatpush.msra.mxu0 0.0
    %225 = vmatpush.msra.mxu0 0.0
    %226 = vmatpush.msra.mxu0 0.0
    %227 = vmatpush.msra.mxu0 0.0
    %228 = vmatpush.msra.mxu0 %v166
    %229 = vmatpush.msra.mxu0 %v164
    %230 = vmatmul.f32.gmra.mxu0 %v186
    %v231 = vpop.f32.mrf.mxu0
    %v232 = vadd.f32 0.0, %v231
    %233 = vmatmul.f32.gmra.mxu0 %v189
    %v234 = vpop.f32.mrf.mxu0
    %v235 = vadd.f32 0.0, %v234
    %236 = vdwg.mxu0
    %v237 = vmul.f32 %v179, %v232
    %v238 = vmul.f32 %v181, %v235
    %vm239 = vcmask 7168
    %v240 = vsel %vm239, %v237, 0.0
    %v241 = vsel %vm239, %v238, 0.0
    %v242 = vadd.f32 %v240, %v241
    %243 = vadd.xlane.f32.xlu0 %v242
    %v244 = vpop.xlane.xlu0 %243
    %v245 = vrot.slane %v244, 4
    %v246 = vadd.f32 %v244, %v245
    %v247 = vrot.slane %v246, 2
    %v248 = vadd.f32 %v246, %v247
    %v249 = vrot.slane %v248, 1
    %v250 = vadd.f32 %v248, %v249
    %s251 = vtos %v250
    %v252 = vmul.f32 %v179, %v209
    %v253 = vmul.f32 %v181, %v212
    %v254 = vstv %s251
    %v255 = vrcp.pop %v254
    %v256 = vmul.f32 %v254, %v255
    %v257 = vsub.f32 1.0, %v256
    %v258 = vmul.f32 %v255, %v257
    %v259 = vadd.f32 %v255, %v258
    %vm260 = vweird.f32 %v254
    %vm261 = vweird.f32 %v255
    %vm262 = vmor %vm260, %vm261
    %v263 = vsel %vm262, %v255, %v259
    %v264 = vand.u32 2147483647, %v254
    %vm265 = vcmp.eq.f32.partialorder %v264, 8.507059e+37
    %v266 = vand.u32 %v254, 2147483648
    %v267 = vor.u32 1.1754944e-38, %v266
    %v268 = vsel %vm265, %v267, %v263
    %v269 = vmul.f32 %v252, %v268
    %v270 = vmul.f32 %v253, %v268
    %s271 = scalar_lea.vmem %s2, 4
    %v272 = vld [vmem:[%s271] sm:$0xf]
    %v274 = vsel %vm78, %v272, 0
    %276 = vmatpush.msra.mxu0 0.0
    %277 = vmatpush.msra.mxu0 0.0
    %278 = vmatpush.msra.mxu0 0.0
    %279 = vmatpush.msra.mxu0 0.0
    %280 = vmatpush.msra.mxu0 0.0
    %281 = vmatpush.msra.mxu0 0.0
    %282 = vmatpush.msra.mxu0 0.0
    %283 = vmatpush.msra.mxu0 0.0
    %284 = vmatpush.msra.mxu0 0.0
    %285 = vmatpush.msra.mxu0 0.0
    %286 = vmatpush.msra.mxu0 0.0
    %287 = vmatpush.msra.mxu0 0.0
    %288 = vmatpush.msra.mxu0 0.0
    %289 = vmatpush.msra.mxu0 0.0
    %290 = vmatpush.msra.mxu0 0.0
    %291 = vmatpush.msra.mxu0 %v274
    %292 = vmatmul.f32.gmra.mxu0 %v73
    %v293 = vpop.f32.mrf.mxu0
    %v294 = vadd.f32 0.0, %v293
    %295 = vmatmul.f32.gmra.mxu0 %v76
    %v296 = vpop.f32.mrf.mxu0
    %v297 = vadd.f32 0.0, %v296
    %298 = vdwg.mxu0
    %s299 = scalar_lea.vmem %s2, 12
    %v300 = vld [vmem:[%s299] sm:$0xf]
    %v302 = vsel %vm78, %v300, 0
    %304 = vmatpush.msra.mxu0 0.0
    %305 = vmatpush.msra.mxu0 0.0
    %306 = vmatpush.msra.mxu0 0.0
    %307 = vmatpush.msra.mxu0 0.0
    %308 = vmatpush.msra.mxu0 0.0
    %309 = vmatpush.msra.mxu0 0.0
    %310 = vmatpush.msra.mxu0 0.0
    %311 = vmatpush.msra.mxu0 0.0
    %312 = vmatpush.msra.mxu0 0.0
    %313 = vmatpush.msra.mxu0 0.0
    %314 = vmatpush.msra.mxu0 0.0
    %315 = vmatpush.msra.mxu0 0.0
    %316 = vmatpush.msra.mxu0 0.0
    %317 = vmatpush.msra.mxu0 0.0
    %318 = vmatpush.msra.mxu0 0.0
    %319 = vmatpush.msra.mxu0 %v302
    %320 = vmatmul.f32.gmra.mxu0 %v73
    %v321 = vpop.f32.mrf.mxu0
    %v322 = vadd.f32 0.0, %v321
    %323 = vmatmul.f32.gmra.mxu0 %v76
    %v324 = vpop.f32.mrf.mxu0
    %v325 = vadd.f32 0.0, %v324
    %326 = vdwg.mxu0
    %v327 = vperm.slane %v69, 1
    %v328 = vmul.f32 %v294, %v327
    %v329 = vmul.f32 %v297, %v327
    %v330 = vsel %vm136, %v328, 0.0
    %331 = vadd.xlane.f32.xlu0 %v330
    %v332 = vpop.xlane.xlu0 %331
    %v333 = vsel %vm136, %v329, 0.0
    %334 = vadd.xlane.f32.xlu0 %v333
    %v335 = vpop.xlane.xlu0 %334
    %v336 = vperm.slane %v69, 3
    %v337 = vmul.f32 %v322, %v336
    %v338 = vmul.f32 %v325, %v336
    %v339 = vsel %vm136, %v337, 0.0
    %340 = vadd.xlane.f32.xlu0 %v339
    %v341 = vpop.xlane.xlu0 %340
    %v342 = vsel %vm136, %v338, 0.0
    %343 = vadd.xlane.f32.xlu0 %v342
    %v344 = vpop.xlane.xlu0 %343
    %v345 = vmax.f32 %v332, %v335
    %v346 = vrot.slane %v345, 4
    %v347 = vmax.f32 %v345, %v346
    %v348 = vrot.slane %v347, 2
    %v349 = vmax.f32 %v347, %v348
    %v350 = vrot.slane %v349, 1
    %v351 = vmax.f32 %v349, %v350
    %s352 = vtos %v351
    %v353 = vstv %s352
    %v354 = vsub.f32 %v332, %v353
    %v355 = vsub.f32 %v335, %v353
    %v356 = vmul.f32 %v354, 1.442695
    %v357 = vpow.pop %v356
    %v358 = vmul.f32 %v355, 1.442695
    %v359 = vpow.pop %v358
    %v360 = vmax.f32 %v341, %v344
    %v361 = vrot.slane %v360, 4
    %v362 = vmax.f32 %v360, %v361
    %v363 = vrot.slane %v362, 2
    %v364 = vmax.f32 %v362, %v363
    %v365 = vrot.slane %v364, 1
    %v366 = vmax.f32 %v364, %v365
    %s367 = vtos %v366
    %v368 = vstv %s367
    %v369 = vsub.f32 %v341, %v368
    %v370 = vsub.f32 %v344, %v368
    %v371 = vmul.f32 %v369, 1.442695
    %v372 = vpow.pop %v371
    %v373 = vmul.f32 %v370, 1.442695
    %v374 = vpow.pop %v373
    %v375 = vmul.f32 %v357, %v294
    %v376 = vmul.f32 %v359, %v297
    %377 = vmatpush.msra.mxu0 0.0
    %378 = vmatpush.msra.mxu0 0.0
    %379 = vmatpush.msra.mxu0 0.0
    %380 = vmatpush.msra.mxu0 0.0
    %381 = vmatpush.msra.mxu0 0.0
    %382 = vmatpush.msra.mxu0 0.0
    %383 = vmatpush.msra.mxu0 0.0
    %384 = vmatpush.msra.mxu0 0.0
    %385 = vmatpush.msra.mxu0 0.0
    %386 = vmatpush.msra.mxu0 0.0
    %387 = vmatpush.msra.mxu0 0.0
    %388 = vmatpush.msra.mxu0 0.0
    %389 = vmatpush.msra.mxu0 0.0
    %390 = vmatpush.msra.mxu0 0.0
    %391 = vmatpush.msra.mxu0 %v376
    %392 = vmatpush.msra.mxu0 %v375
    %393 = vmatmul.f32.gmra.mxu0 %v186
    %v394 = vpop.f32.mrf.mxu0
    %v395 = vadd.f32 0.0, %v394
    %396 = vmatmul.f32.gmra.mxu0 %v189
    %v397 = vpop.f32.mrf.mxu0
    %v398 = vadd.f32 0.0, %v397
    %399 = vdwg.mxu0
    %400 = vmatpush.msra.mxu0 0.0
    %401 = vmatpush.msra.mxu0 0.0
    %402 = vmatpush.msra.mxu0 0.0
    %403 = vmatpush.msra.mxu0 0.0
    %404 = vmatpush.msra.mxu0 0.0
    %405 = vmatpush.msra.mxu0 0.0
    %406 = vmatpush.msra.mxu0 0.0
    %407 = vmatpush.msra.mxu0 0.0
    %408 = vmatpush.msra.mxu0 0.0
    %409 = vmatpush.msra.mxu0 0.0
    %410 = vmatpush.msra.mxu0 0.0
    %411 = vmatpush.msra.mxu0 0.0
    %412 = vmatpush.msra.mxu0 0.0
    %413 = vmatpush.msra.mxu0 0.0
    %414 = vmatpush.msra.mxu0 %v359
    %415 = vmatpush.msra.mxu0 %v357
    %416 = vmatmul.f32.gmra.mxu0 %v186
    %v417 = vpop.f32.mrf.mxu0
    %v418 = vadd.f32 0.0, %v417
    %419 = vmatmul.f32.gmra.mxu0 %v189
    %v420 = vpop.f32.mrf.mxu0
    %v421 = vadd.f32 0.0, %v420
    %422 = vdwg.mxu0
    %v423 = vmul.f32 %v372, %v418
    %v424 = vmul.f32 %v374, %v421
    %v425 = vsel %vm239, %v423, 0.0
    %v426 = vsel %vm239, %v424, 0.0
    %v427 = vadd.f32 %v425, %v426
    %428 = vadd.xlane.f32.xlu0 %v427
    %v429 = vpop.xlane.xlu0 %428
    %v430 = vrot.slane %v429, 4
    %v431 = vadd.f32 %v429, %v430
    %v432 = vrot.slane %v431, 2
    %v433 = vadd.f32 %v431, %v432
    %v434 = vrot.slane %v433, 1
    %v435 = vadd.f32 %v433, %v434
    %s436 = vtos %v435
    %v437 = vmul.f32 %v372, %v395
    %v438 = vmul.f32 %v374, %v398
    %v439 = vstv %s436
    %v440 = vrcp.pop %v439
    %v441 = vmul.f32 %v439, %v440
    %v442 = vsub.f32 1.0, %v441
    %v443 = vmul.f32 %v440, %v442
    %v444 = vadd.f32 %v440, %v443
    %vm445 = vweird.f32 %v439
    %vm446 = vweird.f32 %v440
    %vm447 = vmor %vm445, %vm446
    %v448 = vsel %vm447, %v440, %v444
    %v449 = vand.u32 2147483647, %v439
    %vm450 = vcmp.eq.f32.partialorder %v449, 8.507059e+37
    %v451 = vand.u32 %v439, 2147483648
    %v452 = vor.u32 1.1754944e-38, %v451
    %v453 = vsel %vm450, %v452, %v448
    %v454 = vmul.f32 %v437, %v453
    %v455 = vmul.f32 %v438, %v453
    %v456 = vadd.f32 %v269, %v454
    %v457 = vadd.f32 %v270, %v455
    %v458 = vmul.f32 %v456, 0.5
    %v459 = vmul.f32 %v457, 0.5
    %v460 = vmax.f32 %v458, 0.0
    %v461 = vmax.f32 %v459, 0.0
    %v462 = vld [vmem:[%s5] sm:$0xf]
    %v463 = vld [vmem:[%s4] sm:$0xff]
    %v464 = vld [vmem:[%s4 + $0x8] sm:$0xff]
    %v465 = vld [vmem:[%s4 + $0x10] sm:$0xff]
    %v466 = vld [vmem:[%s4 + $0x18] sm:$0xff]
    %v468 = vsel %vm136, %v460, 0
    %v471 = vsel %vm136, %v461, 0
    %473 = vmatpush.msra.mxu0 0.0
    %474 = vmatpush.msra.mxu0 0.0
    %475 = vmatpush.msra.mxu0 0.0
    %476 = vmatpush.msra.mxu0 0.0
    %477 = vmatpush.msra.mxu0 0.0
    %478 = vmatpush.msra.mxu0 0.0
    %479 = vmatpush.msra.mxu0 0.0
    %480 = vmatpush.msra.mxu0 0.0
    %481 = vmatpush.msra.mxu0 0.0
    %482 = vmatpush.msra.mxu0 0.0
    %483 = vmatpush.msra.mxu0 0.0
    %484 = vmatpush.msra.mxu0 0.0
    %485 = vmatpush.msra.mxu0 %v466
    %486 = vmatpush.msra.mxu0 %v465
    %487 = vmatpush.msra.mxu0 %v464
    %488 = vmatpush.msra.mxu0 %v463
    %489 = vmatmul.f32.gmra.mxu0 %v468
    %v490 = vpop.f32.mrf.mxu0
    %v491 = vadd.f32 0.0, %v490
    %492 = vmatmul.f32.gmra.mxu0 %v471
    %v493 = vpop.f32.mrf.mxu0
    %v494 = vadd.f32 0.0, %v493
    %495 = vdwg.mxu0
    %s496 = scalar_lea.vmem %s4, 64
    %v497 = vld [vmem:[%s496] sm:$0xff]
    %v498 = vld [vmem:[%s496 + $0x8] sm:$0xff]
    %v499 = vld [vmem:[%s496 + $0x10] sm:$0xff]
    %v500 = vld [vmem:[%s496 + $0x18] sm:$0xff]
    %501 = vmatpush.msra.mxu0 0.0
    %502 = vmatpush.msra.mxu0 0.0
    %503 = vmatpush.msra.mxu0 0.0
    %504 = vmatpush.msra.mxu0 0.0
    %505 = vmatpush.msra.mxu0 0.0
    %506 = vmatpush.msra.mxu0 0.0
    %507 = vmatpush.msra.mxu0 0.0
    %508 = vmatpush.msra.mxu0 0.0
    %509 = vmatpush.msra.mxu0 0.0
    %510 = vmatpush.msra.mxu0 0.0
    %511 = vmatpush.msra.mxu0 0.0
    %512 = vmatpush.msra.mxu0 0.0
    %513 = vmatpush.msra.mxu0 %v500
    %514 = vmatpush.msra.mxu0 %v499
    %515 = vmatpush.msra.mxu0 %v498
    %516 = vmatpush.msra.mxu0 %v497
    %517 = vmatmul.f32.gmra.mxu0 %v468
    %v518 = vpop.f32.mrf.mxu0
    %v519 = vadd.f32 0.0, %v518
    %520 = vmatmul.f32.gmra.mxu0 %v471
    %v521 = vpop.f32.mrf.mxu0
    %v522 = vadd.f32 0.0, %v521
    %523 = vdwg.mxu0
    %v524 = vperm.slane %v462, 0
    %v525 = vmul.f32 %v491, %v524
    %v526 = vmul.f32 %v494, %v524
    %v527 = vsel %vm136, %v525, 0.0
    %528 = vadd.xlane.f32.xlu0 %v527
    %v529 = vpop.xlane.xlu0 %528
    %v530 = vsel %vm136, %v526, 0.0
    %531 = vadd.xlane.f32.xlu0 %v530
    %v532 = vpop.xlane.xlu0 %531
    %v533 = vperm.slane %v462, 2
    %v534 = vmul.f32 %v519, %v533
    %v535 = vmul.f32 %v522, %v533
    %v536 = vsel %vm136, %v534, 0.0
    %537 = vadd.xlane.f32.xlu0 %v536
    %v538 = vpop.xlane.xlu0 %537
    %v539 = vsel %vm136, %v535, 0.0
    %540 = vadd.xlane.f32.xlu0 %v539
    %v541 = vpop.xlane.xlu0 %540
    %v542 = vmax.f32 %v529, %v532
    %v543 = vrot.slane %v542, 4
    %v544 = vmax.f32 %v542, %v543
    %v545 = vrot.slane %v544, 2
    %v546 = vmax.f32 %v544, %v545
    %v547 = vrot.slane %v546, 1
    %v548 = vmax.f32 %v546, %v547
    %s549 = vtos %v548
    %v550 = vstv %s549
    %v551 = vsub.f32 %v529, %v550
    %v552 = vsub.f32 %v532, %v550
    %v553 = vmul.f32 %v551, 1.442695
    %v554 = vpow.pop %v553
    %v555 = vmul.f32 %v552, 1.442695
    %v556 = vpow.pop %v555
    %v557 = vmax.f32 %v538, %v541
    %v558 = vrot.slane %v557, 4
    %v559 = vmax.f32 %v557, %v558
    %v560 = vrot.slane %v559, 2
    %v561 = vmax.f32 %v559, %v560
    %v562 = vrot.slane %v561, 1
    %v563 = vmax.f32 %v561, %v562
    %s564 = vtos %v563
    %v565 = vstv %s564
    %v566 = vsub.f32 %v538, %v565
    %v567 = vsub.f32 %v541, %v565
    %v568 = vmul.f32 %v566, 1.442695
    %v569 = vpow.pop %v568
    %v570 = vmul.f32 %v567, 1.442695
    %v571 = vpow.pop %v570
    %v572 = vmul.f32 %v554, %v491
    %v573 = vmul.f32 %v556, %v494
    %574 = vmatpush.msra.mxu0 0.0
    %575 = vmatpush.msra.mxu0 0.0
    %576 = vmatpush.msra.mxu0 0.0
    %577 = vmatpush.msra.mxu0 0.0
    %578 = vmatpush.msra.mxu0 0.0
    %579 = vmatpush.msra.mxu0 0.0
    %580 = vmatpush.msra.mxu0 0.0
    %581 = vmatpush.msra.mxu0 0.0
    %582 = vmatpush.msra.mxu0 0.0
    %583 = vmatpush.msra.mxu0 0.0
    %584 = vmatpush.msra.mxu0 0.0
    %585 = vmatpush.msra.mxu0 0.0
    %586 = vmatpush.msra.mxu0 0.0
    %587 = vmatpush.msra.mxu0 0.0
    %588 = vmatpush.msra.mxu0 %v573
    %589 = vmatpush.msra.mxu0 %v572
    %590 = vmatmul.f32.gmra.mxu0 %v186
    %v591 = vpop.f32.mrf.mxu0
    %v592 = vadd.f32 0.0, %v591
    %593 = vmatmul.f32.gmra.mxu0 %v189
    %v594 = vpop.f32.mrf.mxu0
    %v595 = vadd.f32 0.0, %v594
    %596 = vdwg.mxu0
    %597 = vmatpush.msra.mxu0 0.0
    %598 = vmatpush.msra.mxu0 0.0
    %599 = vmatpush.msra.mxu0 0.0
    %600 = vmatpush.msra.mxu0 0.0
    %601 = vmatpush.msra.mxu0 0.0
    %602 = vmatpush.msra.mxu0 0.0
    %603 = vmatpush.msra.mxu0 0.0
    %604 = vmatpush.msra.mxu0 0.0
    %605 = vmatpush.msra.mxu0 0.0
    %606 = vmatpush.msra.mxu0 0.0
    %607 = vmatpush.msra.mxu0 0.0
    %608 = vmatpush.msra.mxu0 0.0
    %609 = vmatpush.msra.mxu0 0.0
    %610 = vmatpush.msra.mxu0 0.0
    %611 = vmatpush.msra.mxu0 %v556
    %612 = vmatpush.msra.mxu0 %v554
    %613 = vmatmul.f32.gmra.mxu0 %v186
    %v614 = vpop.f32.mrf.mxu0
    %v615 = vadd.f32 0.0, %v614
    %616 = vmatmul.f32.gmra.mxu0 %v189
    %v617 = vpop.f32.mrf.mxu0
    %v618 = vadd.f32 0.0, %v617
    %619 = vdwg.mxu0
    %v620 = vmul.f32 %v569, %v615
    %v621 = vmul.f32 %v571, %v618
    %v622 = vsel %vm239, %v620, 0.0
    %v623 = vsel %vm239, %v621, 0.0
    %v624 = vadd.f32 %v622, %v623
    %625 = vadd.xlane.f32.xlu0 %v624
    %v626 = vpop.xlane.xlu0 %625
    %v627 = vrot.slane %v626, 4
    %v628 = vadd.f32 %v626, %v627
    %v629 = vrot.slane %v628, 2
    %v630 = vadd.f32 %v628, %v629
    %v631 = vrot.slane %v630, 1
    %v632 = vadd.f32 %v630, %v631
    %s633 = vtos %v632
    %v634 = vmul.f32 %v569, %v592
    %v635 = vmul.f32 %v571, %v595
    %v636 = vstv %s633
    %v637 = vrcp.pop %v636
    %v638 = vmul.f32 %v636, %v637
    %v639 = vsub.f32 1.0, %v638
    %v640 = vmul.f32 %v637, %v639
    %v641 = vadd.f32 %v637, %v640
    %vm642 = vweird.f32 %v636
    %vm643 = vweird.f32 %v637
    %vm644 = vmor %vm642, %vm643
    %v645 = vsel %vm644, %v637, %v641
    %v646 = vand.u32 2147483647, %v636
    %vm647 = vcmp.eq.f32.partialorder %v646, 8.507059e+37
    %v648 = vand.u32 %v636, 2147483648
    %v649 = vor.u32 1.1754944e-38, %v648
    %v650 = vsel %vm647, %v649, %v645
    %v651 = vmul.f32 %v634, %v650
    %v652 = vmul.f32 %v635, %v650
    %s653 = scalar_lea.vmem %s4, 32
    %v654 = vld [vmem:[%s653] sm:$0xff]
    %v655 = vld [vmem:[%s653 + $0x8] sm:$0xff]
    %v656 = vld [vmem:[%s653 + $0x10] sm:$0xff]
    %v657 = vld [vmem:[%s653 + $0x18] sm:$0xff]
    %658 = vmatpush.msra.mxu0 0.0
    %659 = vmatpush.msra.mxu0 0.0
    %660 = vmatpush.msra.mxu0 0.0
    %661 = vmatpush.msra.mxu0 0.0
    %662 = vmatpush.msra.mxu0 0.0
    %663 = vmatpush.msra.mxu0 0.0
    %664 = vmatpush.msra.mxu0 0.0
    %665 = vmatpush.msra.mxu0 0.0
    %666 = vmatpush.msra.mxu0 0.0
    %667 = vmatpush.msra.mxu0 0.0
    %668 = vmatpush.msra.mxu0 0.0
    %669 = vmatpush.msra.mxu0 0.0
    %670 = vmatpush.msra.mxu0 %v657
    %671 = vmatpush.msra.mxu0 %v656
    %672 = vmatpush.msra.mxu0 %v655
    %673 = vmatpush.msra.mxu0 %v654
    %674 = vmatmul.f32.gmra.mxu0 %v468
    %v675 = vpop.f32.mrf.mxu0
    %v676 = vadd.f32 0.0, %v675
    %677 = vmatmul.f32.gmra.mxu0 %v471
    %v678 = vpop.f32.mrf.mxu0
    %v679 = vadd.f32 0.0, %v678
    %680 = vdwg.mxu0
    %s681 = scalar_lea.vmem %s4, 96
    %v682 = vld [vmem:[%s681] sm:$0xff]
    %v683 = vld [vmem:[%s681 + $0x8] sm:$0xff]
    %v684 = vld [vmem:[%s681 + $0x10] sm:$0xff]
    %v685 = vld [vmem:[%s681 + $0x18] sm:$0xff]
    %686 = vmatpush.msra.mxu0 0.0
    %687 = vmatpush.msra.mxu0 0.0
    %688 = vmatpush.msra.mxu0 0.0
    %689 = vmatpush.msra.mxu0 0.0
    %690 = vmatpush.msra.mxu0 0.0
    %691 = vmatpush.msra.mxu0 0.0
    %692 = vmatpush.msra.mxu0 0.0
    %693 = vmatpush.msra.mxu0 0.0
    %694 = vmatpush.msra.mxu0 0.0
    %695 = vmatpush.msra.mxu0 0.0
    %696 = vmatpush.msra.mxu0 0.0
    %697 = vmatpush.msra.mxu0 0.0
    %698 = vmatpush.msra.mxu0 %v685
    %699 = vmatpush.msra.mxu0 %v684
    %700 = vmatpush.msra.mxu0 %v683
    %701 = vmatpush.msra.mxu0 %v682
    %702 = vmatmul.f32.gmra.mxu0 %v468
    %v703 = vpop.f32.mrf.mxu0
    %v704 = vadd.f32 0.0, %v703
    %705 = vmatmul.f32.gmra.mxu0 %v471
    %v706 = vpop.f32.mrf.mxu0
    %v707 = vadd.f32 0.0, %v706
    %708 = vdwg.mxu0
    %v709 = vperm.slane %v462, 1
    %v710 = vmul.f32 %v676, %v709
    %v711 = vmul.f32 %v679, %v709
    %v712 = vsel %vm136, %v710, 0.0
    %713 = vadd.xlane.f32.xlu0 %v712
    %v714 = vpop.xlane.xlu0 %713
    %v715 = vsel %vm136, %v711, 0.0
    %716 = vadd.xlane.f32.xlu0 %v715
    %v717 = vpop.xlane.xlu0 %716
    %v718 = vperm.slane %v462, 3
    %v719 = vmul.f32 %v704, %v718
    %v720 = vmul.f32 %v707, %v718
    %v721 = vsel %vm136, %v719, 0.0
    %722 = vadd.xlane.f32.xlu0 %v721
    %v723 = vpop.xlane.xlu0 %722
    %v724 = vsel %vm136, %v720, 0.0
    %725 = vadd.xlane.f32.xlu0 %v724
    %v726 = vpop.xlane.xlu0 %725
    %v727 = vmax.f32 %v714, %v717
    %v728 = vrot.slane %v727, 4
    %v729 = vmax.f32 %v727, %v728
    %v730 = vrot.slane %v729, 2
    %v731 = vmax.f32 %v729, %v730
    %v732 = vrot.slane %v731, 1
    %v733 = vmax.f32 %v731, %v732
    %s734 = vtos %v733
    %v735 = vstv %s734
    %v736 = vsub.f32 %v714, %v735
    %v737 = vsub.f32 %v717, %v735
    %v738 = vmul.f32 %v736, 1.442695
    %v739 = vpow.pop %v738
    %v740 = vmul.f32 %v737, 1.442695
    %v741 = vpow.pop %v740
    %v742 = vmax.f32 %v723, %v726
    %v743 = vrot.slane %v742, 4
    %v744 = vmax.f32 %v742, %v743
    %v745 = vrot.slane %v744, 2
    %v746 = vmax.f32 %v744, %v745
    %v747 = vrot.slane %v746, 1
    %v748 = vmax.f32 %v746, %v747
    %s749 = vtos %v748
    %v750 = vstv %s749
    %v751 = vsub.f32 %v723, %v750
    %v752 = vsub.f32 %v726, %v750
    %v753 = vmul.f32 %v751, 1.442695
    %v754 = vpow.pop %v753
    %v755 = vmul.f32 %v752, 1.442695
    %v756 = vpow.pop %v755
    %v757 = vmul.f32 %v739, %v676
    %v758 = vmul.f32 %v741, %v679
    %759 = vmatpush.msra.mxu0 0.0
    %760 = vmatpush.msra.mxu0 0.0
    %761 = vmatpush.msra.mxu0 0.0
    %762 = vmatpush.msra.mxu0 0.0
    %763 = vmatpush.msra.mxu0 0.0
    %764 = vmatpush.msra.mxu0 0.0
    %765 = vmatpush.msra.mxu0 0.0
    %766 = vmatpush.msra.mxu0 0.0
    %767 = vmatpush.msra.mxu0 0.0
    %768 = vmatpush.msra.mxu0 0.0
    %769 = vmatpush.msra.mxu0 0.0
    %770 = vmatpush.msra.mxu0 0.0
    %771 = vmatpush.msra.mxu0 0.0
    %772 = vmatpush.msra.mxu0 0.0
    %773 = vmatpush.msra.mxu0 %v758
    %774 = vmatpush.msra.mxu0 %v757
    %775 = vmatmul.f32.gmra.mxu0 %v186
    %v776 = vpop.f32.mrf.mxu0
    %v777 = vadd.f32 0.0, %v776
    %778 = vmatmul.f32.gmra.mxu0 %v189
    %v779 = vpop.f32.mrf.mxu0
    %v780 = vadd.f32 0.0, %v779
    %781 = vdwg.mxu0
    %782 = vmatpush.msra.mxu0 0.0
    %783 = vmatpush.msra.mxu0 0.0
    %784 = vmatpush.msra.mxu0 0.0
    %785 = vmatpush.msra.mxu0 0.0
    %786 = vmatpush.msra.mxu0 0.0
    %787 = vmatpush.msra.mxu0 0.0
    %788 = vmatpush.msra.mxu0 0.0
    %789 = vmatpush.msra.mxu0 0.0
    %790 = vmatpush.msra.mxu0 0.0
    %791 = vmatpush.msra.mxu0 0.0
    %792 = vmatpush.msra.mxu0 0.0
    %793 = vmatpush.msra.mxu0 0.0
    %794 = vmatpush.msra.mxu0 0.0
    %795 = vmatpush.msra.mxu0 0.0
    %796 = vmatpush.msra.mxu0 %v741
    %797 = vmatpush.msra.mxu0 %v739
    %798 = vmatmul.f32.gmra.mxu0 %v186
    %v799 = vpop.f32.mrf.mxu0
    %v800 = vadd.f32 0.0, %v799
    %801 = vmatmul.f32.gmra.mxu0 %v189
    %v802 = vpop.f32.mrf.mxu0
    %v803 = vadd.f32 0.0, %v802
    %804 = vdwg.mxu0
    %v805 = vmul.f32 %v754, %v800
    %v806 = vmul.f32 %v756, %v803
    %v807 = vsel %vm239, %v805, 0.0
    %v808 = vsel %vm239, %v806, 0.0
    %v809 = vadd.f32 %v807, %v808
    %810 = vadd.xlane.f32.xlu0 %v809
    %v811 = vpop.xlane.xlu0 %810
    %v812 = vrot.slane %v811, 4
    %v813 = vadd.f32 %v811, %v812
    %v814 = vrot.slane %v813, 2
    %v815 = vadd.f32 %v813, %v814
    %v816 = vrot.slane %v815, 1
    %v817 = vadd.f32 %v815, %v816
    %s818 = vtos %v817
    %v819 = vmul.f32 %v754, %v777
    %v820 = vmul.f32 %v756, %v780
    %v821 = vstv %s818
    %v822 = vrcp.pop %v821
    %v823 = vmul.f32 %v821, %v822
    %v824 = vsub.f32 1.0, %v823
    %v825 = vmul.f32 %v822, %v824
    %v826 = vadd.f32 %v822, %v825
    %vm827 = vweird.f32 %v821
    %vm828 = vweird.f32 %v822
    %vm829 = vmor %vm827, %vm828
    %v830 = vsel %vm829, %v822, %v826
    %v831 = vand.u32 2147483647, %v821
    %vm832 = vcmp.eq.f32.partialorder %v831, 8.507059e+37
    %v833 = vand.u32 %v821, 2147483648
    %v834 = vor.u32 1.1754944e-38, %v833
    %v835 = vsel %vm832, %v834, %v830
    %v836 = vmul.f32 %v819, %v835
    %v837 = vmul.f32 %v820, %v835
    %v838 = vadd.f32 %v651, %v836
    %v839 = vadd.f32 %v652, %v837
    %v840 = vmul.f32 %v838, 0.5
    %v841 = vmul.f32 %v839, 0.5
    %v842 = vmax.f32 %v840, 0.0
    %v843 = vmax.f32 %v841, 0.0
    %v844 = vld [vmem:[%s12] sm:$0x3f]
    %v845 = vld [vmem:[%s7] sm:$0x3f]
    %v846 = vsel %vm136, %v842, 0.0
    %847 = vadd.xlane.f32.xlu0 %v846
    %v848 = vpop.xlane.xlu0 %847
    %v849 = vsel %vm136, %v843, 0.0
    %850 = vadd.xlane.f32.xlu0 %v849
    %v851 = vpop.xlane.xlu0 %850
    %v852 = vrcp.pop 32.0
    %v853 = vmul.f32 32.0, %v852
    %v854 = vsub.f32 1.0, %v853
    %v855 = vmul.f32 %v852, %v854
    %v856 = vadd.f32 %v852, %v855
    %vm857 = vweird.f32 %v852
    %v858 = vsel %vm857, %v852, %v856
    %v859 = vmul.f32 %v848, %v858
    %v860 = vmul.f32 %v851, %v858
    %v861 = vsub.f32 %v842, %v859
    %v862 = vsub.f32 %v843, %v860
    %v863 = vmul.f32 %v861, %v861
    %v864 = vmul.f32 %v862, %v862
    %v865 = vsel %vm136, %v863, 0.0
    %866 = vadd.xlane.f32.xlu0 %v865
    %v867 = vpop.xlane.xlu0 %866
    %v868 = vsel %vm136, %v864, 0.0
    %869 = vadd.xlane.f32.xlu0 %v868
    %v870 = vpop.xlane.xlu0 %869
    %v871 = vmul.f32 %v867, %v858
    %v872 = vmul.f32 %v870, %v858
    %v873 = vadd.f32 %v871, 1e-05
    %v874 = vadd.f32 %v872, 1e-05
    %v875 = vrsqrt.pop %v873
    %v876 = vmul.f32 %v875, %v873
    %v877 = vmul.f32 %v876, %v875
    %v878 = vmul.f32 0.5, %v877
    %v879 = vsub.f32 1.5, %v878
    %v880 = vmul.f32 %v875, %v879
    %vm881 = vweird.f32 %v873
    %vm882 = vweird.f32 %v875
    %vm883 = vmor %vm881, %vm882
    %v884 = vsel %vm883, %v875, %v880
    %v885 = vrsqrt.pop %v874
    %v886 = vmul.f32 %v885, %v874
    %v887 = vmul.f32 %v886, %v885
    %v888 = vmul.f32 0.5, %v887
    %v889 = vsub.f32 1.5, %v888
    %v890 = vmul.f32 %v885, %v889
    %vm891 = vweird.f32 %v874
    %vm892 = vweird.f32 %v885
    %vm893 = vmor %vm891, %vm892
    %v894 = vsel %vm893, %v885, %v890
    %v895 = vmul.f32 %v861, %v884
    %v896 = vmul.f32 %v862, %v894
    %v897 = vperm.slane %v844, 2
    %v898 = vmul.f32 %v895, %v897
    %v899 = vmul.f32 %v896, %v897
    %v900 = vperm.slane %v844, 3
    %v901 = vadd.f32 %v898, %v900
    %v902 = vadd.f32 %v899, %v900
    %v903 = vld [vmem:[%s6] sm:$0xff]
    %v904 = vld [vmem:[%s6 + $0x8] sm:$0xff]
    %v905 = vld [vmem:[%s6 + $0x10] sm:$0xff]
    %v906 = vld [vmem:[%s6 + $0x18] sm:$0xff]
    %v907 = vperm.slane %v845, 0
    %v909 = vsel %vm136, %v901, 0
    %v912 = vsel %vm136, %v902, 0
    %914 = vmatpush.msra.mxu0 0.0
    %915 = vmatpush.msra.mxu0 0.0
    %916 = vmatpush.msra.mxu0 0.0
    %917 = vmatpush.msra.mxu0 0.0
    %918 = vmatpush.msra.mxu0 0.0
    %919 = vmatpush.msra.mxu0 0.0
    %920 = vmatpush.msra.mxu0 0.0
    %921 = vmatpush.msra.mxu0 0.0
    %922 = vmatpush.msra.mxu0 0.0
    %923 = vmatpush.msra.mxu0 0.0
    %924 = vmatpush.msra.mxu0 0.0
    %925 = vmatpush.msra.mxu0 0.0
    %926 = vmatpush.msra.mxu0 %v906
    %927 = vmatpush.msra.mxu0 %v905
    %928 = vmatpush.msra.mxu0 %v904
    %929 = vmatpush.msra.mxu0 %v903
    %930 = vmatmul.f32.gmra.mxu0 %v909
    %v931 = vpop.f32.mrf.mxu0
    %v932 = vadd.f32 %v907, %v931
    %933 = vmatmul.f32.gmra.mxu0 %v912
    %v934 = vpop.f32.mrf.mxu0
    %v935 = vadd.f32 %v907, %v934
    %936 = vdwg.mxu0
    %s937 = scalar_lea.vmem %s6, 64
    %v938 = vld [vmem:[%s937] sm:$0xff]
    %v939 = vld [vmem:[%s937 + $0x8] sm:$0xff]
    %v940 = vld [vmem:[%s937 + $0x10] sm:$0xff]
    %v941 = vld [vmem:[%s937 + $0x18] sm:$0xff]
    %v942 = vperm.slane %v845, 2
    %943 = vmatpush.msra.mxu0 0.0
    %944 = vmatpush.msra.mxu0 0.0
    %945 = vmatpush.msra.mxu0 0.0
    %946 = vmatpush.msra.mxu0 0.0
    %947 = vmatpush.msra.mxu0 0.0
    %948 = vmatpush.msra.mxu0 0.0
    %949 = vmatpush.msra.mxu0 0.0
    %950 = vmatpush.msra.mxu0 0.0
    %951 = vmatpush.msra.mxu0 0.0
    %952 = vmatpush.msra.mxu0 0.0
    %953 = vmatpush.msra.mxu0 0.0
    %954 = vmatpush.msra.mxu0 0.0
    %955 = vmatpush.msra.mxu0 %v941
    %956 = vmatpush.msra.mxu0 %v940
    %957 = vmatpush.msra.mxu0 %v939
    %958 = vmatpush.msra.mxu0 %v938
    %959 = vmatmul.f32.gmra.mxu0 %v909
    %v960 = vpop.f32.mrf.mxu0
    %v961 = vadd.f32 %v942, %v960
    %962 = vmatmul.f32.gmra.mxu0 %v912
    %v963 = vpop.f32.mrf.mxu0
    %v964 = vadd.f32 %v942, %v963
    %965 = vdwg.mxu0
    %s966 = scalar_lea.vmem %s6, 128
    %v967 = vld [vmem:[%s966] sm:$0xff]
    %v968 = vld [vmem:[%s966 + $0x8] sm:$0xff]
    %v969 = vld [vmem:[%s966 + $0x10] sm:$0xff]
    %v970 = vld [vmem:[%s966 + $0x18] sm:$0xff]
    %v971 = vperm.slane %v845, 4
    %972 = vmatpush.msra.mxu0 0.0
    %973 = vmatpush.msra.mxu0 0.0
    %974 = vmatpush.msra.mxu0 0.0
    %975 = vmatpush.msra.mxu0 0.0
    %976 = vmatpush.msra.mxu0 0.0
    %977 = vmatpush.msra.mxu0 0.0
    %978 = vmatpush.msra.mxu0 0.0
    %979 = vmatpush.msra.mxu0 0.0
    %980 = vmatpush.msra.mxu0 0.0
    %981 = vmatpush.msra.mxu0 0.0
    %982 = vmatpush.msra.mxu0 0.0
    %983 = vmatpush.msra.mxu0 0.0
    %984 = vmatpush.msra.mxu0 %v970
    %985 = vmatpush.msra.mxu0 %v969
    %986 = vmatpush.msra.mxu0 %v968
    %987 = vmatpush.msra.mxu0 %v967
    %988 = vmatmul.f32.gmra.mxu0 %v909
    %v989 = vpop.f32.mrf.mxu0
    %v990 = vadd.f32 %v971, %v989
    %991 = vmatmul.f32.gmra.mxu0 %v912
    %v992 = vpop.f32.mrf.mxu0
    %v993 = vadd.f32 %v971, %v992
    %994 = vdwg.mxu0
    %v996 = vsel %vm184, %v932, 0
    %v999 = vsel %vm184, %v935, 0
    %v1002 = vsel %vm184, %v961, 0
    %v1005 = vsel %vm184, %v964, 0
    %1007 = vmatpush.xpose.msra.mxu0 0.0
    %1008 = vmatpush.xpose.msra.mxu0 0.0
    %1009 = vmatpush.xpose.msra.mxu0 0.0
    %1010 = vmatpush.xpose.msra.mxu0 0.0
    %1011 = vmatpush.xpose.msra.mxu0 0.0
    %1012 = vmatpush.xpose.msra.mxu0 0.0
    %1013 = vmatpush.xpose.msra.mxu0 0.0
    %1014 = vmatpush.xpose.msra.mxu0 0.0
    %1015 = vmatpush.xpose.msra.mxu0 0.0
    %1016 = vmatpush.xpose.msra.mxu0 0.0
    %1017 = vmatpush.xpose.msra.mxu0 0.0
    %1018 = vmatpush.xpose.msra.mxu0 0.0
    %1019 = vmatpush.xpose.msra.mxu0 0.0
    %1020 = vmatpush.xpose.msra.mxu0 0.0
    %1021 = vmatpush.xpose.msra.mxu0 %v1005
    %1022 = vmatpush.xpose.msra.mxu0 %v1002
    %1023 = vmatmul.f32.gmra.mxu0 %v996
    %v1024 = vpop.f32.mrf.mxu0
    %v1025 = vadd.f32 0.0, %v1024
    %1026 = vmatmul.f32.gmra.mxu0 %v999
    %v1027 = vpop.f32.mrf.mxu0
    %v1028 = vadd.f32 0.0, %v1027
    %1029 = vdwg.mxu0
    %v1030 = vmul.f32 %v1025, 0.25
    %v1031 = vmul.f32 %v1028, 0.25
    %v1032 = vsel %vm184, %v1030, -inf
    %1033 = vmax.xlane.f32.xlu0 %v1032
    %v1034 = vpop.xlane.xlu0 %1033
    %v1035 = vsel %vm184, %v1031, -inf
    %1036 = vmax.xlane.f32.xlu0 %v1035
    %v1037 = vpop.xlane.xlu0 %1036
    %v1038 = vsub.f32 %v1030, %v1034
    %v1039 = vsub.f32 %v1031, %v1037
    %v1040 = vmul.f32 %v1038, 1.442695
    %v1041 = vpow.pop %v1040
    %v1042 = vmul.f32 %v1039, 1.442695
    %v1043 = vpow.pop %v1042
    %v1044 = vsel %vm184, %v1041, 0.0
    %1045 = vadd.xlane.f32.xlu0 %v1044
    %v1046 = vpop.xlane.xlu0 %1045
    %v1047 = vsel %vm184, %v1043, 0.0
    %1048 = vadd.xlane.f32.xlu0 %v1047
    %v1049 = vpop.xlane.xlu0 %1048
    %v1050 = vrcp.pop %v1046
    %v1051 = vmul.f32 %v1046, %v1050
    %v1052 = vsub.f32 1.0, %v1051
    %v1053 = vmul.f32 %v1050, %v1052
    %v1054 = vadd.f32 %v1050, %v1053
    %vm1055 = vweird.f32 %v1046
    %vm1056 = vweird.f32 %v1050
    %vm1057 = vmor %vm1055, %vm1056
    %v1058 = vsel %vm1057, %v1050, %v1054
    %v1059 = vand.u32 2147483647, %v1046
    %vm1060 = vcmp.eq.f32.partialorder %v1059, 8.507059e+37
    %v1061 = vand.u32 %v1046, 2147483648
    %v1062 = vor.u32 1.1754944e-38, %v1061
    %v1063 = vsel %vm1060, %v1062, %v1058
    %v1064 = vmul.f32 %v1041, %v1063
    %v1065 = vrcp.pop %v1049
    %v1066 = vmul.f32 %v1049, %v1065
    %v1067 = vsub.f32 1.0, %v1066
    %v1068 = vmul.f32 %v1065, %v1067
    %v1069 = vadd.f32 %v1065, %v1068
    %vm1070 = vweird.f32 %v1049
    %vm1071 = vweird.f32 %v1065
    %vm1072 = vmor %vm1070, %vm1071
    %v1073 = vsel %vm1072, %v1065, %v1069
    %v1074 = vand.u32 2147483647, %v1049
    %vm1075 = vcmp.eq.f32.partialorder %v1074, 8.507059e+37
    %v1076 = vand.u32 %v1049, 2147483648
    %v1077 = vor.u32 1.1754944e-38, %v1076
    %v1078 = vsel %vm1075, %v1077, %v1073
    %v1079 = vmul.f32 %v1043, %v1078
    %v1081 = vsel %vm184, %v1064, 0
    %v1084 = vsel %vm184, %v1079, 0
    %1086 = vmatpush.msra.mxu0 0.0
    %1087 = vmatpush.msra.mxu0 0.0
    %1088 = vmatpush.msra.mxu0 0.0
    %1089 = vmatpush.msra.mxu0 0.0
    %1090 = vmatpush.msra.mxu0 0.0
    %1091 = vmatpush.msra.mxu0 0.0
    %1092 = vmatpush.msra.mxu0 0.0
    %1093 = vmatpush.msra.mxu0 0.0
    %1094 = vmatpush.msra.mxu0 0.0
    %1095 = vmatpush.msra.mxu0 0.0
    %1096 = vmatpush.msra.mxu0 0.0
    %1097 = vmatpush.msra.mxu0 0.0
    %1098 = vmatpush.msra.mxu0 0.0
    %1099 = vmatpush.msra.mxu0 0.0
    %1100 = vmatpush.msra.mxu0 %v993
    %1101 = vmatpush.msra.mxu0 %v990
    %1102 = vmatmul.f32.gmra.mxu0 %v1081
    %v1103 = vpop.f32.mrf.mxu0
    %v1104 = vadd.f32 0.0, %v1103
    %1105 = vmatmul.f32.gmra.mxu0 %v1084
    %v1106 = vpop.f32.mrf.mxu0
    %v1107 = vadd.f32 0.0, %v1106
    %1108 = vdwg.mxu0
    %v1109 = vld [vmem:[%s8] sm:$0xff]
    %v1110 = vld [vmem:[%s8 + $0x8] sm:$0xff]
    %s1111 = scalar_lea.vmem %s6, 32
    %v1112 = vld [vmem:[%s1111] sm:$0xff]
    %v1113 = vld [vmem:[%s1111 + $0x8] sm:$0xff]
    %v1114 = vld [vmem:[%s1111 + $0x10] sm:$0xff]
    %v1115 = vld [vmem:[%s1111 + $0x18] sm:$0xff]
    %v1116 = vperm.slane %v845, 1
    %1117 = vmatpush.msra.mxu0 0.0
    %1118 = vmatpush.msra.mxu0 0.0
    %1119 = vmatpush.msra.mxu0 0.0
    %1120 = vmatpush.msra.mxu0 0.0
    %1121 = vmatpush.msra.mxu0 0.0
    %1122 = vmatpush.msra.mxu0 0.0
    %1123 = vmatpush.msra.mxu0 0.0
    %1124 = vmatpush.msra.mxu0 0.0
    %1125 = vmatpush.msra.mxu0 0.0
    %1126 = vmatpush.msra.mxu0 0.0
    %1127 = vmatpush.msra.mxu0 0.0
    %1128 = vmatpush.msra.mxu0 0.0
    %1129 = vmatpush.msra.mxu0 %v1115
    %1130 = vmatpush.msra.mxu0 %v1114
    %1131 = vmatpush.msra.mxu0 %v1113
    %1132 = vmatpush.msra.mxu0 %v1112
    %1133 = vmatmul.f32.gmra.mxu0 %v909
    %v1134 = vpop.f32.mrf.mxu0
    %v1135 = vadd.f32 %v1116, %v1134
    %1136 = vmatmul.f32.gmra.mxu0 %v912
    %v1137 = vpop.f32.mrf.mxu0
    %v1138 = vadd.f32 %v1116, %v1137
    %1139 = vdwg.mxu0
    %s1140 = scalar_lea.vmem %s6, 96
    %v1141 = vld [vmem:[%s1140] sm:$0xff]
    %v1142 = vld [vmem:[%s1140 + $0x8] sm:$0xff]
    %v1143 = vld [vmem:[%s1140 + $0x10] sm:$0xff]
    %v1144 = vld [vmem:[%s1140 + $0x18] sm:$0xff]
    %v1145 = vperm.slane %v845, 3
    %1146 = vmatpush.msra.mxu0 0.0
    %1147 = vmatpush.msra.mxu0 0.0
    %1148 = vmatpush.msra.mxu0 0.0
    %1149 = vmatpush.msra.mxu0 0.0
    %1150 = vmatpush.msra.mxu0 0.0
    %1151 = vmatpush.msra.mxu0 0.0
    %1152 = vmatpush.msra.mxu0 0.0
    %1153 = vmatpush.msra.mxu0 0.0
    %1154 = vmatpush.msra.mxu0 0.0
    %1155 = vmatpush.msra.mxu0 0.0
    %1156 = vmatpush.msra.mxu0 0.0
    %1157 = vmatpush.msra.mxu0 0.0
    %1158 = vmatpush.msra.mxu0 %v1144
    %1159 = vmatpush.msra.mxu0 %v1143
    %1160 = vmatpush.msra.mxu0 %v1142
    %1161 = vmatpush.msra.mxu0 %v1141
    %1162 = vmatmul.f32.gmra.mxu0 %v909
    %v1163 = vpop.f32.mrf.mxu0
    %v1164 = vadd.f32 %v1145, %v1163
    %1165 = vmatmul.f32.gmra.mxu0 %v912
    %v1166 = vpop.f32.mrf.mxu0
    %v1167 = vadd.f32 %v1145, %v1166
    %1168 = vdwg.mxu0
    %s1169 = scalar_lea.vmem %s6, 160
    %v1170 = vld [vmem:[%s1169] sm:$0xff]
    %v1171 = vld [vmem:[%s1169 + $0x8] sm:$0xff]
    %v1172 = vld [vmem:[%s1169 + $0x10] sm:$0xff]
    %v1173 = vld [vmem:[%s1169 + $0x18] sm:$0xff]
    %v1174 = vperm.slane %v845, 5
    %1175 = vmatpush.msra.mxu0 0.0
    %1176 = vmatpush.msra.mxu0 0.0
    %1177 = vmatpush.msra.mxu0 0.0
    %1178 = vmatpush.msra.mxu0 0.0
    %1179 = vmatpush.msra.mxu0 0.0
    %1180 = vmatpush.msra.mxu0 0.0
    %1181 = vmatpush.msra.mxu0 0.0
    %1182 = vmatpush.msra.mxu0 0.0
    %1183 = vmatpush.msra.mxu0 0.0
    %1184 = vmatpush.msra.mxu0 0.0
    %1185 = vmatpush.msra.mxu0 0.0
    %1186 = vmatpush.msra.mxu0 0.0
    %1187 = vmatpush.msra.mxu0 %v1173
    %1188 = vmatpush.msra.mxu0 %v1172
    %1189 = vmatpush.msra.mxu0 %v1171
    %1190 = vmatpush.msra.mxu0 %v1170
    %1191 = vmatmul.f32.gmra.mxu0 %v909
    %v1192 = vpop.f32.mrf.mxu0
    %v1193 = vadd.f32 %v1174, %v1192
    %1194 = vmatmul.f32.gmra.mxu0 %v912
    %v1195 = vpop.f32.mrf.mxu0
    %v1196 = vadd.f32 %v1174, %v1195
    %1197 = vdwg.mxu0
    %v1199 = vsel %vm184, %v1135, 0
    %v1202 = vsel %vm184, %v1138, 0
    %v1205 = vsel %vm184, %v1164, 0
    %v1208 = vsel %vm184, %v1167, 0
    %1210 = vmatpush.xpose.msra.mxu0 0.0
    %1211 = vmatpush.xpose.msra.mxu0 0.0
    %1212 = vmatpush.xpose.msra.mxu0 0.0
    %1213 = vmatpush.xpose.msra.mxu0 0.0
    %1214 = vmatpush.xpose.msra.mxu0 0.0
    %1215 = vmatpush.xpose.msra.mxu0 0.0
    %1216 = vmatpush.xpose.msra.mxu0 0.0
    %1217 = vmatpush.xpose.msra.mxu0 0.0
    %1218 = vmatpush.xpose.msra.mxu0 0.0
    %1219 = vmatpush.xpose.msra.mxu0 0.0
    %1220 = vmatpush.xpose.msra.mxu0 0.0
    %1221 = vmatpush.xpose.msra.mxu0 0.0
    %1222 = vmatpush.xpose.msra.mxu0 0.0
    %1223 = vmatpush.xpose.msra.mxu0 0.0
    %1224 = vmatpush.xpose.msra.mxu0 %v1208
    %1225 = vmatpush.xpose.msra.mxu0 %v1205
    %1226 = vmatmul.f32.gmra.mxu0 %v1199
    %v1227 = vpop.f32.mrf.mxu0
    %v1228 = vadd.f32 0.0, %v1227
    %1229 = vmatmul.f32.gmra.mxu0 %v1202
    %v1230 = vpop.f32.mrf.mxu0
    %v1231 = vadd.f32 0.0, %v1230
    %1232 = vdwg.mxu0
    %v1233 = vmul.f32 %v1228, 0.25
    %v1234 = vmul.f32 %v1231, 0.25
    %v1235 = vsel %vm184, %v1233, -inf
    %1236 = vmax.xlane.f32.xlu0 %v1235
    %v1237 = vpop.xlane.xlu0 %1236
    %v1238 = vsel %vm184, %v1234, -inf
    %1239 = vmax.xlane.f32.xlu0 %v1238
    %v1240 = vpop.xlane.xlu0 %1239
    %v1241 = vsub.f32 %v1233, %v1237
    %v1242 = vsub.f32 %v1234, %v1240
    %v1243 = vmul.f32 %v1241, 1.442695
    %v1244 = vpow.pop %v1243
    %v1245 = vmul.f32 %v1242, 1.442695
    %v1246 = vpow.pop %v1245
    %v1247 = vsel %vm184, %v1244, 0.0
    %1248 = vadd.xlane.f32.xlu0 %v1247
    %v1249 = vpop.xlane.xlu0 %1248
    %v1250 = vsel %vm184, %v1246, 0.0
    %1251 = vadd.xlane.f32.xlu0 %v1250
    %v1252 = vpop.xlane.xlu0 %1251
    %v1253 = vrcp.pop %v1249
    %v1254 = vmul.f32 %v1249, %v1253
    %v1255 = vsub.f32 1.0, %v1254
    %v1256 = vmul.f32 %v1253, %v1255
    %v1257 = vadd.f32 %v1253, %v1256
    %vm1258 = vweird.f32 %v1249
    %vm1259 = vweird.f32 %v1253
    %vm1260 = vmor %vm1258, %vm1259
    %v1261 = vsel %vm1260, %v1253, %v1257
    %v1262 = vand.u32 2147483647, %v1249
    %vm1263 = vcmp.eq.f32.partialorder %v1262, 8.507059e+37
    %v1264 = vand.u32 %v1249, 2147483648
    %v1265 = vor.u32 1.1754944e-38, %v1264
    %v1266 = vsel %vm1263, %v1265, %v1261
    %v1267 = vmul.f32 %v1244, %v1266
    %v1268 = vrcp.pop %v1252
    %v1269 = vmul.f32 %v1252, %v1268
    %v1270 = vsub.f32 1.0, %v1269
    %v1271 = vmul.f32 %v1268, %v1270
    %v1272 = vadd.f32 %v1268, %v1271
    %vm1273 = vweird.f32 %v1252
    %vm1274 = vweird.f32 %v1268
    %vm1275 = vmor %vm1273, %vm1274
    %v1276 = vsel %vm1275, %v1268, %v1272
    %v1277 = vand.u32 2147483647, %v1252
    %vm1278 = vcmp.eq.f32.partialorder %v1277, 8.507059e+37
    %v1279 = vand.u32 %v1252, 2147483648
    %v1280 = vor.u32 1.1754944e-38, %v1279
    %v1281 = vsel %vm1278, %v1280, %v1276
    %v1282 = vmul.f32 %v1246, %v1281
    %v1284 = vsel %vm184, %v1267, 0
    %v1287 = vsel %vm184, %v1282, 0
    %1289 = vmatpush.msra.mxu0 0.0
    %1290 = vmatpush.msra.mxu0 0.0
    %1291 = vmatpush.msra.mxu0 0.0
    %1292 = vmatpush.msra.mxu0 0.0
    %1293 = vmatpush.msra.mxu0 0.0
    %1294 = vmatpush.msra.mxu0 0.0
    %1295 = vmatpush.msra.mxu0 0.0
    %1296 = vmatpush.msra.mxu0 0.0
    %1297 = vmatpush.msra.mxu0 0.0
    %1298 = vmatpush.msra.mxu0 0.0
    %1299 = vmatpush.msra.mxu0 0.0
    %1300 = vmatpush.msra.mxu0 0.0
    %1301 = vmatpush.msra.mxu0 0.0
    %1302 = vmatpush.msra.mxu0 0.0
    %1303 = vmatpush.msra.mxu0 %v1196
    %1304 = vmatpush.msra.mxu0 %v1193
    %1305 = vmatmul.f32.gmra.mxu0 %v1284
    %v1306 = vpop.f32.mrf.mxu0
    %v1307 = vadd.f32 0.0, %v1306
    %1308 = vmatmul.f32.gmra.mxu0 %v1287
    %v1309 = vpop.f32.mrf.mxu0
    %v1310 = vadd.f32 0.0, %v1309
    %1311 = vdwg.mxu0
    %s1312 = scalar_lea.vmem %s8, 16
    %v1313 = vld [vmem:[%s1312] sm:$0xff]
    %v1314 = vld [vmem:[%s1312 + $0x8] sm:$0xff]
    %v1316 = vsel %vm184, %v1307, 0
    %v1319 = vsel %vm184, %v1310, 0
    %1321 = vmatpush.msra.mxu0 0.0
    %1322 = vmatpush.msra.mxu0 0.0
    %1323 = vmatpush.msra.mxu0 0.0
    %1324 = vmatpush.msra.mxu0 0.0
    %1325 = vmatpush.msra.mxu0 0.0
    %1326 = vmatpush.msra.mxu0 0.0
    %1327 = vmatpush.msra.mxu0 0.0
    %1328 = vmatpush.msra.mxu0 0.0
    %1329 = vmatpush.msra.mxu0 0.0
    %1330 = vmatpush.msra.mxu0 0.0
    %1331 = vmatpush.msra.mxu0 0.0
    %1332 = vmatpush.msra.mxu0 0.0
    %1333 = vmatpush.msra.mxu0 0.0
    %1334 = vmatpush.msra.mxu0 0.0
    %1335 = vmatpush.msra.mxu0 %v1314
    %1336 = vmatpush.msra.mxu0 %v1313
    %1337 = vmatmul.f32.gmra.mxu0 %v1316
    %v1338 = vpop.f32.mrf.mxu0
    %v1339 = vadd.f32 0.0, %v1338
    %1340 = vmatmul.f32.gmra.mxu0 %v1319
    %v1341 = vpop.f32.mrf.mxu0
    %v1342 = vadd.f32 0.0, %v1341
    %1343 = vdwg.mxu0
    %v1345 = vsel %vm184, %v1104, 0
    %v1348 = vsel %vm184, %v1107, 0
    %1350 = vmatpush.msra.mxu0 0.0
    %1351 = vmatpush.msra.mxu0 0.0
    %1352 = vmatpush.msra.mxu0 0.0
    %1353 = vmatpush.msra.mxu0 0.0
    %1354 = vmatpush.msra.mxu0 0.0
    %1355 = vmatpush.msra.mxu0 0.0
    %1356 = vmatpush.msra.mxu0 0.0
    %1357 = vmatpush.msra.mxu0 0.0
    %1358 = vmatpush.msra.mxu0 0.0
    %1359 = vmatpush.msra.mxu0 0.0
    %1360 = vmatpush.msra.mxu0 0.0
    %1361 = vmatpush.msra.mxu0 0.0
    %1362 = vmatpush.msra.mxu0 0.0
    %1363 = vmatpush.msra.mxu0 0.0
    %1364 = vmatpush.msra.mxu0 %v1110
    %1365 = vmatpush.msra.mxu0 %v1109
    %1366 = vmatmul.f32.gmra.mxu0 %v1345
    %v1367 = vpop.f32.mrf.mxu0
    %v1368 = vadd.f32 %v1339, %v1367
    %1369 = vmatmul.f32.gmra.mxu0 %v1348
    %v1370 = vpop.f32.mrf.mxu0
    %v1371 = vadd.f32 %v1342, %v1370
    %1372 = vdwg.mxu0
    %v1373 = vadd.f32 %v842, %v1368
    %v1374 = vadd.f32 %v843, %v1371
    %v1375 = vperm.slane %v844, 0
    %v1376 = vadd.f32 %v1373, %v1375
    %v1377 = vadd.f32 %v1374, %v1375
    %v1378 = vsel %vm136, %v1376, 0.0
    %1379 = vadd.xlane.f32.xlu0 %v1378
    %v1380 = vpop.xlane.xlu0 %1379
    %v1381 = vsel %vm136, %v1377, 0.0
    %1382 = vadd.xlane.f32.xlu0 %v1381
    %v1383 = vpop.xlane.xlu0 %1382
    %v1384 = vmul.f32 %v1380, %v858
    %v1385 = vmul.f32 %v1383, %v858
    %v1386 = vsub.f32 %v1376, %v1384
    %v1387 = vsub.f32 %v1377, %v1385
    %v1388 = vmul.f32 %v1386, %v1386
    %v1389 = vmul.f32 %v1387, %v1387
    %v1390 = vsel %vm136, %v1388, 0.0
    %1391 = vadd.xlane.f32.xlu0 %v1390
    %v1392 = vpop.xlane.xlu0 %1391
    %v1393 = vsel %vm136, %v1389, 0.0
    %1394 = vadd.xlane.f32.xlu0 %v1393
    %v1395 = vpop.xlane.xlu0 %1394
    %v1396 = vmul.f32 %v1392, %v858
    %v1397 = vmul.f32 %v1395, %v858
    %v1398 = vadd.f32 %v1396, 1e-05
    %v1399 = vadd.f32 %v1397, 1e-05
    %v1400 = vrsqrt.pop %v1398
    %v1401 = vmul.f32 %v1400, %v1398
    %v1402 = vmul.f32 %v1401, %v1400
    %v1403 = vmul.f32 0.5, %v1402
    %v1404 = vsub.f32 1.5, %v1403
    %v1405 = vmul.f32 %v1400, %v1404
    %vm1406 = vweird.f32 %v1398
    %vm1407 = vweird.f32 %v1400
    %vm1408 = vmor %vm1406, %vm1407
    %v1409 = vsel %vm1408, %v1400, %v1405
    %v1410 = vrsqrt.pop %v1399
    %v1411 = vmul.f32 %v1410, %v1399
    %v1412 = vmul.f32 %v1411, %v1410
    %v1413 = vmul.f32 0.5, %v1412
    %v1414 = vsub.f32 1.5, %v1413
    %v1415 = vmul.f32 %v1410, %v1414
    %vm1416 = vweird.f32 %v1399
    %vm1417 = vweird.f32 %v1410
    %vm1418 = vmor %vm1416, %vm1417
    %v1419 = vsel %vm1418, %v1410, %v1415
    %v1420 = vmul.f32 %v1386, %v1409
    %v1421 = vmul.f32 %v1387, %v1419
    %v1422 = vperm.slane %v844, 4
    %v1423 = vmul.f32 %v1420, %v1422
    %v1424 = vmul.f32 %v1421, %v1422
    %v1425 = vperm.slane %v844, 5
    %v1426 = vadd.f32 %v1423, %v1425
    %v1427 = vadd.f32 %v1424, %v1425
    %v1428 = vld [vmem:[%s9] sm:$0xff]
    %v1429 = vld [vmem:[%s9 + $0x8] sm:$0xff]
    %v1430 = vld [vmem:[%s9 + $0x10] sm:$0xff]
    %v1431 = vld [vmem:[%s9 + $0x18] sm:$0xff]
    %v1432 = vld [vmem:[%s10] sm:$0x1]
    %v1434 = vperm.slane %v1432, 0
    %v1437 = vsel %vm136, %v1426, 0
    %v1440 = vsel %vm136, %v1427, 0
    %1442 = vmatpush.msra.mxu0 0.0
    %1443 = vmatpush.msra.mxu0 0.0
    %1444 = vmatpush.msra.mxu0 0.0
    %1445 = vmatpush.msra.mxu0 0.0
    %1446 = vmatpush.msra.mxu0 0.0
    %1447 = vmatpush.msra.mxu0 0.0
    %1448 = vmatpush.msra.mxu0 0.0
    %1449 = vmatpush.msra.mxu0 0.0
    %1450 = vmatpush.msra.mxu0 0.0
    %1451 = vmatpush.msra.mxu0 0.0
    %1452 = vmatpush.msra.mxu0 0.0
    %1453 = vmatpush.msra.mxu0 0.0
    %1454 = vmatpush.msra.mxu0 %v1431
    %1455 = vmatpush.msra.mxu0 %v1430
    %1456 = vmatpush.msra.mxu0 %v1429
    %1457 = vmatpush.msra.mxu0 %v1428
    %1458 = vmatmul.f32.gmra.mxu0 %v1437
    %v1459 = vpop.f32.mrf.mxu0
    %v1460 = vadd.f32 %v1434, %v1459
    %1461 = vmatmul.f32.gmra.mxu0 %v1440
    %v1462 = vpop.f32.mrf.mxu0
    %v1463 = vadd.f32 %v1434, %v1462
    %1464 = vdwg.mxu0
    %v1465 = vmul.f32 %v1460, 0.5
    %v1466 = vmul.f32 %v1463, 0.5
    %v1467 = vmul.f32 %v1460, 0.70710677
    %v1468 = vmul.f32 %v1463, 0.70710677
    %v1469 = vand.u32 2147483647, %v1467
    %v1470 = vand.u32 2147483647, %v1468
    %v1471 = vmul.f32 %v1469, 0.3275911
    %v1472 = vmul.f32 %v1470, 0.3275911
    %v1473 = vadd.f32 %v1471, 1.0
    %v1474 = vadd.f32 %v1472, 1.0
    %v1475 = vrcp.pop %v1473
    %v1476 = vmul.f32 %v1473, %v1475
    %v1477 = vsub.f32 1.0, %v1476
    %v1478 = vmul.f32 %v1475, %v1477
    %v1479 = vadd.f32 %v1475, %v1478
    %vm1480 = vweird.f32 %v1473
    %vm1481 = vweird.f32 %v1475
    %vm1482 = vmor %vm1480, %vm1481
    %v1483 = vsel %vm1482, %v1475, %v1479
    %v1484 = vand.u32 2147483647, %v1473
    %vm1485 = vcmp.eq.f32.partialorder %v1484, 8.507059e+37
    %v1486 = vand.u32 %v1473, 2147483648
    %v1487 = vor.u32 1.1754944e-38, %v1486
    %v1488 = vsel %vm1485, %v1487, %v1483
    %v1489 = vmul.f32 1.0, %v1488
    %v1490 = vrcp.pop %v1474
    %v1491 = vmul.f32 %v1474, %v1490
    %v1492 = vsub.f32 1.0, %v1491
    %v1493 = vmul.f32 %v1490, %v1492
    %v1494 = vadd.f32 %v1490, %v1493
    %vm1495 = vweird.f32 %v1474
    %vm1496 = vweird.f32 %v1490
    %vm1497 = vmor %vm1495, %vm1496
    %v1498 = vsel %vm1497, %v1490, %v1494
    %v1499 = vand.u32 2147483647, %v1474
    %vm1500 = vcmp.eq.f32.partialorder %v1499, 8.507059e+37
    %v1501 = vand.u32 %v1474, 2147483648
    %v1502 = vor.u32 1.1754944e-38, %v1501
    %v1503 = vsel %vm1500, %v1502, %v1498
    %v1504 = vmul.f32 1.0, %v1503
    %v1505 = vmul.f32 %v1489, 1.0614054
    %v1506 = vmul.f32 %v1504, 1.0614054
    %v1507 = vadd.f32 %v1505, -1.4531521
    %v1508 = vadd.f32 %v1506, -1.4531521
    %v1509 = vmul.f32 %v1507, %v1489
    %v1510 = vmul.f32 %v1508, %v1504
    %v1511 = vadd.f32 %v1509, 1.4214138
    %v1512 = vadd.f32 %v1510, 1.4214138
    %v1513 = vmul.f32 %v1511, %v1489
    %v1514 = vmul.f32 %v1512, %v1504
    %v1515 = vadd.f32 %v1513, -0.28449672
    %v1516 = vadd.f32 %v1514, -0.28449672
    %v1517 = vmul.f32 %v1515, %v1489
    %v1518 = vmul.f32 %v1516, %v1504
    %v1519 = vadd.f32 %v1517, 0.2548296
    %v1520 = vadd.f32 %v1518, 0.2548296
    %v1521 = vmul.f32 %v1519, %v1489
    %v1522 = vmul.f32 %v1520, %v1504
    %v1523 = vsub.f32 0.0, %v1469
    %v1524 = vsub.f32 0.0, %v1470
    %v1525 = vmul.f32 %v1523, %v1469
    %v1526 = vmul.f32 %v1524, %v1470
    %v1527 = vmul.f32 %v1525, 1.442695
    %v1528 = vpow.pop %v1527
    %v1529 = vmul.f32 %v1526, 1.442695
    %v1530 = vpow.pop %v1529
    %v1531 = vmul.f32 %v1521, %v1528
    %v1532 = vmul.f32 %v1522, %v1530
    %v1533 = vsub.f32 1.0, %v1531
    %v1534 = vsub.f32 1.0, %v1532
    %vm1535 = vcmp.ge.f32.partialorder %v1467, 0.0
    %vm1536 = vcmp.ge.f32.partialorder %v1468, 0.0
    %v1537 = vsub.f32 0.0, %v1533
    %v1538 = vsub.f32 0.0, %v1534
    %v1539 = vsel %vm1535, %v1533, %v1537
    %v1540 = vsel %vm1536, %v1534, %v1538
    %v1541 = vadd.f32 %v1539, 1.0
    %v1542 = vadd.f32 %v1540, 1.0
    %v1543 = vmul.f32 %v1465, %v1541
    %v1544 = vmul.f32 %v1466, %v1542
    %v1545 = vld [vmem:[%s11] sm:$0xff]
    %v1546 = vld [vmem:[%s11 + $0x8] sm:$0xff]
    %v1547 = vld [vmem:[%s11 + $0x10] sm:$0xff]
    %v1548 = vld [vmem:[%s11 + $0x18] sm:$0xff]
    %v1549 = vld [vmem:[%s11 + $0x20] sm:$0xff]
    %v1550 = vld [vmem:[%s11 + $0x28] sm:$0xff]
    %v1551 = vld [vmem:[%s11 + $0x30] sm:$0xff]
    %v1552 = vld [vmem:[%s11 + $0x38] sm:$0xff]
    %v1553 = vperm.slane %v844, 1
    %vm1554 = vcmask 523264
    %v1556 = vsel %vm1554, %v1543, 0
    %v1559 = vsel %vm1554, %v1544, 0
    %1561 = vmatpush.msra.mxu0 0.0
    %1562 = vmatpush.msra.mxu0 0.0
    %1563 = vmatpush.msra.mxu0 0.0
    %1564 = vmatpush.msra.mxu0 0.0
    %1565 = vmatpush.msra.mxu0 0.0
    %1566 = vmatpush.msra.mxu0 0.0
    %1567 = vmatpush.msra.mxu0 0.0
    %1568 = vmatpush.msra.mxu0 0.0
    %1569 = vmatpush.msra.mxu0 %v1552
    %1570 = vmatpush.msra.mxu0 %v1551
    %1571 = vmatpush.msra.mxu0 %v1550
    %1572 = vmatpush.msra.mxu0 %v1549
    %1573 = vmatpush.msra.mxu0 %v1548
    %1574 = vmatpush.msra.mxu0 %v1547
    %1575 = vmatpush.msra.mxu0 %v1546
    %1576 = vmatpush.msra.mxu0 %v1545
    %1577 = vmatmul.f32.gmra.mxu0 %v1556
    %v1578 = vpop.f32.mrf.mxu0
    %v1579 = vadd.f32 %v1553, %v1578
    %1580 = vmatmul.f32.gmra.mxu0 %v1559
    %v1581 = vpop.f32.mrf.mxu0
    %v1582 = vadd.f32 %v1553, %v1581
    %1583 = vdwg.mxu0
    %v1584 = vadd.f32 %v1376, %v1579
    %v1585 = vadd.f32 %v1377, %v1582
    %v1586 = vsel %vm136, %v1584, 0.0
    %v1587 = vsel %vm136, %v1585, 0.0
    %v1588 = vadd.f32 %v1586, %v1587
    %v1589 = vrot.slane %v1588, 4
    %v1590 = vadd.f32 %v1588, %v1589
    %v1591 = vrot.slane %v1590, 2
    %v1592 = vadd.f32 %v1590, %v1591
    %v1593 = vrot.slane %v1592, 1
    %v1594 = vadd.f32 %v1592, %v1593
    %v1595 = vrcp.pop 16.0
    %v1596 = vmul.f32 16.0, %v1595
    %v1597 = vsub.f32 1.0, %v1596
    %v1598 = vmul.f32 %v1595, %v1597
    %v1599 = vadd.f32 %v1595, %v1598
    %vm1600 = vweird.f32 %v1595
    %v1601 = vsel %vm1600, %v1595, %v1599
    %v1602 = vmul.f32 %v1594, %v1601
    %v1603 = vld [vmem:[%s13] sm:$0xff]
    %v1604 = vld [vmem:[%s13 + $0x8] sm:$0xff]
    %v1605 = vld [vmem:[%s13 + $0x10] sm:$0xff]
    %v1606 = vld [vmem:[%s13 + $0x18] sm:$0xff]
    %v1607 = vld [vmem:[%s14] sm:$0x1]
    %v1609 = vsel %vm136, %v1602, 0
    %1611 = vmatpush.msra.mxu0 0.0
    %1612 = vmatpush.msra.mxu0 0.0
    %1613 = vmatpush.msra.mxu0 0.0
    %1614 = vmatpush.msra.mxu0 0.0
    %1615 = vmatpush.msra.mxu0 0.0
    %1616 = vmatpush.msra.mxu0 0.0
    %1617 = vmatpush.msra.mxu0 0.0
    %1618 = vmatpush.msra.mxu0 0.0
    %1619 = vmatpush.msra.mxu0 0.0
    %1620 = vmatpush.msra.mxu0 0.0
    %1621 = vmatpush.msra.mxu0 0.0
    %1622 = vmatpush.msra.mxu0 0.0
    %1623 = vmatpush.msra.mxu0 %v1606
    %1624 = vmatpush.msra.mxu0 %v1605
    %1625 = vmatpush.msra.mxu0 %v1604
    %1626 = vmatpush.msra.mxu0 %v1603
    %1627 = vmatmul.f32.gmra.mxu0 %v1609
    %v1628 = vpop.f32.mrf.mxu0
    %v1629 = vadd.f32 %v1607, %v1628
    %1630 = vdwg.mxu0
    %vm1631 = vcmask 8192
    %1632 = vst.msk [vmem:[#allocation2] sm:$0x1] %vm1631, %v1629
    %v1633 = vld [vmem:[%s16] sm:$0xf]
    %v1634 = vld [vmem:[%s15] sm:$0xff]
    %v1635 = vld [vmem:[%s15 + $0x8] sm:$0xff]
    %v1636 = vld [vmem:[%s15 + $0x10] sm:$0xff]
    %v1637 = vld [vmem:[%s15 + $0x18] sm:$0xff]
    %v1639 = vsel %vm136, %v1584, 0
    %v1642 = vsel %vm136, %v1585, 0
    %1644 = vmatpush.msra.mxu0 0.0
    %1645 = vmatpush.msra.mxu0 0.0
    %1646 = vmatpush.msra.mxu0 0.0
    %1647 = vmatpush.msra.mxu0 0.0
    %1648 = vmatpush.msra.mxu0 0.0
    %1649 = vmatpush.msra.mxu0 0.0
    %1650 = vmatpush.msra.mxu0 0.0
    %1651 = vmatpush.msra.mxu0 0.0
    %1652 = vmatpush.msra.mxu0 0.0
    %1653 = vmatpush.msra.mxu0 0.0
    %1654 = vmatpush.msra.mxu0 0.0
    %1655 = vmatpush.msra.mxu0 0.0
    %1656 = vmatpush.msra.mxu0 %v1637
    %1657 = vmatpush.msra.mxu0 %v1636
    %1658 = vmatpush.msra.mxu0 %v1635
    %1659 = vmatpush.msra.mxu0 %v1634
    %1660 = vmatmul.f32.gmra.mxu0 %v1639
    %v1661 = vpop.f32.mrf.mxu0
    %v1662 = vadd.f32 0.0, %v1661
    %1663 = vmatmul.f32.gmra.mxu0 %v1642
    %v1664 = vpop.f32.mrf.mxu0
    %v1665 = vadd.f32 0.0, %v1664
    %1666 = vdwg.mxu0
    %s1667 = scalar_lea.vmem %s15, 64
    %v1668 = vld [vmem:[%s1667] sm:$0xff]
    %v1669 = vld [vmem:[%s1667 + $0x8] sm:$0xff]
    %v1670 = vld [vmem:[%s1667 + $0x10] sm:$0xff]
    %v1671 = vld [vmem:[%s1667 + $0x18] sm:$0xff]
    %1672 = vmatpush.msra.mxu0 0.0
    %1673 = vmatpush.msra.mxu0 0.0
    %1674 = vmatpush.msra.mxu0 0.0
    %1675 = vmatpush.msra.mxu0 0.0
    %1676 = vmatpush.msra.mxu0 0.0
    %1677 = vmatpush.msra.mxu0 0.0
    %1678 = vmatpush.msra.mxu0 0.0
    %1679 = vmatpush.msra.mxu0 0.0
    %1680 = vmatpush.msra.mxu0 0.0
    %1681 = vmatpush.msra.mxu0 0.0
    %1682 = vmatpush.msra.mxu0 0.0
    %1683 = vmatpush.msra.mxu0 0.0
    %1684 = vmatpush.msra.mxu0 %v1671
    %1685 = vmatpush.msra.mxu0 %v1670
    %1686 = vmatpush.msra.mxu0 %v1669
    %1687 = vmatpush.msra.mxu0 %v1668
    %1688 = vmatmul.f32.gmra.mxu0 %v1639
    %v1689 = vpop.f32.mrf.mxu0
    %v1690 = vadd.f32 0.0, %v1689
    %1691 = vmatmul.f32.gmra.mxu0 %v1642
    %v1692 = vpop.f32.mrf.mxu0
    %v1693 = vadd.f32 0.0, %v1692
    %1694 = vdwg.mxu0
    %v1695 = vperm.slane %v1633, 0
    %v1696 = vmul.f32 %v1662, %v1695
    %v1697 = vmul.f32 %v1665, %v1695
    %v1698 = vsel %vm136, %v1696, 0.0
    %1699 = vadd.xlane.f32.xlu0 %v1698
    %v1700 = vpop.xlane.xlu0 %1699
    %v1701 = vsel %vm136, %v1697, 0.0
    %1702 = vadd.xlane.f32.xlu0 %v1701
    %v1703 = vpop.xlane.xlu0 %1702
    %v1704 = vperm.slane %v1633, 2
    %v1705 = vmul.f32 %v1690, %v1704
    %v1706 = vmul.f32 %v1693, %v1704
    %v1707 = vsel %vm136, %v1705, 0.0
    %1708 = vadd.xlane.f32.xlu0 %v1707
    %v1709 = vpop.xlane.xlu0 %1708
    %v1710 = vsel %vm136, %v1706, 0.0
    %1711 = vadd.xlane.f32.xlu0 %v1710
    %v1712 = vpop.xlane.xlu0 %1711
    %v1713 = vmax.f32 %v1700, %v1703
    %v1714 = vrot.slane %v1713, 4
    %v1715 = vmax.f32 %v1713, %v1714
    %v1716 = vrot.slane %v1715, 2
    %v1717 = vmax.f32 %v1715, %v1716
    %v1718 = vrot.slane %v1717, 1
    %v1719 = vmax.f32 %v1717, %v1718
    %s1720 = vtos %v1719
    %v1721 = vstv %s1720
    %v1722 = vsub.f32 %v1700, %v1721
    %v1723 = vsub.f32 %v1703, %v1721
    %v1724 = vmul.f32 %v1722, 1.442695
    %v1725 = vpow.pop %v1724
    %v1726 = vmul.f32 %v1723, 1.442695
    %v1727 = vpow.pop %v1726
    %v1728 = vmax.f32 %v1709, %v1712
    %v1729 = vrot.slane %v1728, 4
    %v1730 = vmax.f32 %v1728, %v1729
    %v1731 = vrot.slane %v1730, 2
    %v1732 = vmax.f32 %v1730, %v1731
    %v1733 = vrot.slane %v1732, 1
    %v1734 = vmax.f32 %v1732, %v1733
    %s1735 = vtos %v1734
    %v1736 = vstv %s1735
    %v1737 = vsub.f32 %v1709, %v1736
    %v1738 = vsub.f32 %v1712, %v1736
    %v1739 = vmul.f32 %v1737, 1.442695
    %v1740 = vpow.pop %v1739
    %v1741 = vmul.f32 %v1738, 1.442695
    %v1742 = vpow.pop %v1741
    %v1743 = vmul.f32 %v1725, %v1662
    %v1744 = vmul.f32 %v1727, %v1665
    %1745 = vmatpush.msra.mxu0 0.0
    %1746 = vmatpush.msra.mxu0 0.0
    %1747 = vmatpush.msra.mxu0 0.0
    %1748 = vmatpush.msra.mxu0 0.0
    %1749 = vmatpush.msra.mxu0 0.0
    %1750 = vmatpush.msra.mxu0 0.0
    %1751 = vmatpush.msra.mxu0 0.0
    %1752 = vmatpush.msra.mxu0 0.0
    %1753 = vmatpush.msra.mxu0 0.0
    %1754 = vmatpush.msra.mxu0 0.0
    %1755 = vmatpush.msra.mxu0 0.0
    %1756 = vmatpush.msra.mxu0 0.0
    %1757 = vmatpush.msra.mxu0 0.0
    %1758 = vmatpush.msra.mxu0 0.0
    %1759 = vmatpush.msra.mxu0 %v1744
    %1760 = vmatpush.msra.mxu0 %v1743
    %1761 = vmatmul.f32.gmra.mxu0 %v186
    %v1762 = vpop.f32.mrf.mxu0
    %v1763 = vadd.f32 0.0, %v1762
    %1764 = vmatmul.f32.gmra.mxu0 %v189
    %v1765 = vpop.f32.mrf.mxu0
    %v1766 = vadd.f32 0.0, %v1765
    %1767 = vdwg.mxu0
    %1768 = vmatpush.msra.mxu0 0.0
    %1769 = vmatpush.msra.mxu0 0.0
    %1770 = vmatpush.msra.mxu0 0.0
    %1771 = vmatpush.msra.mxu0 0.0
    %1772 = vmatpush.msra.mxu0 0.0
    %1773 = vmatpush.msra.mxu0 0.0
    %1774 = vmatpush.msra.mxu0 0.0
    %1775 = vmatpush.msra.mxu0 0.0
    %1776 = vmatpush.msra.mxu0 0.0
    %1777 = vmatpush.msra.mxu0 0.0
    %1778 = vmatpush.msra.mxu0 0.0
    %1779 = vmatpush.msra.mxu0 0.0
    %1780 = vmatpush.msra.mxu0 0.0
    %1781 = vmatpush.msra.mxu0 0.0
    %1782 = vmatpush.msra.mxu0 %v1727
    %1783 = vmatpush.msra.mxu0 %v1725
    %1784 = vmatmul.f32.gmra.mxu0 %v186
    %v1785 = vpop.f32.mrf.mxu0
    %v1786 = vadd.f32 0.0, %v1785
    %1787 = vmatmul.f32.gmra.mxu0 %v189
    %v1788 = vpop.f32.mrf.mxu0
    %v1789 = vadd.f32 0.0, %v1788
    %1790 = vdwg.mxu0
    %v1791 = vmul.f32 %v1740, %v1786
    %v1792 = vmul.f32 %v1742, %v1789
    %v1793 = vsel %vm239, %v1791, 0.0
    %v1794 = vsel %vm239, %v1792, 0.0
    %v1795 = vadd.f32 %v1793, %v1794
    %1796 = vadd.xlane.f32.xlu0 %v1795
    %v1797 = vpop.xlane.xlu0 %1796
    %v1798 = vrot.slane %v1797, 4
    %v1799 = vadd.f32 %v1797, %v1798
    %v1800 = vrot.slane %v1799, 2
    %v1801 = vadd.f32 %v1799, %v1800
    %v1802 = vrot.slane %v1801, 1
    %v1803 = vadd.f32 %v1801, %v1802
    %s1804 = vtos %v1803
    %v1805 = vmul.f32 %v1740, %v1763
    %v1806 = vmul.f32 %v1742, %v1766
    %v1807 = vstv %s1804
    %v1808 = vrcp.pop %v1807
    %v1809 = vmul.f32 %v1807, %v1808
    %v1810 = vsub.f32 1.0, %v1809
    %v1811 = vmul.f32 %v1808, %v1810
    %v1812 = vadd.f32 %v1808, %v1811
    %vm1813 = vweird.f32 %v1807
    %vm1814 = vweird.f32 %v1808
    %vm1815 = vmor %vm1813, %vm1814
    %v1816 = vsel %vm1815, %v1808, %v1812
    %v1817 = vand.u32 2147483647, %v1807
    %vm1818 = vcmp.eq.f32.partialorder %v1817, 8.507059e+37
    %v1819 = vand.u32 %v1807, 2147483648
    %v1820 = vor.u32 1.1754944e-38, %v1819
    %v1821 = vsel %vm1818, %v1820, %v1816
    %v1822 = vmul.f32 %v1805, %v1821
    %v1823 = vmul.f32 %v1806, %v1821
    %s1824 = scalar_lea.vmem %s15, 32
    %v1825 = vld [vmem:[%s1824] sm:$0xff]
    %v1826 = vld [vmem:[%s1824 + $0x8] sm:$0xff]
    %v1827 = vld [vmem:[%s1824 + $0x10] sm:$0xff]
    %v1828 = vld [vmem:[%s1824 + $0x18] sm:$0xff]
    %1829 = vmatpush.msra.mxu0 0.0
    %1830 = vmatpush.msra.mxu0 0.0
    %1831 = vmatpush.msra.mxu0 0.0
    %1832 = vmatpush.msra.mxu0 0.0
    %1833 = vmatpush.msra.mxu0 0.0
    %1834 = vmatpush.msra.mxu0 0.0
    %1835 = vmatpush.msra.mxu0 0.0
    %1836 = vmatpush.msra.mxu0 0.0
    %1837 = vmatpush.msra.mxu0 0.0
    %1838 = vmatpush.msra.mxu0 0.0
    %1839 = vmatpush.msra.mxu0 0.0
    %1840 = vmatpush.msra.mxu0 0.0
    %1841 = vmatpush.msra.mxu0 %v1828
    %1842 = vmatpush.msra.mxu0 %v1827
    %1843 = vmatpush.msra.mxu0 %v1826
    %1844 = vmatpush.msra.mxu0 %v1825
    %1845 = vmatmul.f32.gmra.mxu0 %v1639
    %v1846 = vpop.f32.mrf.mxu0
    %v1847 = vadd.f32 0.0, %v1846
    %1848 = vmatmul.f32.gmra.mxu0 %v1642
    %v1849 = vpop.f32.mrf.mxu0
    %v1850 = vadd.f32 0.0, %v1849
    %1851 = vdwg.mxu0
    %s1852 = scalar_lea.vmem %s15, 96
    %v1853 = vld [vmem:[%s1852] sm:$0xff]
    %v1854 = vld [vmem:[%s1852 + $0x8] sm:$0xff]
    %v1855 = vld [vmem:[%s1852 + $0x10] sm:$0xff]
    %v1856 = vld [vmem:[%s1852 + $0x18] sm:$0xff]
    %1857 = vmatpush.msra.mxu0 0.0
    %1858 = vmatpush.msra.mxu0 0.0
    %1859 = vmatpush.msra.mxu0 0.0
    %1860 = vmatpush.msra.mxu0 0.0
    %1861 = vmatpush.msra.mxu0 0.0
    %1862 = vmatpush.msra.mxu0 0.0
    %1863 = vmatpush.msra.mxu0 0.0
    %1864 = vmatpush.msra.mxu0 0.0
    %1865 = vmatpush.msra.mxu0 0.0
    %1866 = vmatpush.msra.mxu0 0.0
    %1867 = vmatpush.msra.mxu0 0.0
    %1868 = vmatpush.msra.mxu0 0.0
    %1869 = vmatpush.msra.mxu0 %v1856
    %1870 = vmatpush.msra.mxu0 %v1855
    %1871 = vmatpush.msra.mxu0 %v1854
    %1872 = vmatpush.msra.mxu0 %v1853
    %1873 = vmatmul.f32.gmra.mxu0 %v1639
    %v1874 = vpop.f32.mrf.mxu0
    %v1875 = vadd.f32 0.0, %v1874
    %1876 = vmatmul.f32.gmra.mxu0 %v1642
    %v1877 = vpop.f32.mrf.mxu0
    %v1878 = vadd.f32 0.0, %v1877
    %1879 = vdwg.mxu0
    %v1880 = vperm.slane %v1633, 1
    %v1881 = vmul.f32 %v1847, %v1880
    %v1882 = vmul.f32 %v1850, %v1880
    %v1883 = vsel %vm136, %v1881, 0.0
    %1884 = vadd.xlane.f32.xlu0 %v1883
    %v1885 = vpop.xlane.xlu0 %1884
    %v1886 = vsel %vm136, %v1882, 0.0
    %1887 = vadd.xlane.f32.xlu0 %v1886
    %v1888 = vpop.xlane.xlu0 %1887
    %v1889 = vperm.slane %v1633, 3
    %v1890 = vmul.f32 %v1875, %v1889
    %v1891 = vmul.f32 %v1878, %v1889
    %v1892 = vsel %vm136, %v1890, 0.0
    %1893 = vadd.xlane.f32.xlu0 %v1892
    %v1894 = vpop.xlane.xlu0 %1893
    %v1895 = vsel %vm136, %v1891, 0.0
    %1896 = vadd.xlane.f32.xlu0 %v1895
    %v1897 = vpop.xlane.xlu0 %1896
    %v1898 = vmax.f32 %v1885, %v1888
    %v1899 = vrot.slane %v1898, 4
    %v1900 = vmax.f32 %v1898, %v1899
    %v1901 = vrot.slane %v1900, 2
    %v1902 = vmax.f32 %v1900, %v1901
    %v1903 = vrot.slane %v1902, 1
    %v1904 = vmax.f32 %v1902, %v1903
    %s1905 = vtos %v1904
    %v1906 = vstv %s1905
    %v1907 = vsub.f32 %v1885, %v1906
    %v1908 = vsub.f32 %v1888, %v1906
    %v1909 = vmul.f32 %v1907, 1.442695
    %v1910 = vpow.pop %v1909
    %v1911 = vmul.f32 %v1908, 1.442695
    %v1912 = vpow.pop %v1911
    %v1913 = vmax.f32 %v1894, %v1897
    %v1914 = vrot.slane %v1913, 4
    %v1915 = vmax.f32 %v1913, %v1914
    %v1916 = vrot.slane %v1915, 2
    %v1917 = vmax.f32 %v1915, %v1916
    %v1918 = vrot.slane %v1917, 1
    %v1919 = vmax.f32 %v1917, %v1918
    %s1920 = vtos %v1919
    %v1921 = vstv %s1920
    %v1922 = vsub.f32 %v1894, %v1921
    %v1923 = vsub.f32 %v1897, %v1921
    %v1924 = vmul.f32 %v1922, 1.442695
    %v1925 = vpow.pop %v1924
    %v1926 = vmul.f32 %v1923, 1.442695
    %v1927 = vpow.pop %v1926
    %v1928 = vmul.f32 %v1910, %v1847
    %v1929 = vmul.f32 %v1912, %v1850
    %1930 = vmatpush.msra.mxu0 0.0
    %1931 = vmatpush.msra.mxu0 0.0
    %1932 = vmatpush.msra.mxu0 0.0
    %1933 = vmatpush.msra.mxu0 0.0
    %1934 = vmatpush.msra.mxu0 0.0
    %1935 = vmatpush.msra.mxu0 0.0
    %1936 = vmatpush.msra.mxu0 0.0
    %1937 = vmatpush.msra.mxu0 0.0
    %1938 = vmatpush.msra.mxu0 0.0
    %1939 = vmatpush.msra.mxu0 0.0
    %1940 = vmatpush.msra.mxu0 0.0
    %1941 = vmatpush.msra.mxu0 0.0
    %1942 = vmatpush.msra.mxu0 0.0
    %1943 = vmatpush.msra.mxu0 0.0
    %1944 = vmatpush.msra.mxu0 %v1929
    %1945 = vmatpush.msra.mxu0 %v1928
    %1946 = vmatmul.f32.gmra.mxu0 %v186
    %v1947 = vpop.f32.mrf.mxu0
    %v1948 = vadd.f32 0.0, %v1947
    %1949 = vmatmul.f32.gmra.mxu0 %v189
    %v1950 = vpop.f32.mrf.mxu0
    %v1951 = vadd.f32 0.0, %v1950
    %1952 = vdwg.mxu0
    %1953 = vmatpush.msra.mxu0 0.0
    %1954 = vmatpush.msra.mxu0 0.0
    %1955 = vmatpush.msra.mxu0 0.0
    %1956 = vmatpush.msra.mxu0 0.0
    %1957 = vmatpush.msra.mxu0 0.0
    %1958 = vmatpush.msra.mxu0 0.0
    %1959 = vmatpush.msra.mxu0 0.0
    %1960 = vmatpush.msra.mxu0 0.0
    %1961 = vmatpush.msra.mxu0 0.0
    %1962 = vmatpush.msra.mxu0 0.0
    %1963 = vmatpush.msra.mxu0 0.0
    %1964 = vmatpush.msra.mxu0 0.0
    %1965 = vmatpush.msra.mxu0 0.0
    %1966 = vmatpush.msra.mxu0 0.0
    %1967 = vmatpush.msra.mxu0 %v1912
    %1968 = vmatpush.msra.mxu0 %v1910
    %1969 = vmatmul.f32.gmra.mxu0 %v186
    %v1970 = vpop.f32.mrf.mxu0
    %v1971 = vadd.f32 0.0, %v1970
    %1972 = vmatmul.f32.gmra.mxu0 %v189
    %v1973 = vpop.f32.mrf.mxu0
    %v1974 = vadd.f32 0.0, %v1973
    %1975 = vdwg.mxu0
    %v1976 = vmul.f32 %v1925, %v1971
    %v1977 = vmul.f32 %v1927, %v1974
    %v1978 = vsel %vm239, %v1976, 0.0
    %v1979 = vsel %vm239, %v1977, 0.0
    %v1980 = vadd.f32 %v1978, %v1979
    %1981 = vadd.xlane.f32.xlu0 %v1980
    %v1982 = vpop.xlane.xlu0 %1981
    %v1983 = vrot.slane %v1982, 4
    %v1984 = vadd.f32 %v1982, %v1983
    %v1985 = vrot.slane %v1984, 2
    %v1986 = vadd.f32 %v1984, %v1985
    %v1987 = vrot.slane %v1986, 1
    %v1988 = vadd.f32 %v1986, %v1987
    %s1989 = vtos %v1988
    %v1990 = vmul.f32 %v1925, %v1948
    %v1991 = vmul.f32 %v1927, %v1951
    %v1992 = vstv %s1989
    %v1993 = vrcp.pop %v1992
    %v1994 = vmul.f32 %v1992, %v1993
    %v1995 = vsub.f32 1.0, %v1994
    %v1996 = vmul.f32 %v1993, %v1995
    %v1997 = vadd.f32 %v1993, %v1996
    %vm1998 = vweird.f32 %v1992
    %vm1999 = vweird.f32 %v1993
    %vm2000 = vmor %vm1998, %vm1999
    %v2001 = vsel %vm2000, %v1993, %v1997
    %v2002 = vand.u32 2147483647, %v1992
    %vm2003 = vcmp.eq.f32.partialorder %v2002, 8.507059e+37
    %v2004 = vand.u32 %v1992, 2147483648
    %v2005 = vor.u32 1.1754944e-38, %v2004
    %v2006 = vsel %vm2003, %v2005, %v2001
    %v2007 = vmul.f32 %v1990, %v2006
    %v2008 = vmul.f32 %v1991, %v2006
    %v2009 = vadd.f32 %v1822, %v2007
    %v2010 = vadd.f32 %v1823, %v2008
    %v2011 = vmul.f32 %v2009, 0.5
    %v2012 = vmul.f32 %v2010, 0.5
    %v2013 = vmax.f32 %v2011, 0.0
    %v2014 = vmax.f32 %v2012, 0.0
    %v2015 = vld [vmem:[%s18] sm:$0x3]
    %v2016 = vld [vmem:[%s17] sm:$0xff]
    %v2017 = vld [vmem:[%s17 + $0x8] sm:$0xff]
    %v2018 = vld [vmem:[%s17 + $0x10] sm:$0xff]
    %v2019 = vld [vmem:[%s17 + $0x18] sm:$0xff]
    %v2021 = vsel %vm136, %v2013, 0
    %v2024 = vsel %vm136, %v2014, 0
    %2026 = vmatpush.msra.mxu0 0.0
    %2027 = vmatpush.msra.mxu0 0.0
    %2028 = vmatpush.msra.mxu0 0.0
    %2029 = vmatpush.msra.mxu0 0.0
    %2030 = vmatpush.msra.mxu0 0.0
    %2031 = vmatpush.msra.mxu0 0.0
    %2032 = vmatpush.msra.mxu0 0.0
    %2033 = vmatpush.msra.mxu0 0.0
    %2034 = vmatpush.msra.mxu0 0.0
    %2035 = vmatpush.msra.mxu0 0.0
    %2036 = vmatpush.msra.mxu0 0.0
    %2037 = vmatpush.msra.mxu0 0.0
    %2038 = vmatpush.msra.mxu0 %v2019
    %2039 = vmatpush.msra.mxu0 %v2018
    %2040 = vmatpush.msra.mxu0 %v2017
    %2041 = vmatpush.msra.mxu0 %v2016
    %2042 = vmatmul.f32.gmra.mxu0 %v2021
    %v2043 = vpop.f32.mrf.mxu0
    %v2044 = vadd.f32 0.0, %v2043
    %2045 = vmatmul.f32.gmra.mxu0 %v2024
    %v2046 = vpop.f32.mrf.mxu0
    %v2047 = vadd.f32 0.0, %v2046
    %2048 = vdwg.mxu0
    %s2049 = scalar_lea.vmem %s17, 32
    %v2050 = vld [vmem:[%s2049] sm:$0xff]
    %v2051 = vld [vmem:[%s2049 + $0x8] sm:$0xff]
    %v2052 = vld [vmem:[%s2049 + $0x10] sm:$0xff]
    %v2053 = vld [vmem:[%s2049 + $0x18] sm:$0xff]
    %2054 = vmatpush.msra.mxu0 0.0
    %2055 = vmatpush.msra.mxu0 0.0
    %2056 = vmatpush.msra.mxu0 0.0
    %2057 = vmatpush.msra.mxu0 0.0
    %2058 = vmatpush.msra.mxu0 0.0
    %2059 = vmatpush.msra.mxu0 0.0
    %2060 = vmatpush.msra.mxu0 0.0
    %2061 = vmatpush.msra.mxu0 0.0
    %2062 = vmatpush.msra.mxu0 0.0
    %2063 = vmatpush.msra.mxu0 0.0
    %2064 = vmatpush.msra.mxu0 0.0
    %2065 = vmatpush.msra.mxu0 0.0
    %2066 = vmatpush.msra.mxu0 %v2053
    %2067 = vmatpush.msra.mxu0 %v2052
    %2068 = vmatpush.msra.mxu0 %v2051
    %2069 = vmatpush.msra.mxu0 %v2050
    %2070 = vmatmul.f32.gmra.mxu0 %v2021
    %v2071 = vpop.f32.mrf.mxu0
    %v2072 = vadd.f32 0.0, %v2071
    %2073 = vmatmul.f32.gmra.mxu0 %v2024
    %v2074 = vpop.f32.mrf.mxu0
    %v2075 = vadd.f32 0.0, %v2074
    %2076 = vdwg.mxu0
    %v2077 = vperm.slane %v2015, 0
    %v2078 = vmul.f32 %v2044, %v2077
    %v2079 = vmul.f32 %v2047, %v2077
    %vm2080 = vcmask 64512
    %v2081 = vsel %vm2080, %v2078, 0.0
    %2082 = vadd.xlane.f32.xlu0 %v2081
    %v2083 = vpop.xlane.xlu0 %2082
    %v2084 = vsel %vm2080, %v2079, 0.0
    %2085 = vadd.xlane.f32.xlu0 %v2084
    %v2086 = vpop.xlane.xlu0 %2085
    %v2087 = vperm.slane %v2015, 1
    %v2088 = vmul.f32 %v2072, %v2087
    %v2089 = vmul.f32 %v2075, %v2087
    %v2090 = vsel %vm2080, %v2088, 0.0
    %2091 = vadd.xlane.f32.xlu0 %v2090
    %v2092 = vpop.xlane.xlu0 %2091
    %v2093 = vsel %vm2080, %v2089, 0.0
    %2094 = vadd.xlane.f32.xlu0 %v2093
    %v2095 = vpop.xlane.xlu0 %2094
    %v2096 = vmax.f32 %v2083, %v2086
    %v2097 = vrot.slane %v2096, 4
    %v2098 = vmax.f32 %v2096, %v2097
    %v2099 = vrot.slane %v2098, 2
    %v2100 = vmax.f32 %v2098, %v2099
    %v2101 = vrot.slane %v2100, 1
    %v2102 = vmax.f32 %v2100, %v2101
    %s2103 = vtos %v2102
    %v2104 = vstv %s2103
    %v2105 = vsub.f32 %v2083, %v2104
    %v2106 = vsub.f32 %v2086, %v2104
    %v2107 = vmul.f32 %v2105, 1.442695
    %v2108 = vpow.pop %v2107
    %v2109 = vmul.f32 %v2106, 1.442695
    %v2110 = vpow.pop %v2109
    %v2111 = vmax.f32 %v2092, %v2095
    %v2112 = vrot.slane %v2111, 4
    %v2113 = vmax.f32 %v2111, %v2112
    %v2114 = vrot.slane %v2113, 2
    %v2115 = vmax.f32 %v2113, %v2114
    %v2116 = vrot.slane %v2115, 1
    %v2117 = vmax.f32 %v2115, %v2116
    %s2118 = vtos %v2117
    %v2119 = vstv %s2118
    %v2120 = vsub.f32 %v2092, %v2119
    %v2121 = vsub.f32 %v2095, %v2119
    %v2122 = vmul.f32 %v2120, 1.442695
    %v2123 = vpow.pop %v2122
    %v2124 = vmul.f32 %v2121, 1.442695
    %v2125 = vpow.pop %v2124
    %v2126 = vmul.f32 %v2108, %v2044
    %v2127 = vmul.f32 %v2110, %v2047
    %2128 = vmatpush.msra.mxu0 0.0
    %2129 = vmatpush.msra.mxu0 0.0
    %2130 = vmatpush.msra.mxu0 0.0
    %2131 = vmatpush.msra.mxu0 0.0
    %2132 = vmatpush.msra.mxu0 0.0
    %2133 = vmatpush.msra.mxu0 0.0
    %2134 = vmatpush.msra.mxu0 0.0
    %2135 = vmatpush.msra.mxu0 0.0
    %2136 = vmatpush.msra.mxu0 0.0
    %2137 = vmatpush.msra.mxu0 0.0
    %2138 = vmatpush.msra.mxu0 0.0
    %2139 = vmatpush.msra.mxu0 0.0
    %2140 = vmatpush.msra.mxu0 0.0
    %2141 = vmatpush.msra.mxu0 0.0
    %2142 = vmatpush.msra.mxu0 %v2127
    %2143 = vmatpush.msra.mxu0 %v2126
    %2144 = vmatmul.f32.gmra.mxu0 %v186
    %v2145 = vpop.f32.mrf.mxu0
    %v2146 = vadd.f32 0.0, %v2145
    %2147 = vmatmul.f32.gmra.mxu0 %v189
    %v2148 = vpop.f32.mrf.mxu0
    %v2149 = vadd.f32 0.0, %v2148
    %2150 = vdwg.mxu0
    %2151 = vmatpush.msra.mxu0 0.0
    %2152 = vmatpush.msra.mxu0 0.0
    %2153 = vmatpush.msra.mxu0 0.0
    %2154 = vmatpush.msra.mxu0 0.0
    %2155 = vmatpush.msra.mxu0 0.0
    %2156 = vmatpush.msra.mxu0 0.0
    %2157 = vmatpush.msra.mxu0 0.0
    %2158 = vmatpush.msra.mxu0 0.0
    %2159 = vmatpush.msra.mxu0 0.0
    %2160 = vmatpush.msra.mxu0 0.0
    %2161 = vmatpush.msra.mxu0 0.0
    %2162 = vmatpush.msra.mxu0 0.0
    %2163 = vmatpush.msra.mxu0 0.0
    %2164 = vmatpush.msra.mxu0 0.0
    %2165 = vmatpush.msra.mxu0 %v2110
    %2166 = vmatpush.msra.mxu0 %v2108
    %2167 = vmatmul.f32.gmra.mxu0 %v186
    %v2168 = vpop.f32.mrf.mxu0
    %v2169 = vadd.f32 0.0, %v2168
    %2170 = vmatmul.f32.gmra.mxu0 %v189
    %v2171 = vpop.f32.mrf.mxu0
    %v2172 = vadd.f32 0.0, %v2171
    %2173 = vdwg.mxu0
    %v2174 = vmul.f32 %v2123, %v2169
    %v2175 = vmul.f32 %v2125, %v2172
    %v2176 = vsel %vm239, %v2174, 0.0
    %v2177 = vsel %vm239, %v2175, 0.0
    %v2178 = vadd.f32 %v2176, %v2177
    %2179 = vadd.xlane.f32.xlu0 %v2178
    %v2180 = vpop.xlane.xlu0 %2179
    %v2181 = vrot.slane %v2180, 4
    %v2182 = vadd.f32 %v2180, %v2181
    %v2183 = vrot.slane %v2182, 2
    %v2184 = vadd.f32 %v2182, %v2183
    %v2185 = vrot.slane %v2184, 1
    %v2186 = vadd.f32 %v2184, %v2185
    %s2187 = vtos %v2186
    %v2188 = vmul.f32 %v2123, %v2146
    %v2189 = vmul.f32 %v2125, %v2149
    %v2190 = vstv %s2187
    %v2191 = vrcp.pop %v2190
    %v2192 = vmul.f32 %v2190, %v2191
    %v2193 = vsub.f32 1.0, %v2192
    %v2194 = vmul.f32 %v2191, %v2193
    %v2195 = vadd.f32 %v2191, %v2194
    %vm2196 = vweird.f32 %v2190
    %vm2197 = vweird.f32 %v2191
    %vm2198 = vmor %vm2196, %vm2197
    %v2199 = vsel %vm2198, %v2191, %v2195
    %v2200 = vand.u32 2147483647, %v2190
    %vm2201 = vcmp.eq.f32.partialorder %v2200, 8.507059e+37
    %v2202 = vand.u32 %v2190, 2147483648
    %v2203 = vor.u32 1.1754944e-38, %v2202
    %v2204 = vsel %vm2201, %v2203, %v2199
    %v2205 = vmul.f32 %v2188, %v2204
    %v2206 = vmul.f32 %v2189, %v2204
    %2207 = vst.msk [vmem:[%s19] sm:$0xff] %vm2080, %v2205
    %2208 = vst.msk [vmem:[%s19 + $0x8] sm:$0xff] %vm2080, %v2206
    // Predicated region
    $region78: #{tgat_unet_forward.1} parent=1 // pred_check
      _
    $region79: #{tgat_unet_forward.1} parent=1 // pred_check_branch
      %2210 = sbr.rel (0) target = $region81
    $region80: #{tgat_unet_forward.1} parent=1 // pred_region
      _
    $region81: #{tgat_unet_forward.1} parent=1 // pred_fallthru
      _
    // Predicated region
    $region82: #{tgat_unet_forward.1} parent=1 // pred_check
      _
    $region83: #{tgat_unet_forward.1} parent=1 // pred_check_branch
      %2212 = sbr.rel (0) target = $region85
    $region84: #{tgat_unet_forward.1} parent=1 // pred_region
      %2214 = vsyncadd [#allocation3], 0
      %s2216 = sshll.u32 [#allocation2], 4
      %s2217 = int_to_ptr.vmem [resolvable:$true] %s2216
      %s2218 = sshll.u32 %s20, 4
      %s2219 = int_to_ptr.hbm [resolvable:$true] %s2218
      %2221 = dma.vmem_to_hbm [thread:$0]  %s2217, 16, %s2219, [#allocation3]
    $region85: #{tgat_unet_forward.1} parent=1 // pred_fallthru
      _
    // Predicated region
    $region86: #{tgat_unet_forward.1} parent=1 // pred_check
      _
    $region87: #{tgat_unet_forward.1} parent=1 // pred_check_branch
      %2223 = sbr.rel (0) target = $region89
    $region88: #{tgat_unet_forward.1} parent=1 // pred_region
      _
    $region89: #{tgat_unet_forward.1} parent=1 // pred_fallthru
      _
    // Predicated region
    $region90: #{tgat_unet_forward.1} parent=1 // pred_check
      _
    $region91: #{tgat_unet_forward.1} parent=1 // pred_check_branch
      %2225 = sbr.rel (0) target = $region93
    $region92: #{tgat_unet_forward.1} parent=1 // pred_region
      %2227 = dma.done [#allocation3], 16
    $region93: #{tgat_unet_forward.1} parent=1 // pred_fallthru
      _
    %2228 = vsyncpa [#allocation3], 1

</llo_original>
